<compile_context>
chip_gen: v7x
topology: tpu7x:2x2x1
jax: 0.10.0
libtpu: 0.0.40
codegen_flags: <defaults>
</compile_context>

<pallas_src>
import functools

import numpy as np
import jax
import jax.numpy as jnp
from jax.experimental import pallas as pl
from jax.experimental.pallas import tpu as pltpu


# ----------------------------------------------------------------------------
# Single fused kernel: conv1 (pre-im2col'd) + conv2/conv3 (gather + deep-K
# matmul, all 4 branches block-diagonal) + 4-layer action MLP.
# ----------------------------------------------------------------------------
def _fused_model_kernel(a1_ref, relpos_ref,
                        w1_ref, b1_ref,
                        s2_ref, w2_ref, b2_ref,
                        s3_ref, w3_ref, b3_ref,
                        wm1c_ref, wm1p_ref, bm1_ref,
                        wm2_ref, bm2_ref,
                        wm3_ref, bm3_ref,
                        wm4_ref, bm4_ref,
                        out_ref, *, batch):
    f32 = jnp.float32
    bf16 = jnp.bfloat16

    # ---- conv layer 1: host-side im2col -> single deep-K matmul -----------
    # a1: (h1*w1*B, 9*4*seq), rows=(spatial,batch), lanes=(tap,branch,seq)
    a = jnp.dot(a1_ref[...], w1_ref[...], preferred_element_type=f32)
    a = jnp.maximum(a + b1_ref[...], 0.0).astype(bf16)       # (h1*w1*B, 4*c1)

    # ---- conv layers 2 & 3: batch-free 0/1 gather + single deep-K matmul --
    def conv_layer(a, s_ref, w_ref, b_ref):
        rows, cin4 = a.shape
        spat_in = s_ref.shape[2]
        spat_out = s_ref.shape[1]
        nb = rows // spat_in                                  # = batch
        # View with batch on the lane axis so the tap selection is batch-free.
        a_l = a.reshape(spat_in, nb * cin4)                   # lanes=(b,br,ch)
        taps = []
        for t in range(9):                                    # exact 0/1 gather
            g = jnp.dot(s_ref[t], a_l, preferred_element_type=f32)
            taps.append(g.astype(bf16).reshape(spat_out * nb, cin4))
        gcat = jnp.concatenate(taps, axis=1)                  # (so*B, 9*4*cin)
        acc = jnp.dot(gcat, w_ref[...], preferred_element_type=f32)
        return jnp.maximum(acc + b_ref[...], 0.0).astype(bf16)

    a = conv_layer(a, s2_ref, w2_ref, b2_ref)                 # (h2*w2*B, 4*c2)
    a = conv_layer(a, s3_ref, w3_ref, b3_ref)                 # (h3*w3*B, 4*c3)

    # ---- per-branch NCHW flatten + concat(rel_pos), folded into wm1 -------
    o_last = a.shape[0] // batch
    x = jnp.concatenate(
        [a[o * batch:(o + 1) * batch, :] for o in range(o_last)],
        axis=1)                                               # (B, o_last*4*c3)

    h = (jnp.dot(x, wm1c_ref[...], preferred_element_type=f32)
         + jnp.dot(relpos_ref[...], wm1p_ref[...], preferred_element_type=f32)
         + bm1_ref[...])
    h = jnp.maximum(h, 0.0).astype(bf16)
    h = jnp.maximum(jnp.dot(h, wm2_ref[...], preferred_element_type=f32)
                    + bm2_ref[...], 0.0).astype(bf16)
    h = jnp.maximum(jnp.dot(h, wm3_ref[...], preferred_element_type=f32)
                    + bm3_ref[...], 0.0)                      # keep f32
    out = jnp.dot(h, wm4_ref[...], preferred_element_type=f32) + bm4_ref[...]
    out_ref[...] = out.astype(out_ref.dtype)


# ----------------------------------------------------------------------------
# One-time (offline) parameter preparation
# ----------------------------------------------------------------------------
def _conv_out(n, k=3, s=2, p=1):
    return (n + 2 * p - k) // s + 1


def _tap_selection(hin, win, hout, wout):
    """Batch-free 0/1 matrices S[t] s.t. S[t] @ A gathers tap-t input rows.

    Rows/cols are spatial only; all-zero rows encode the zero padding of a
    3x3 / stride-2 / pad-1 convolution.
    """
    S = np.zeros((9, hout * wout, hin * win), np.float32)
    for kh in range(3):
        for kw in range(3):
            t = kh * 3 + kw
            for oh in range(hout):
                ih = 2 * oh + kh - 1
                if not 0 <= ih < hin:
                    continue
                for ow in range(wout):
                    iw = 2 * ow + kw - 1
                    if not 0 <= iw < win:
                        continue
                    S[t, oh * wout + ow, ih * win + iw] = 1.0
    return S


def _deepk_blockdiag(branch_weights):
    """Stack per-branch HWIO conv weights into one (9*4*cin, 4*cout) matrix.

    Row (K) order is (tap, branch, cin); block-diagonal over the branch axis.
    """
    n_br = len(branch_weights)
    cin, cout = branch_weights[0].shape[2], branch_weights[0].shape[3]
    W = np.zeros((9, n_br, cin, n_br, cout), np.float32)
    for r, w in enumerate(branch_weights):
        W[:, r, :, r, :] = np.asarray(w).reshape(9, cin, cout)
    return W.reshape(9 * n_br * cin, n_br * cout)


def prepare(params, *, batch, image_h, image_w):
    """Transform PyTorch-layout params into the fused kernel's operands."""
    bf16, f32 = jnp.bfloat16, jnp.float32
    n_br = len(params["cnn"])                       # 4 camera branches
    seq = params["cnn"][0][0][0].shape[2]           # image_seq_len
    cnn_dims = [w.shape[-1] for (w, _) in params["cnn"][0]]

    hs, ws = [image_h], [image_w]
    for _ in cnn_dims:
        hs.append(_conv_out(hs[-1]))
        ws.append(_conv_out(ws[-1]))

    consts = []
    flops = 0

    def stack_bias(l):
        return np.concatenate([np.asarray(params["cnn"][r][l][1])
                               for r in range(n_br)]).reshape(1, -1)

    # Conv layer 1 (im2col done in the wrapper): one (9*4*seq, 4*c1) matrix.
    w1 = _deepk_blockdiag([params["cnn"][r][0][0] for r in range(n_br)])
    consts += [jnp.asarray(w1, bf16), jnp.asarray(stack_bias(0), f32)]
    flops += 2 * hs[1] * ws[1] * batch * w1.shape[0] * w1.shape[1]

    # Conv layers 2..: batch-free tap-selection + deep-K block-diag weights.
    for l in range(1, len(cnn_dims)):
        sel = _tap_selection(hs[l], ws[l], hs[l + 1], ws[l + 1])
        wl = _deepk_blockdiag([params["cnn"][r][l][0] for r in range(n_br)])
        consts += [jnp.asarray(sel, bf16), jnp.asarray(wl, bf16),
                   jnp.asarray(stack_bias(l), f32)]
        so, si = hs[l + 1] * ws[l + 1], hs[l] * ws[l]
        cin4 = n_br * cnn_dims[l - 1]
        flops += 9 * 2 * so * si * batch * cin4              # 0/1 gathers
        flops += 2 * so * batch * wl.shape[0] * wl.shape[1]  # deep-K matmul

    # MLP layer 1: fold NCHW flatten + branch concat + rel-pos concat into a
    # row-permuted split of wm1 (done once, offline).
    o_last = hs[-1] * ws[-1]
    c_last = cnn_dims[-1]
    d_conv = n_br * c_last * o_last
    wm1, bm1 = params["mlp"][0]
    wm1 = np.asarray(wm1)
    n1 = wm1.shape[1]
    # PyTorch row order (branch, chan, spatial) -> kernel order (spatial, branch, chan)
    wm1_conv = (wm1[:d_conv].reshape(n_br, c_last, o_last, n1)
                .transpose(2, 0, 1, 3).reshape(o_last * n_br * c_last, n1))
    wm1_pos = wm1[d_conv:]
    consts += [jnp.asarray(wm1_conv, bf16), jnp.asarray(wm1_pos, f32),
               jnp.asarray(np.asarray(bm1).reshape(1, -1), f32)]

    n_mlp = len(params["mlp"])
    for i, (w, b) in enumerate(params["mlp"][1:]):
        dt = f32 if i == n_mlp - 2 else bf16                  # last layer f32
        consts += [jnp.asarray(w, dt),
                   jnp.asarray(np.asarray(b).reshape(1, -1), f32)]

    for (w, _) in params["mlp"]:
        flops += 2 * batch * int(w.shape[0]) * int(w.shape[1])

    bytes_accessed = int(sum(int(c.size) * c.dtype.itemsize for c in consts))
    bytes_accessed += 2 * (hs[1] * ws[1] * batch) * (9 * n_br * seq)   # a1
    bytes_accessed += 4 * batch * (int(wm1_pos.shape[0])
                                   + int(params["mlp"][-1][0].shape[1]))

    meta = dict(batch=batch, image_h=image_h, image_w=image_w, seq=seq,
                h1=hs[1], w1=ws[1],
                out_dim=int(params["mlp"][-1][0].shape[1]),
                relpos_dim=int(wm1_pos.shape[0]),
                flops=int(flops), bytes_accessed=int(bytes_accessed))
    return tuple(consts), meta


# ----------------------------------------------------------------------------
# Forward wrapper: layer-1 im2col (plain XLA) + a single pallas_call
# ----------------------------------------------------------------------------
def make_forward(consts, meta):
    batch = meta["batch"]
    kern = functools.partial(_fused_model_kernel, batch=batch)
    n_in = 2 + len(consts)

    call = pl.pallas_call(
        kern,
        out_shape=jax.ShapeDtypeStruct((batch, meta["out_dim"]), jnp.float32),
        in_specs=[pl.BlockSpec(memory_space=pltpu.MemorySpace.VMEM)] * n_in,
        out_specs=pl.BlockSpec(memory_space=pltpu.MemorySpace.VMEM),
        compiler_params=pltpu.CompilerParams(
            vmem_limit_bytes=8 * 1024 * 1024),
        cost_estimate=pl.CostEstimate(flops=meta["flops"], transcendentals=0,
                                      bytes_accessed=meta["bytes_accessed"]),
    )

    H, W, seq = meta["image_h"], meta["image_w"], meta["seq"]
    h1, w1 = meta["h1"], meta["w1"]

    @jax.jit
    def forward(depth_image, relative_position):
        B, C, Hi, Wi = depth_image.shape
        # Shapes are baked into the prepared constants — guard them.
        assert (B, C, Hi, Wi) == (batch, 4 * seq, H, W), (B, C, Hi, Wi)
        assert relative_position.shape == (batch, meta["relpos_dim"])

        x = depth_image.reshape(B, seq, 4, Hi, Wi)
        # 3x3 / stride-2 / pad-1 im2col for conv layer 1 (plain XLA ops):
        # rows ordered (spatial, batch), lanes ordered (tap, branch, seq).
        xp = jnp.pad(x, ((0, 0), (0, 0), (0, 0), (1, 1), (1, 1)))
        taps = [xp[:, :, :, kh:kh + 2 * h1 - 1:2, kw:kw + 2 * w1 - 1:2]
                for kh in range(3) for kw in range(3)]
        p = jnp.stack(taps, axis=0)                 # (9, B, seq, 4, h1, w1)
        a1 = (jnp.transpose(p, (4, 5, 1, 0, 3, 2))  # (h1, w1, B, 9, 4, seq)
              .reshape(h1 * w1 * B, 9 * 4 * seq).astype(jnp.bfloat16))
        rp = relative_position.astype(jnp.float32)
        return call(a1, rp, *consts)

    return forward


# ----------------------------------------------------------------------------
# Plain-JAX reference (PyTorch semantics, high precision)
# ----------------------------------------------------------------------------
def reference_forward(depth_image, relative_position, params, image_seq_len):
    hp = jax.lax.Precision.HIGHEST
    B = depth_image.shape[0]
    H, W = depth_image.shape[-2], depth_image.shape[-1]
    di = depth_image.reshape(B, image_seq_len, 4, H, W)
    outs = []
    for branch in range(4):
        x = jnp.transpose(di[:, :, branch, :, :], (0, 2, 3, 1))     # NHWC
        for (w, b) in params["cnn"][branch]:
            x = jax.lax.conv_general_dilated(
                x, w, window_strides=(2, 2), padding=[(1, 1), (1, 1)],
                dimension_numbers=("NHWC", "HWIO", "NHWC"), precision=hp)
            x = jnp.maximum(x + b, 0.0)
        x = jnp.transpose(x, (0, 3, 1, 2)).reshape(B, -1)   # NCHW flatten
        outs.append(x)
    out = jnp.concatenate(outs + [relative_position], axis=1)
    n = len(params["mlp"])
    for i, (w, b) in enumerate(params["mlp"]):
        out = jnp.dot(out, w, precision=hp) + b
        if i < n - 1:
            out = jnp.maximum(out, 0.0)
    return out


# ----------------------------------------------------------------------------
# Deterministic parameter construction (PyTorch layout)
# ----------------------------------------------------------------------------
def init_params(key, image_seq_len, pose_seq_len, h_out, w_out, n_actions):
    cnn_dims = [32, 64, 32]
    dim_cnn_out_flatten = h_out * w_out * cnn_dims[-1]
    mlp_dims = ([dim_cnn_out_flatten * 4 + 3 * pose_seq_len]
                + [512, 128, 64] + [n_actions * 2])

    params = {"cnn": [], "mlp": []}
    for _branch in range(4):
        layers = []
        cin = image_seq_len
        for cout in cnn_dims:
            key, kw_, kb_ = jax.random.split(key, 3)
            scale = 1.0 / jnp.sqrt(jnp.float32(cin * 9))
            w = jax.random.normal(kw_, (3, 3, cin, cout), jnp.float32) * scale
            b = jax.random.normal(kb_, (cout,), jnp.float32) * 0.01
            layers.append((w, b))
            cin = cout
        params["cnn"].append(layers)

    for din, dout in zip(mlp_dims[:-1], mlp_dims[1:]):
        key, kw_, kb_ = jax.random.split(key, 3)
        scale = 1.0 / jnp.sqrt(jnp.float32(din))
        w = jax.random.normal(kw_, (din, dout), jnp.float32) * scale
        b = jax.random.normal(kb_, (dout,), jnp.float32) * 0.01
        params["mlp"].append((w, b))
    return params


# ----------------------------------------------------------------------------
# Main
# ----------------------------------------------------------------------------
if __name__ == "__main__":
    # Config consistent with the module: image_seq_len=4, 4 camera directions
    # -> 16 input channels, 16x16 images, pose_seq_len=8, n_actions=2.
    B = 2
    image_seq_len = 4
    pose_seq_len = 8
    H = W = 16
    n_actions = 2
    h_out = w_out = 2   # 16 -> 8 -> 4 -> 2 after 3x (k=3, s=2, p=1)

    key = jax.random.PRNGKey(0)
    key, k_img, k_pos = jax.random.split(key, 3)
    depth_image = jax.random.normal(
        k_img, (B, image_seq_len * 4, H, W), jnp.float32)
    relative_position = jax.random.normal(
        k_pos, (B, 3 * pose_seq_len), jnp.float32)

    params = init_params(key, image_seq_len, pose_seq_len,
                         h_out, w_out, n_actions)

    consts, meta = prepare(params, batch=B, image_h=H, image_w=W)
    forward = make_forward(consts, meta)

    out = jax.block_until_ready(forward(depth_image, relative_position))
    ref = jax.block_until_ready(
        reference_forward(depth_image, relative_position, params,
                          image_seq_len))

    assert out.shape == (B, n_actions * 2), out.shape
    max_diff = float(jnp.max(jnp.abs(out - ref)))
    # bf16 matmul operands (f32 accumulation) vs f32 reference -> relaxed tol.
    assert np.allclose(np.asarray(out), np.asarray(ref),
                       atol=5e-2, rtol=5e-2), f"max abs diff {max_diff}"
    print("KERNEL_OK")
</pallas_src>

<mosaic_0001>
module attributes {stable_mosaic.version = 11 : i64} {
  func.func @_fused_model_kernel(%arg0: memref<128x144xbf16, #tpu.memory_space<vmem>>, %arg1: memref<2x24xf32, #tpu.memory_space<vmem>>, %arg2: memref<144x128xbf16, #tpu.memory_space<vmem>>, %arg3: memref<1x128xf32, #tpu.memory_space<vmem>>, %arg4: memref<9x16x64xbf16, #tpu.memory_space<vmem>>, %arg5: memref<1152x256xbf16, #tpu.memory_space<vmem>>, %arg6: memref<1x256xf32, #tpu.memory_space<vmem>>, %arg7: memref<9x4x16xbf16, #tpu.memory_space<vmem>>, %arg8: memref<2304x128xbf16, #tpu.memory_space<vmem>>, %arg9: memref<1x128xf32, #tpu.memory_space<vmem>>, %arg10: memref<512x512xbf16, #tpu.memory_space<vmem>>, %arg11: memref<24x512xf32, #tpu.memory_space<vmem>>, %arg12: memref<1x512xf32, #tpu.memory_space<vmem>>, %arg13: memref<512x128xbf16, #tpu.memory_space<vmem>>, %arg14: memref<1x128xf32, #tpu.memory_space<vmem>>, %arg15: memref<128x64xbf16, #tpu.memory_space<vmem>>, %arg16: memref<1x64xf32, #tpu.memory_space<vmem>>, %arg17: memref<64x4xf32, #tpu.memory_space<vmem>>, %arg18: memref<1x4xf32, #tpu.memory_space<vmem>>, %arg19: memref<2x4xf32, #tpu.memory_space<vmem>>) attributes {dimension_semantics = [], scalar_prefetch = 0 : i64, scratch_operands = 0 : i64, tpu.core_type = #tpu.core_type<tc>} {
    %c0 = arith.constant 0 : index
    %c0_0 = arith.constant 0 : index
    %0 = vector.load %arg0[%c0, %c0_0] : memref<128x144xbf16, #tpu.memory_space<vmem>>, vector<128x144xbf16>
    %c0_1 = arith.constant 0 : index
    %c0_2 = arith.constant 0 : index
    %1 = vector.load %arg2[%c0_1, %c0_2] : memref<144x128xbf16, #tpu.memory_space<vmem>>, vector<144x128xbf16>
    %cst = arith.constant dense<0.000000e+00> : vector<128x128xf32>
    %2 = tpu.matmul %0, %1, %cst {dimension_numbers = #tpu.dot_dimension_numbers<[1], [0], [0], [1], [0, 0, 1, 1], [], []>} : vector<128x144xbf16>, vector<144x128xbf16>, vector<128x128xf32> -> vector<128x128xf32>
    %c0_3 = arith.constant 0 : index
    %c0_4 = arith.constant 0 : index
    %3 = vector.load %arg3[%c0_3, %c0_4] : memref<1x128xf32, #tpu.memory_space<vmem>>, vector<1x128xf32>
    %4 = vector.broadcast %3 : vector<1x128xf32> to vector<128x128xf32>
    %5 = arith.addf %2, %4 : vector<128x128xf32>
    %cst_5 = arith.constant 0.000000e+00 : f32
    %6 = vector.broadcast %cst_5 : f32 to vector<128x128xf32>
    %7 = arith.maximumf %5, %6 : vector<128x128xf32>
    %8 = arith.truncf %7 : vector<128x128xf32> to vector<128x128xbf16>
    %9 = vector.shape_cast %8 : vector<128x128xbf16> to vector<64x256xbf16>
    %c0_6 = arith.constant 0 : index
    %c0_7 = arith.constant 0 : index
    %c0_8 = arith.constant 0 : index
    %10 = vector.load %arg4[%c0_6, %c0_7, %c0_8] : memref<9x16x64xbf16, #tpu.memory_space<vmem>>, vector<1x16x64xbf16>
    %11 = vector.shape_cast %10 : vector<1x16x64xbf16> to vector<16x64xbf16>
    %cst_9 = arith.constant dense<0.000000e+00> : vector<16x256xf32>
    %12 = tpu.matmul %11, %9, %cst_9 {dimension_numbers = #tpu.dot_dimension_numbers<[1], [0], [0], [1], [0, 0, 1, 1], [], []>} : vector<16x64xbf16>, vector<64x256xbf16>, vector<16x256xf32> -> vector<16x256xf32>
    %13 = arith.truncf %12 : vector<16x256xf32> to vector<16x256xbf16>
    %14 = vector.shape_cast %13 : vector<16x256xbf16> to vector<32x128xbf16>
    %c1 = arith.constant 1 : index
    %c0_10 = arith.constant 0 : index
    %c0_11 = arith.constant 0 : index
    %15 = vector.load %arg4[%c1, %c0_10, %c0_11] : memref<9x16x64xbf16, #tpu.memory_space<vmem>>, vector<1x16x64xbf16>
    %16 = vector.shape_cast %15 : vector<1x16x64xbf16> to vector<16x64xbf16>
    %cst_12 = arith.constant dense<0.000000e+00> : vector<16x256xf32>
    %17 = tpu.matmul %16, %9, %cst_12 {dimension_numbers = #tpu.dot_dimension_numbers<[1], [0], [0], [1], [0, 0, 1, 1], [], []>} : vector<16x64xbf16>, vector<64x256xbf16>, vector<16x256xf32> -> vector<16x256xf32>
    %18 = arith.truncf %17 : vector<16x256xf32> to vector<16x256xbf16>
    %19 = vector.shape_cast %18 : vector<16x256xbf16> to vector<32x128xbf16>
    %c2 = arith.constant 2 : index
    %c0_13 = arith.constant 0 : index
    %c0_14 = arith.constant 0 : index
    %20 = vector.load %arg4[%c2, %c0_13, %c0_14] : memref<9x16x64xbf16, #tpu.memory_space<vmem>>, vector<1x16x64xbf16>
    %21 = vector.shape_cast %20 : vector<1x16x64xbf16> to vector<16x64xbf16>
    %cst_15 = arith.constant dense<0.000000e+00> : vector<16x256xf32>
    %22 = tpu.matmul %21, %9, %cst_15 {dimension_numbers = #tpu.dot_dimension_numbers<[1], [0], [0], [1], [0, 0, 1, 1], [], []>} : vector<16x64xbf16>, vector<64x256xbf16>, vector<16x256xf32> -> vector<16x256xf32>
    %23 = arith.truncf %22 : vector<16x256xf32> to vector<16x256xbf16>
    %24 = vector.shape_cast %23 : vector<16x256xbf16> to vector<32x128xbf16>
    %c3 = arith.constant 3 : index
    %c0_16 = arith.constant 0 : index
    %c0_17 = arith.constant 0 : index
    %25 = vector.load %arg4[%c3, %c0_16, %c0_17] : memref<9x16x64xbf16, #tpu.memory_space<vmem>>, vector<1x16x64xbf16>
    %26 = vector.shape_cast %25 : vector<1x16x64xbf16> to vector<16x64xbf16>
    %cst_18 = arith.constant dense<0.000000e+00> : vector<16x256xf32>
    %27 = tpu.matmul %26, %9, %cst_18 {dimension_numbers = #tpu.dot_dimension_numbers<[1], [0], [0], [1], [0, 0, 1, 1], [], []>} : vector<16x64xbf16>, vector<64x256xbf16>, vector<16x256xf32> -> vector<16x256xf32>
    %28 = arith.truncf %27 : vector<16x256xf32> to vector<16x256xbf16>
    %29 = vector.shape_cast %28 : vector<16x256xbf16> to vector<32x128xbf16>
    %c4 = arith.constant 4 : index
    %c0_19 = arith.constant 0 : index
    %c0_20 = arith.constant 0 : index
    %30 = vector.load %arg4[%c4, %c0_19, %c0_20] : memref<9x16x64xbf16, #tpu.memory_space<vmem>>, vector<1x16x64xbf16>
    %31 = vector.shape_cast %30 : vector<1x16x64xbf16> to vector<16x64xbf16>
    %cst_21 = arith.constant dense<0.000000e+00> : vector<16x256xf32>
    %32 = tpu.matmul %31, %9, %cst_21 {dimension_numbers = #tpu.dot_dimension_numbers<[1], [0], [0], [1], [0, 0, 1, 1], [], []>} : vector<16x64xbf16>, vector<64x256xbf16>, vector<16x256xf32> -> vector<16x256xf32>
    %33 = arith.truncf %32 : vector<16x256xf32> to vector<16x256xbf16>
    %34 = vector.shape_cast %33 : vector<16x256xbf16> to vector<32x128xbf16>
    %c5 = arith.constant 5 : index
    %c0_22 = arith.constant 0 : index
    %c0_23 = arith.constant 0 : index
    %35 = vector.load %arg4[%c5, %c0_22, %c0_23] : memref<9x16x64xbf16, #tpu.memory_space<vmem>>, vector<1x16x64xbf16>
    %36 = vector.shape_cast %35 : vector<1x16x64xbf16> to vector<16x64xbf16>
    %cst_24 = arith.constant dense<0.000000e+00> : vector<16x256xf32>
    %37 = tpu.matmul %36, %9, %cst_24 {dimension_numbers = #tpu.dot_dimension_numbers<[1], [0], [0], [1], [0, 0, 1, 1], [], []>} : vector<16x64xbf16>, vector<64x256xbf16>, vector<16x256xf32> -> vector<16x256xf32>
    %38 = arith.truncf %37 : vector<16x256xf32> to vector<16x256xbf16>
    %39 = vector.shape_cast %38 : vector<16x256xbf16> to vector<32x128xbf16>
    %c6 = arith.constant 6 : index
    %c0_25 = arith.constant 0 : index
    %c0_26 = arith.constant 0 : index
    %40 = vector.load %arg4[%c6, %c0_25, %c0_26] : memref<9x16x64xbf16, #tpu.memory_space<vmem>>, vector<1x16x64xbf16>
    %41 = vector.shape_cast %40 : vector<1x16x64xbf16> to vector<16x64xbf16>
    %cst_27 = arith.constant dense<0.000000e+00> : vector<16x256xf32>
    %42 = tpu.matmul %41, %9, %cst_27 {dimension_numbers = #tpu.dot_dimension_numbers<[1], [0], [0], [1], [0, 0, 1, 1], [], []>} : vector<16x64xbf16>, vector<64x256xbf16>, vector<16x256xf32> -> vector<16x256xf32>
    %43 = arith.truncf %42 : vector<16x256xf32> to vector<16x256xbf16>
    %44 = vector.shape_cast %43 : vector<16x256xbf16> to vector<32x128xbf16>
    %c7 = arith.constant 7 : index
    %c0_28 = arith.constant 0 : index
    %c0_29 = arith.constant 0 : index
    %45 = vector.load %arg4[%c7, %c0_28, %c0_29] : memref<9x16x64xbf16, #tpu.memory_space<vmem>>, vector<1x16x64xbf16>
    %46 = vector.shape_cast %45 : vector<1x16x64xbf16> to vector<16x64xbf16>
    %cst_30 = arith.constant dense<0.000000e+00> : vector<16x256xf32>
    %47 = tpu.matmul %46, %9, %cst_30 {dimension_numbers = #tpu.dot_dimension_numbers<[1], [0], [0], [1], [0, 0, 1, 1], [], []>} : vector<16x64xbf16>, vector<64x256xbf16>, vector<16x256xf32> -> vector<16x256xf32>
    %48 = arith.truncf %47 : vector<16x256xf32> to vector<16x256xbf16>
    %49 = vector.shape_cast %48 : vector<16x256xbf16> to vector<32x128xbf16>
    %c8 = arith.constant 8 : index
    %c0_31 = arith.constant 0 : index
    %c0_32 = arith.constant 0 : index
    %50 = vector.load %arg4[%c8, %c0_31, %c0_32] : memref<9x16x64xbf16, #tpu.memory_space<vmem>>, vector<1x16x64xbf16>
    %51 = vector.shape_cast %50 : vector<1x16x64xbf16> to vector<16x64xbf16>
    %cst_33 = arith.constant dense<0.000000e+00> : vector<16x256xf32>
    %52 = tpu.matmul %51, %9, %cst_33 {dimension_numbers = #tpu.dot_dimension_numbers<[1], [0], [0], [1], [0, 0, 1, 1], [], []>} : vector<16x64xbf16>, vector<64x256xbf16>, vector<16x256xf32> -> vector<16x256xf32>
    %53 = arith.truncf %52 : vector<16x256xf32> to vector<16x256xbf16>
    %54 = vector.shape_cast %53 : vector<16x256xbf16> to vector<32x128xbf16>
    %55 = tpu.concatenate %14, %19, %24, %29, %34, %39, %44, %49, %54 in 1 : vector<32x128xbf16>, vector<32x128xbf16>, vector<32x128xbf16>, vector<32x128xbf16>, vector<32x128xbf16>, vector<32x128xbf16>, vector<32x128xbf16>, vector<32x128xbf16>, vector<32x128xbf16> -> vector<32x1152xbf16>
    %c0_34 = arith.constant 0 : index
    %c0_35 = arith.constant 0 : index
    %56 = vector.load %arg5[%c0_34, %c0_35] : memref<1152x256xbf16, #tpu.memory_space<vmem>>, vector<1152x256xbf16>
    %cst_36 = arith.constant dense<0.000000e+00> : vector<32x256xf32>
    %57 = tpu.matmul %55, %56, %cst_36 {dimension_numbers = #tpu.dot_dimension_numbers<[1], [0], [0], [1], [0, 0, 1, 1], [], []>} : vector<32x1152xbf16>, vector<1152x256xbf16>, vector<32x256xf32> -> vector<32x256xf32>
    %c0_37 = arith.constant 0 : index
    %c0_38 = arith.constant 0 : index
    %58 = vector.load %arg6[%c0_37, %c0_38] : memref<1x256xf32, #tpu.memory_space<vmem>>, vector<1x256xf32>
    %59 = vector.broadcast %58 : vector<1x256xf32> to vector<32x256xf32>
    %60 = arith.addf %57, %59 : vector<32x256xf32>
    %cst_39 = arith.constant 0.000000e+00 : f32
    %61 = vector.broadcast %cst_39 : f32 to vector<32x256xf32>
    %62 = arith.maximumf %60, %61 : vector<32x256xf32>
    %63 = arith.truncf %62 : vector<32x256xf32> to vector<32x256xbf16>
    %64 = vector.shape_cast %63 : vector<32x256xbf16> to vector<16x512xbf16>
    %c0_40 = arith.constant 0 : index
    %c0_41 = arith.constant 0 : index
    %c0_42 = arith.constant 0 : index
    %65 = vector.load %arg7[%c0_40, %c0_41, %c0_42] : memref<9x4x16xbf16, #tpu.memory_space<vmem>>, vector<1x4x16xbf16>
    %66 = vector.shape_cast %65 : vector<1x4x16xbf16> to vector<4x16xbf16>
    %cst_43 = arith.constant dense<0.000000e+00> : vector<4x512xf32>
    %67 = tpu.matmul %66, %64, %cst_43 {dimension_numbers = #tpu.dot_dimension_numbers<[1], [0], [0], [1], [0, 0, 1, 1], [], []>} : vector<4x16xbf16>, vector<16x512xbf16>, vector<4x512xf32> -> vector<4x512xf32>
    %68 = arith.truncf %67 : vector<4x512xf32> to vector<4x512xbf16>
    %69 = vector.shape_cast %68 : vector<4x512xbf16> to vector<8x256xbf16>
    %c1_44 = arith.constant 1 : index
    %c0_45 = arith.constant 0 : index
    %c0_46 = arith.constant 0 : index
    %70 = vector.load %arg7[%c1_44, %c0_45, %c0_46] : memref<9x4x16xbf16, #tpu.memory_space<vmem>>, vector<1x4x16xbf16>
    %71 = vector.shape_cast %70 : vector<1x4x16xbf16> to vector<4x16xbf16>
    %cst_47 = arith.constant dense<0.000000e+00> : vector<4x512xf32>
    %72 = tpu.matmul %71, %64, %cst_47 {dimension_numbers = #tpu.dot_dimension_numbers<[1], [0], [0], [1], [0, 0, 1, 1], [], []>} : vector<4x16xbf16>, vector<16x512xbf16>, vector<4x512xf32> -> vector<4x512xf32>
    %73 = arith.truncf %72 : vector<4x512xf32> to vector<4x512xbf16>
    %74 = vector.shape_cast %73 : vector<4x512xbf16> to vector<8x256xbf16>
    %c2_48 = arith.constant 2 : index
    %c0_49 = arith.constant 0 : index
    %c0_50 = arith.constant 0 : index
    %75 = vector.load %arg7[%c2_48, %c0_49, %c0_50] : memref<9x4x16xbf16, #tpu.memory_space<vmem>>, vector<1x4x16xbf16>
    %76 = vector.shape_cast %75 : vector<1x4x16xbf16> to vector<4x16xbf16>
    %cst_51 = arith.constant dense<0.000000e+00> : vector<4x512xf32>
    %77 = tpu.matmul %76, %64, %cst_51 {dimension_numbers = #tpu.dot_dimension_numbers<[1], [0], [0], [1], [0, 0, 1, 1], [], []>} : vector<4x16xbf16>, vector<16x512xbf16>, vector<4x512xf32> -> vector<4x512xf32>
    %78 = arith.truncf %77 : vector<4x512xf32> to vector<4x512xbf16>
    %79 = vector.shape_cast %78 : vector<4x512xbf16> to vector<8x256xbf16>
    %c3_52 = arith.constant 3 : index
    %c0_53 = arith.constant 0 : index
    %c0_54 = arith.constant 0 : index
    %80 = vector.load %arg7[%c3_52, %c0_53, %c0_54] : memref<9x4x16xbf16, #tpu.memory_space<vmem>>, vector<1x4x16xbf16>
    %81 = vector.shape_cast %80 : vector<1x4x16xbf16> to vector<4x16xbf16>
    %cst_55 = arith.constant dense<0.000000e+00> : vector<4x512xf32>
    %82 = tpu.matmul %81, %64, %cst_55 {dimension_numbers = #tpu.dot_dimension_numbers<[1], [0], [0], [1], [0, 0, 1, 1], [], []>} : vector<4x16xbf16>, vector<16x512xbf16>, vector<4x512xf32> -> vector<4x512xf32>
    %83 = arith.truncf %82 : vector<4x512xf32> to vector<4x512xbf16>
    %84 = vector.shape_cast %83 : vector<4x512xbf16> to vector<8x256xbf16>
    %c4_56 = arith.constant 4 : index
    %c0_57 = arith.constant 0 : index
    %c0_58 = arith.constant 0 : index
    %85 = vector.load %arg7[%c4_56, %c0_57, %c0_58] : memref<9x4x16xbf16, #tpu.memory_space<vmem>>, vector<1x4x16xbf16>
    %86 = vector.shape_cast %85 : vector<1x4x16xbf16> to vector<4x16xbf16>
    %cst_59 = arith.constant dense<0.000000e+00> : vector<4x512xf32>
    %87 = tpu.matmul %86, %64, %cst_59 {dimension_numbers = #tpu.dot_dimension_numbers<[1], [0], [0], [1], [0, 0, 1, 1], [], []>} : vector<4x16xbf16>, vector<16x512xbf16>, vector<4x512xf32> -> vector<4x512xf32>
    %88 = arith.truncf %87 : vector<4x512xf32> to vector<4x512xbf16>
    %89 = vector.shape_cast %88 : vector<4x512xbf16> to vector<8x256xbf16>
    %c5_60 = arith.constant 5 : index
    %c0_61 = arith.constant 0 : index
    %c0_62 = arith.constant 0 : index
    %90 = vector.load %arg7[%c5_60, %c0_61, %c0_62] : memref<9x4x16xbf16, #tpu.memory_space<vmem>>, vector<1x4x16xbf16>
    %91 = vector.shape_cast %90 : vector<1x4x16xbf16> to vector<4x16xbf16>
    %cst_63 = arith.constant dense<0.000000e+00> : vector<4x512xf32>
    %92 = tpu.matmul %91, %64, %cst_63 {dimension_numbers = #tpu.dot_dimension_numbers<[1], [0], [0], [1], [0, 0, 1, 1], [], []>} : vector<4x16xbf16>, vector<16x512xbf16>, vector<4x512xf32> -> vector<4x512xf32>
    %93 = arith.truncf %92 : vector<4x512xf32> to vector<4x512xbf16>
    %94 = vector.shape_cast %93 : vector<4x512xbf16> to vector<8x256xbf16>
    %c6_64 = arith.constant 6 : index
    %c0_65 = arith.constant 0 : index
    %c0_66 = arith.constant 0 : index
    %95 = vector.load %arg7[%c6_64, %c0_65, %c0_66] : memref<9x4x16xbf16, #tpu.memory_space<vmem>>, vector<1x4x16xbf16>
    %96 = vector.shape_cast %95 : vector<1x4x16xbf16> to vector<4x16xbf16>
    %cst_67 = arith.constant dense<0.000000e+00> : vector<4x512xf32>
    %97 = tpu.matmul %96, %64, %cst_67 {dimension_numbers = #tpu.dot_dimension_numbers<[1], [0], [0], [1], [0, 0, 1, 1], [], []>} : vector<4x16xbf16>, vector<16x512xbf16>, vector<4x512xf32> -> vector<4x512xf32>
    %98 = arith.truncf %97 : vector<4x512xf32> to vector<4x512xbf16>
    %99 = vector.shape_cast %98 : vector<4x512xbf16> to vector<8x256xbf16>
    %c7_68 = arith.constant 7 : index
    %c0_69 = arith.constant 0 : index
    %c0_70 = arith.constant 0 : index
    %100 = vector.load %arg7[%c7_68, %c0_69, %c0_70] : memref<9x4x16xbf16, #tpu.memory_space<vmem>>, vector<1x4x16xbf16>
    %101 = vector.shape_cast %100 : vector<1x4x16xbf16> to vector<4x16xbf16>
    %cst_71 = arith.constant dense<0.000000e+00> : vector<4x512xf32>
    %102 = tpu.matmul %101, %64, %cst_71 {dimension_numbers = #tpu.dot_dimension_numbers<[1], [0], [0], [1], [0, 0, 1, 1], [], []>} : vector<4x16xbf16>, vector<16x512xbf16>, vector<4x512xf32> -> vector<4x512xf32>
    %103 = arith.truncf %102 : vector<4x512xf32> to vector<4x512xbf16>
    %104 = vector.shape_cast %103 : vector<4x512xbf16> to vector<8x256xbf16>
    %c8_72 = arith.constant 8 : index
    %c0_73 = arith.constant 0 : index
    %c0_74 = arith.constant 0 : index
    %105 = vector.load %arg7[%c8_72, %c0_73, %c0_74] : memref<9x4x16xbf16, #tpu.memory_space<vmem>>, vector<1x4x16xbf16>
    %106 = vector.shape_cast %105 : vector<1x4x16xbf16> to vector<4x16xbf16>
    %cst_75 = arith.constant dense<0.000000e+00> : vector<4x512xf32>
    %107 = tpu.matmul %106, %64, %cst_75 {dimension_numbers = #tpu.dot_dimension_numbers<[1], [0], [0], [1], [0, 0, 1, 1], [], []>} : vector<4x16xbf16>, vector<16x512xbf16>, vector<4x512xf32> -> vector<4x512xf32>
    %108 = arith.truncf %107 : vector<4x512xf32> to vector<4x512xbf16>
    %109 = vector.shape_cast %108 : vector<4x512xbf16> to vector<8x256xbf16>
    %110 = tpu.concatenate %69, %74, %79, %84, %89, %94, %99, %104, %109 in 1 : vector<8x256xbf16>, vector<8x256xbf16>, vector<8x256xbf16>, vector<8x256xbf16>, vector<8x256xbf16>, vector<8x256xbf16>, vector<8x256xbf16>, vector<8x256xbf16>, vector<8x256xbf16> -> vector<8x2304xbf16>
    %c0_76 = arith.constant 0 : index
    %c0_77 = arith.constant 0 : index
    %111 = vector.load %arg8[%c0_76, %c0_77] : memref<2304x128xbf16, #tpu.memory_space<vmem>>, vector<2304x128xbf16>
    %cst_78 = arith.constant dense<0.000000e+00> : vector<8x128xf32>
    %112 = tpu.matmul %110, %111, %cst_78 {dimension_numbers = #tpu.dot_dimension_numbers<[1], [0], [0], [1], [0, 0, 1, 1], [], []>} : vector<8x2304xbf16>, vector<2304x128xbf16>, vector<8x128xf32> -> vector<8x128xf32>
    %c0_79 = arith.constant 0 : index
    %c0_80 = arith.constant 0 : index
    %113 = vector.load %arg9[%c0_79, %c0_80] : memref<1x128xf32, #tpu.memory_space<vmem>>, vector<1x128xf32>
    %114 = vector.broadcast %113 : vector<1x128xf32> to vector<8x128xf32>
    %115 = arith.addf %112, %114 : vector<8x128xf32>
    %cst_81 = arith.constant 0.000000e+00 : f32
    %116 = vector.broadcast %cst_81 : f32 to vector<8x128xf32>
    %117 = arith.maximumf %115, %116 : vector<8x128xf32>
    %118 = arith.truncf %117 : vector<8x128xf32> to vector<8x128xbf16>
    %119 = vector.extract_strided_slice %118 {offsets = [0, 0], sizes = [2, 128], strides = [1, 1]} : vector<8x128xbf16> to vector<2x128xbf16>
    %120 = vector.extract_strided_slice %118 {offsets = [2, 0], sizes = [2, 128], strides = [1, 1]} : vector<8x128xbf16> to vector<2x128xbf16>
    %121 = vector.extract_strided_slice %118 {offsets = [4, 0], sizes = [2, 128], strides = [1, 1]} : vector<8x128xbf16> to vector<2x128xbf16>
    %122 = vector.extract_strided_slice %118 {offsets = [6, 0], sizes = [2, 128], strides = [1, 1]} : vector<8x128xbf16> to vector<2x128xbf16>
    %123 = tpu.concatenate %119, %120, %121, %122 in 1 : vector<2x128xbf16>, vector<2x128xbf16>, vector<2x128xbf16>, vector<2x128xbf16> -> vector<2x512xbf16>
    %c0_82 = arith.constant 0 : index
    %c0_83 = arith.constant 0 : index
    %124 = vector.load %arg10[%c0_82, %c0_83] : memref<512x512xbf16, #tpu.memory_space<vmem>>, vector<512x512xbf16>
    %cst_84 = arith.constant dense<0.000000e+00> : vector<2x512xf32>
    %125 = tpu.matmul %123, %124, %cst_84 {dimension_numbers = #tpu.dot_dimension_numbers<[1], [0], [0], [1], [0, 0, 1, 1], [], []>} : vector<2x512xbf16>, vector<512x512xbf16>, vector<2x512xf32> -> vector<2x512xf32>
    %c0_85 = arith.constant 0 : index
    %c0_86 = arith.constant 0 : index
    %126 = vector.load %arg1[%c0_85, %c0_86] : memref<2x24xf32, #tpu.memory_space<vmem>>, vector<2x24xf32>
    %c0_87 = arith.constant 0 : index
    %c0_88 = arith.constant 0 : index
    %127 = vector.load %arg11[%c0_87, %c0_88] : memref<24x512xf32, #tpu.memory_space<vmem>>, vector<24x512xf32>
    %cst_89 = arith.constant dense<0.000000e+00> : vector<2x512xf32>
    %128 = tpu.matmul %126, %127, %cst_89 {dimension_numbers = #tpu.dot_dimension_numbers<[1], [0], [0], [1], [0, 0, 1, 1], [], []>} : vector<2x24xf32>, vector<24x512xf32>, vector<2x512xf32> -> vector<2x512xf32>
    %129 = arith.addf %125, %128 : vector<2x512xf32>
    %c0_90 = arith.constant 0 : index
    %c0_91 = arith.constant 0 : index
    %130 = vector.load %arg12[%c0_90, %c0_91] : memref<1x512xf32, #tpu.memory_space<vmem>>, vector<1x512xf32>
    %131 = vector.broadcast %130 : vector<1x512xf32> to vector<2x512xf32>
    %132 = arith.addf %129, %131 : vector<2x512xf32>
    %cst_92 = arith.constant 0.000000e+00 : f32
    %133 = vector.broadcast %cst_92 : f32 to vector<2x512xf32>
    %134 = arith.maximumf %132, %133 : vector<2x512xf32>
    %135 = arith.truncf %134 : vector<2x512xf32> to vector<2x512xbf16>
    %c0_93 = arith.constant 0 : index
    %c0_94 = arith.constant 0 : index
    %136 = vector.load %arg13[%c0_93, %c0_94] : memref<512x128xbf16, #tpu.memory_space<vmem>>, vector<512x128xbf16>
    %cst_95 = arith.constant dense<0.000000e+00> : vector<2x128xf32>
    %137 = tpu.matmul %135, %136, %cst_95 {dimension_numbers = #tpu.dot_dimension_numbers<[1], [0], [0], [1], [0, 0, 1, 1], [], []>} : vector<2x512xbf16>, vector<512x128xbf16>, vector<2x128xf32> -> vector<2x128xf32>
    %c0_96 = arith.constant 0 : index
    %c0_97 = arith.constant 0 : index
    %138 = vector.load %arg14[%c0_96, %c0_97] : memref<1x128xf32, #tpu.memory_space<vmem>>, vector<1x128xf32>
    %139 = vector.broadcast %138 : vector<1x128xf32> to vector<2x128xf32>
    %140 = arith.addf %137, %139 : vector<2x128xf32>
    %cst_98 = arith.constant 0.000000e+00 : f32
    %141 = vector.broadcast %cst_98 : f32 to vector<2x128xf32>
    %142 = arith.maximumf %140, %141 : vector<2x128xf32>
    %143 = arith.truncf %142 : vector<2x128xf32> to vector<2x128xbf16>
    %c0_99 = arith.constant 0 : index
    %c0_100 = arith.constant 0 : index
    %144 = vector.load %arg15[%c0_99, %c0_100] : memref<128x64xbf16, #tpu.memory_space<vmem>>, vector<128x64xbf16>
    %cst_101 = arith.constant dense<0.000000e+00> : vector<2x64xf32>
    %145 = tpu.matmul %143, %144, %cst_101 {dimension_numbers = #tpu.dot_dimension_numbers<[1], [0], [0], [1], [0, 0, 1, 1], [], []>} : vector<2x128xbf16>, vector<128x64xbf16>, vector<2x64xf32> -> vector<2x64xf32>
    %c0_102 = arith.constant 0 : index
    %c0_103 = arith.constant 0 : index
    %146 = vector.load %arg16[%c0_102, %c0_103] : memref<1x64xf32, #tpu.memory_space<vmem>>, vector<1x64xf32>
    %147 = vector.broadcast %146 : vector<1x64xf32> to vector<2x64xf32>
    %148 = arith.addf %145, %147 : vector<2x64xf32>
    %cst_104 = arith.constant 0.000000e+00 : f32
    %149 = vector.broadcast %cst_104 : f32 to vector<2x64xf32>
    %150 = arith.maximumf %148, %149 : vector<2x64xf32>
    %c0_105 = arith.constant 0 : index
    %c0_106 = arith.constant 0 : index
    %151 = vector.load %arg17[%c0_105, %c0_106] : memref<64x4xf32, #tpu.memory_space<vmem>>, vector<64x4xf32>
    %cst_107 = arith.constant dense<0.000000e+00> : vector<2x4xf32>
    %152 = tpu.matmul %150, %151, %cst_107 {dimension_numbers = #tpu.dot_dimension_numbers<[1], [0], [0], [1], [0, 0, 1, 1], [], []>} : vector<2x64xf32>, vector<64x4xf32>, vector<2x4xf32> -> vector<2x4xf32>
    %c0_108 = arith.constant 0 : index
    %c0_109 = arith.constant 0 : index
    %153 = vector.load %arg18[%c0_108, %c0_109] : memref<1x4xf32, #tpu.memory_space<vmem>>, vector<1x4xf32>
    %154 = vector.broadcast %153 : vector<1x4xf32> to vector<2x4xf32>
    %155 = arith.addf %152, %154 : vector<2x4xf32>
    %c0_110 = arith.constant 0 : index
    %c0_111 = arith.constant 0 : index
    %156 = vector.load %arg19[%c0_110, %c0_111] : memref<2x4xf32, #tpu.memory_space<vmem>>, vector<2x4xf32>
    tpu.vector_store %arg19[%c0_110, %c0_111], %155 {strides = array<i32>} : memref<2x4xf32, #tpu.memory_space<vmem>>, vector<2x4xf32>,
    return
  }
}

</mosaic_0001>

<llo_original>
// kernel: forward.1
$region0: #{forward.1}
  #allocation0 [shape = 'u32[]', space=smem, size = 0x4, offset = 0x4, fixed_abs, tag = 'smem constant byte address 0x4 - core index']
  #allocation1 [shape = 'u32[144,128]{1,0:T(1,128)}', space=vmem, size = 0x12000, scoped, tag = 'internal scratch']
  %s0 = inlined_call_operand.vmem [shape: bf16[128,144], index: 0, kind: input, shape index: {}]
  %s1 = inlined_call_operand.vmem [shape: f32[2,24], index: 1, kind: input, shape index: {}]
  %s2 = inlined_call_operand.vmem [shape: bf16[144,128], index: 2, kind: input, shape index: {}]
  %s3 = inlined_call_operand.vmem [shape: f32[1,128], index: 3, kind: input, shape index: {}]
  %s4 = inlined_call_operand.vmem [shape: bf16[9,16,64], index: 4, kind: input, shape index: {}]
  %s5 = inlined_call_operand.vmem [shape: bf16[1152,256], index: 5, kind: input, shape index: {}]
  %s6 = inlined_call_operand.vmem [shape: f32[1,256], index: 6, kind: input, shape index: {}]
  %s7 = inlined_call_operand.vmem [shape: bf16[9,4,16], index: 7, kind: input, shape index: {}]
  %s8 = inlined_call_operand.vmem [shape: bf16[2304,128], index: 8, kind: input, shape index: {}]
  %s9 = inlined_call_operand.vmem [shape: f32[1,128], index: 9, kind: input, shape index: {}]
  %s10 = inlined_call_operand.vmem [shape: bf16[512,512], index: 10, kind: input, shape index: {}]
  %s11 = inlined_call_operand.vmem [shape: f32[24,512], index: 11, kind: input, shape index: {}]
  %s12 = inlined_call_operand.vmem [shape: f32[1,512], index: 12, kind: input, shape index: {}]
  %s13 = inlined_call_operand.vmem [shape: bf16[512,128], index: 13, kind: input, shape index: {}]
  %s14 = inlined_call_operand.vmem [shape: f32[1,128], index: 14, kind: input, shape index: {}]
  %s15 = inlined_call_operand.vmem [shape: bf16[128,64], index: 15, kind: input, shape index: {}]
  %s16 = inlined_call_operand.vmem [shape: f32[1,64], index: 16, kind: input, shape index: {}]
  %s17 = inlined_call_operand.vmem [shape: f32[64,4], index: 17, kind: input, shape index: {}]
  %s18 = inlined_call_operand.vmem [shape: f32[1,4], index: 18, kind: input, shape index: {}]
  %s19 = inlined_call_operand.hbm [shape: f32[2,4], index: 19, kind: output, shape index: {}]
  %s20 = sld [smem:[#allocation0]]
  $region86: #{forward.1} parent=0
    _
  %s22 = ssub.s32 1, %s20
  %s23 = scalar_select 0, %s22, %s20
  $region1: #{forward.1} parent=0
    #allocation2 [shape = 'u8[1024]{0}', space=vmem, size = 0x400, scoped, tag = 'output window, operand 0, single buffered']
    #allocation3 [shape = 's32[1]{0}', space=sflag, size = 0x4, scoped, tag = 'scoped memory for forward.1']
    %24 = vsyncpa [#allocation3], 0
    // Predicated region
    $region2: #{forward.1} parent=1 // pred_check
      _
    $region3: #{forward.1} parent=1 // pred_check_branch
      %26 = sbr.rel (0) target = $region5
    $region4: #{forward.1} parent=1 // pred_region
      _
    $region5: #{forward.1} parent=1 // pred_fallthru
      _
    // Predicated region
    $region6: #{forward.1} parent=1 // pred_check
      _
    $region7: #{forward.1} parent=1 // pred_check_branch
      %28 = sbr.rel (0) target = $region9
    $region8: #{forward.1} parent=1 // pred_region
      _
    $region9: #{forward.1} parent=1 // pred_fallthru
      _
    // Predicated region
    $region10: #{forward.1} parent=1 // pred_check
      _
    $region11: #{forward.1} parent=1 // pred_check_branch
      %30 = sbr.rel (0) target = $region13
    $region12: #{forward.1} parent=1 // pred_region
      _
    $region13: #{forward.1} parent=1 // pred_fallthru
      _
    // Predicated region
    $region14: #{forward.1} parent=1 // pred_check
      _
    $region15: #{forward.1} parent=1 // pred_check_branch
      %32 = sbr.rel (0) target = $region17
    $region16: #{forward.1} parent=1 // pred_region
      _
    $region17: #{forward.1} parent=1 // pred_fallthru
      _
    // Predicated region
    $region18: #{forward.1} parent=1 // pred_check
      _
    $region19: #{forward.1} parent=1 // pred_check_branch
      %34 = sbr.rel (0) target = $region21
    $region20: #{forward.1} parent=1 // pred_region
      _
    $region21: #{forward.1} parent=1 // pred_fallthru
      _
    // Predicated region
    $region22: #{forward.1} parent=1 // pred_check
      _
    $region23: #{forward.1} parent=1 // pred_check_branch
      %36 = sbr.rel (0) target = $region25
    $region24: #{forward.1} parent=1 // pred_region
      _
    $region25: #{forward.1} parent=1 // pred_fallthru
      _
    // Predicated region
    $region26: #{forward.1} parent=1 // pred_check
      _
    $region27: #{forward.1} parent=1 // pred_check_branch
      %38 = sbr.rel (0) target = $region29
    $region28: #{forward.1} parent=1 // pred_region
      _
    $region29: #{forward.1} parent=1 // pred_fallthru
      _
    // Predicated region
    $region30: #{forward.1} parent=1 // pred_check
      _
    $region31: #{forward.1} parent=1 // pred_check_branch
      %40 = sbr.rel (0) target = $region33
    $region32: #{forward.1} parent=1 // pred_region
      _
    $region33: #{forward.1} parent=1 // pred_fallthru
      _
    // Predicated region
    $region34: #{forward.1} parent=1 // pred_check
      _
    $region35: #{forward.1} parent=1 // pred_check_branch
      %42 = sbr.rel (0) target = $region37
    $region36: #{forward.1} parent=1 // pred_region
      _
    $region37: #{forward.1} parent=1 // pred_fallthru
      _
    // Predicated region
    $region38: #{forward.1} parent=1 // pred_check
      _
    $region39: #{forward.1} parent=1 // pred_check_branch
      %44 = sbr.rel (0) target = $region41
    $region40: #{forward.1} parent=1 // pred_region
      _
    $region41: #{forward.1} parent=1 // pred_fallthru
      _
    // Predicated region
    $region42: #{forward.1} parent=1 // pred_check
      _
    $region43: #{forward.1} parent=1 // pred_check_branch
      %46 = sbr.rel (0) target = $region45
    $region44: #{forward.1} parent=1 // pred_region
      _
    $region45: #{forward.1} parent=1 // pred_fallthru
      _
    // Predicated region
    $region46: #{forward.1} parent=1 // pred_check
      _
    $region47: #{forward.1} parent=1 // pred_check_branch
      %48 = sbr.rel (0) target = $region49
    $region48: #{forward.1} parent=1 // pred_region
      _
    $region49: #{forward.1} parent=1 // pred_fallthru
      _
    // Predicated region
    $region50: #{forward.1} parent=1 // pred_check
      _
    $region51: #{forward.1} parent=1 // pred_check_branch
      %50 = sbr.rel (0) target = $region53
    $region52: #{forward.1} parent=1 // pred_region
      _
    $region53: #{forward.1} parent=1 // pred_fallthru
      _
    // Predicated region
    $region54: #{forward.1} parent=1 // pred_check
      _
    $region55: #{forward.1} parent=1 // pred_check_branch
      %52 = sbr.rel (0) target = $region57
    $region56: #{forward.1} parent=1 // pred_region
      _
    $region57: #{forward.1} parent=1 // pred_fallthru
      _
    // Predicated region
    $region58: #{forward.1} parent=1 // pred_check
      _
    $region59: #{forward.1} parent=1 // pred_check_branch
      %54 = sbr.rel (0) target = $region61
    $region60: #{forward.1} parent=1 // pred_region
      _
    $region61: #{forward.1} parent=1 // pred_fallthru
      _
    // Predicated region
    $region62: #{forward.1} parent=1 // pred_check
      _
    $region63: #{forward.1} parent=1 // pred_check_branch
      %56 = sbr.rel (0) target = $region65
    $region64: #{forward.1} parent=1 // pred_region
      _
    $region65: #{forward.1} parent=1 // pred_fallthru
      _
    // Predicated region
    $region66: #{forward.1} parent=1 // pred_check
      _
    $region67: #{forward.1} parent=1 // pred_check_branch
      %58 = sbr.rel (0) target = $region69
    $region68: #{forward.1} parent=1 // pred_region
      _
    $region69: #{forward.1} parent=1 // pred_fallthru
      _
    // Predicated region
    $region70: #{forward.1} parent=1 // pred_check
      _
    $region71: #{forward.1} parent=1 // pred_check_branch
      %60 = sbr.rel (0) target = $region73
    $region72: #{forward.1} parent=1 // pred_region
      _
    $region73: #{forward.1} parent=1 // pred_fallthru
      _
    // Predicated region
    $region74: #{forward.1} parent=1 // pred_check
      _
    $region75: #{forward.1} parent=1 // pred_check_branch
      %62 = sbr.rel (0) target = $region77
    $region76: #{forward.1} parent=1 // pred_region
      _
    $region77: #{forward.1} parent=1 // pred_fallthru
      _
    %v64 = vld [vmem:[%s0] sm:$0xff]
    %v65 = vld [vmem:[%s0 + $0x8] sm:$0xff]
    %v66 = vld [vmem:[%s0 + $0x10] sm:$0xff]
    %v67 = vld [vmem:[%s0 + $0x18] sm:$0xff]
    %v68 = vld [vmem:[%s0 + $0x20] sm:$0xff]
    %v69 = vld [vmem:[%s0 + $0x28] sm:$0xff]
    %v70 = vld [vmem:[%s0 + $0x30] sm:$0xff]
    %v71 = vld [vmem:[%s0 + $0x38] sm:$0xff]
    %v72 = vld [vmem:[%s0 + $0x40] sm:$0xff]
    %v73 = vld [vmem:[%s0 + $0x48] sm:$0xff]
    %v74 = vld [vmem:[%s0 + $0x50] sm:$0xff]
    %v75 = vld [vmem:[%s0 + $0x58] sm:$0xff]
    %v76 = vld [vmem:[%s0 + $0x60] sm:$0xff]
    %v77 = vld [vmem:[%s0 + $0x68] sm:$0xff]
    %v78 = vld [vmem:[%s0 + $0x70] sm:$0xff]
    %v79 = vld [vmem:[%s0 + $0x78] sm:$0xff]
    %v80 = vld [vmem:[%s2] sm:$0xf]
    %v81 = vld [vmem:[%s2 + $0x4] sm:$0xf]
    %v82 = vld [vmem:[%s2 + $0x8] sm:$0xf]
    %v83 = vld [vmem:[%s2 + $0xc] sm:$0xf]
    %v84 = vld [vmem:[%s2 + $0x10] sm:$0xf]
    %v85 = vld [vmem:[%s2 + $0x14] sm:$0xf]
    %v86 = vld [vmem:[%s2 + $0x18] sm:$0xf]
    %v87 = vld [vmem:[%s2 + $0x1c] sm:$0xf]
    %v88 = vld [vmem:[%s2 + $0x20] sm:$0xf]
    %v89 = vld [vmem:[%s2 + $0x24] sm:$0xf]
    %v90 = vld [vmem:[%s2 + $0x28] sm:$0xf]
    %v91 = vld [vmem:[%s2 + $0x2c] sm:$0xf]
    %v92 = vld [vmem:[%s2 + $0x30] sm:$0xf]
    %v93 = vld [vmem:[%s2 + $0x34] sm:$0xf]
    %v94 = vld [vmem:[%s2 + $0x38] sm:$0xf]
    %v95 = vld [vmem:[%s2 + $0x3c] sm:$0xf]
    %v96 = vld [vmem:[%s2 + $0x40] sm:$0xf]
    %v97 = vld [vmem:[%s2 + $0x44] sm:$0xf]
    %v98 = vld [vmem:[%s3] sm:$0x1]
    %v100 = vlaneseq
    %v101 = vshrl.u32 %v100, 7
    %v102 = vsub.s32 0, %v101
    %v103 = vrot.slane %v98, %v102
    %v121 = vunpack.c.l.b16 %v64
    %v122 = vunpack.c.h.b16 %v64
    %v123 = vunpack.c.l.b16 %v65
    %v124 = vunpack.c.h.b16 %v65
    %v125 = vunpack.c.l.b16 %v66
    %v126 = vunpack.c.h.b16 %v66
    %v127 = vunpack.c.l.b16 %v67
    %v128 = vunpack.c.h.b16 %v67
    %v129 = vunpack.c.l.b16 %v68
    %v130 = vunpack.c.h.b16 %v68
    %v131 = vunpack.c.l.b16 %v69
    %v132 = vunpack.c.h.b16 %v69
    %v133 = vunpack.c.l.b16 %v70
    %v134 = vunpack.c.h.b16 %v70
    %v135 = vunpack.c.l.b16 %v71
    %v136 = vunpack.c.h.b16 %v71
    %v137 = vunpack.c.l.b16 %v72
    %v138 = vunpack.c.h.b16 %v72
    %v139 = vunpack.c.l.b16 %v73
    %v140 = vunpack.c.h.b16 %v73
    %v141 = vunpack.c.l.b16 %v74
    %v142 = vunpack.c.h.b16 %v74
    %v143 = vunpack.c.l.b16 %v75
    %v144 = vunpack.c.h.b16 %v75
    %v145 = vunpack.c.l.b16 %v76
    %v146 = vunpack.c.h.b16 %v76
    %v147 = vunpack.c.l.b16 %v77
    %v148 = vunpack.c.h.b16 %v77
    %v149 = vunpack.c.l.b16 %v78
    %v150 = vunpack.c.h.b16 %v78
    %v151 = vunpack.c.l.b16 %v79
    %v152 = vunpack.c.h.b16 %v79
    %v153 = vpack.c.b16 %v123, %v121
    %v154 = vpack.c.b16 %v124, %v122
    %v155 = vpack.c.b16 %v127, %v125
    %v156 = vpack.c.b16 %v128, %v126
    %v157 = vpack.c.b16 %v131, %v129
    %v158 = vpack.c.b16 %v132, %v130
    %v159 = vpack.c.b16 %v135, %v133
    %v160 = vpack.c.b16 %v136, %v134
    %v161 = vpack.c.b16 %v139, %v137
    %v162 = vpack.c.b16 %v140, %v138
    %v163 = vpack.c.b16 %v143, %v141
    %v164 = vpack.c.b16 %v144, %v142
    %v165 = vpack.c.b16 %v147, %v145
    %v166 = vpack.c.b16 %v148, %v146
    %v167 = vpack.c.b16 %v151, %v149
    %v168 = vpack.c.b16 %v152, %v150
    %v195 = vunpack.c.l.b16 %v80
    %v196 = vunpack.c.l.b16 %v81
    %v197 = vunpack.c.l.b16 %v82
    %v198 = vunpack.c.l.b16 %v83
    %v199 = vunpack.c.l.b16 %v84
    %v200 = vunpack.c.l.b16 %v85
    %v201 = vunpack.c.l.b16 %v86
    %v202 = vunpack.c.l.b16 %v87
    %v203 = vunpack.c.l.b16 %v88
    %v204 = vunpack.c.l.b16 %v89
    %v205 = vunpack.c.l.b16 %v90
    %v206 = vunpack.c.l.b16 %v91
    %v207 = vunpack.c.l.b16 %v92
    %v208 = vunpack.c.l.b16 %v93
    %v209 = vunpack.c.l.b16 %v94
    %v210 = vunpack.c.l.b16 %v95
    %v211 = vunpack.c.l.b16 %v96
    %v212 = vunpack.c.l.b16 %v97
    %v213 = vpack.c.b16 %v196, %v195
    %v214 = vpack.c.b16 %v198, %v197
    %v215 = vpack.c.b16 %v200, %v199
    %v216 = vpack.c.b16 %v202, %v201
    %v217 = vpack.c.b16 %v204, %v203
    %v218 = vpack.c.b16 %v206, %v205
    %v219 = vpack.c.b16 %v208, %v207
    %v220 = vpack.c.b16 %v210, %v209
    %v221 = vpack.c.b16 %v212, %v211
    %vm231 = vcmask 130048
    %v233 = vsel %vm231, %v154, 0
    %v236 = vsel %vm231, %v156, 0
    %v239 = vsel %vm231, %v158, 0
    %v242 = vsel %vm231, %v160, 0
    %v245 = vsel %vm231, %v162, 0
    %v248 = vsel %vm231, %v164, 0
    %v251 = vsel %vm231, %v166, 0
    %v254 = vsel %vm231, %v168, 0
    %256 = vmatprep.subr.bf16.mxu0 0
    %257 = vmatpush1.bf16.msra.mxu0 %v213
    %258 = vmatprep.subr.bf16.mxu0 0
    %259 = vmatpush1.bf16.msra.mxu0 %v214
    %260 = vmatprep.subr.bf16.mxu0 0
    %261 = vmatpush1.bf16.msra.mxu0 %v215
    %262 = vmatprep.subr.bf16.mxu0 0
    %263 = vmatpush1.bf16.msra.mxu0 %v216
    %264 = vmatprep.subr.bf16.mxu0 0
    %265 = vmatpush1.bf16.msra.mxu0 %v217
    %266 = vmatprep.subr.bf16.mxu0 0
    %267 = vmatpush1.bf16.msra.mxu0 %v218
    %268 = vmatprep.subr.bf16.mxu0 0
    %269 = vmatpush1.bf16.msra.mxu0 %v219
    %270 = vmatprep.subr.bf16.mxu0 0
    %271 = vmatpush1.bf16.msra.mxu0 %v220
    %272 = vmatprep.subr.bf16.mxu0 0
    %273 = vmatpush1.bf16.msra.mxu0 %v221
    %274 = vmatprep.subr.bf16.mxu0 0
    %275 = vmatpush1.bf16.msra.mxu0 0
    %276 = vmatprep.subr.bf16.mxu0 0
    %277 = vmatpush1.bf16.msra.mxu0 0
    %278 = vmatprep.subr.bf16.mxu0 0
    %279 = vmatpush1.bf16.msra.mxu0 0
    %280 = vmatprep.subr.bf16.mxu0 0
    %281 = vmatpush1.bf16.msra.mxu0 0
    %282 = vmatprep.subr.bf16.mxu0 0
    %283 = vmatpush1.bf16.msra.mxu0 0
    %284 = vmatprep.subr.bf16.mxu0 0
    %285 = vmatpush1.bf16.msra.mxu0 0
    %286 = vmatprep.subr.bf16.mxu0 0
    %287 = vmatpush1.bf16.msra.mxu0 0
    %288 = vmatprep.mubr.bf16.mxu0 %v233
    %289 = vmatmul.mubr.bf16.gmra.mrb[0].mxu0 %v153
    %v290 = vpop.f32.mrb[0].mxu0
    %v291 = vadd.f32 %v103, %v290
    %v292 = vpop.f32.mrb[0].mxu0
    %v293 = vpop.f32.mrb[0].mxu0
    %v294 = vadd.f32 %v103, %v293
    %v295 = vpop.f32.mrb[0].mxu0
    %296 = vmatprep.mubr.bf16.mxu0 %v236
    %297 = vmatmul.mubr.bf16.gmra.mrb[0].mxu0 %v155
    %v298 = vpop.f32.mrb[0].mxu0
    %v299 = vadd.f32 %v103, %v298
    %v300 = vpop.f32.mrb[0].mxu0
    %v301 = vpop.f32.mrb[0].mxu0
    %v302 = vadd.f32 %v103, %v301
    %v303 = vpop.f32.mrb[0].mxu0
    %304 = vmatprep.mubr.bf16.mxu0 %v239
    %305 = vmatmul.mubr.bf16.gmra.mrb[0].mxu0 %v157
    %v306 = vpop.f32.mrb[0].mxu0
    %v307 = vadd.f32 %v103, %v306
    %v308 = vpop.f32.mrb[0].mxu0
    %v309 = vpop.f32.mrb[0].mxu0
    %v310 = vadd.f32 %v103, %v309
    %v311 = vpop.f32.mrb[0].mxu0
    %312 = vmatprep.mubr.bf16.mxu0 %v242
    %313 = vmatmul.mubr.bf16.gmra.mrb[0].mxu0 %v159
    %v314 = vpop.f32.mrb[0].mxu0
    %v315 = vadd.f32 %v103, %v314
    %v316 = vpop.f32.mrb[0].mxu0
    %v317 = vpop.f32.mrb[0].mxu0
    %v318 = vadd.f32 %v103, %v317
    %v319 = vpop.f32.mrb[0].mxu0
    %320 = vmatprep.mubr.bf16.mxu0 %v245
    %321 = vmatmul.mubr.bf16.gmra.mrb[0].mxu0 %v161
    %v322 = vpop.f32.mrb[0].mxu0
    %v323 = vadd.f32 %v103, %v322
    %v324 = vpop.f32.mrb[0].mxu0
    %v325 = vpop.f32.mrb[0].mxu0
    %v326 = vadd.f32 %v103, %v325
    %v327 = vpop.f32.mrb[0].mxu0
    %328 = vmatprep.mubr.bf16.mxu0 %v248
    %329 = vmatmul.mubr.bf16.gmra.mrb[0].mxu0 %v163
    %v330 = vpop.f32.mrb[0].mxu0
    %v331 = vadd.f32 %v103, %v330
    %v332 = vpop.f32.mrb[0].mxu0
    %v333 = vpop.f32.mrb[0].mxu0
    %v334 = vadd.f32 %v103, %v333
    %v335 = vpop.f32.mrb[0].mxu0
    %336 = vmatprep.mubr.bf16.mxu0 %v251
    %337 = vmatmul.mubr.bf16.gmra.mrb[0].mxu0 %v165
    %v338 = vpop.f32.mrb[0].mxu0
    %v339 = vadd.f32 %v103, %v338
    %v340 = vpop.f32.mrb[0].mxu0
    %v341 = vpop.f32.mrb[0].mxu0
    %v342 = vadd.f32 %v103, %v341
    %v343 = vpop.f32.mrb[0].mxu0
    %344 = vmatprep.mubr.bf16.mxu0 %v254
    %345 = vmatmul.mubr.bf16.gmra.mrb[0].mxu0 %v167
    %v346 = vpop.f32.mrb[0].mxu0
    %v347 = vadd.f32 %v103, %v346
    %v348 = vpop.f32.mrb[0].mxu0
    %v349 = vpop.f32.mrb[0].mxu0
    %v350 = vadd.f32 %v103, %v349
    %v351 = vpop.f32.mrb[0].mxu0
    %352 = vdwg.mxu0
    %v353 = vmax.f32 %v291, 0.0
    %v354 = vmax.f32 %v294, 0.0
    %v355 = vmax.f32 %v299, 0.0
    %v356 = vmax.f32 %v302, 0.0
    %v357 = vmax.f32 %v307, 0.0
    %v358 = vmax.f32 %v310, 0.0
    %v359 = vmax.f32 %v315, 0.0
    %v360 = vmax.f32 %v318, 0.0
    %v361 = vmax.f32 %v323, 0.0
    %v362 = vmax.f32 %v326, 0.0
    %v363 = vmax.f32 %v331, 0.0
    %v364 = vmax.f32 %v334, 0.0
    %v365 = vmax.f32 %v339, 0.0
    %v366 = vmax.f32 %v342, 0.0
    %v367 = vmax.f32 %v347, 0.0
    %v368 = vmax.f32 %v350, 0.0
    %v369 = vpack.c.bf16 %v354, %v353
    %v370 = vpack.c.bf16 %v356, %v355
    %v371 = vpack.c.bf16 %v358, %v357
    %v372 = vpack.c.bf16 %v360, %v359
    %v373 = vpack.c.bf16 %v362, %v361
    %v374 = vpack.c.bf16 %v364, %v363
    %v375 = vpack.c.bf16 %v366, %v365
    %v376 = vpack.c.bf16 %v368, %v367
    %v378 = vunpack.i.l.s16 %v369
    %v379 = vunpack.i.h.s16 %v369
    %v381 = vunpack.i.l.s16 %v370
    %v382 = vunpack.i.h.s16 %v370
    %v384 = vunpack.i.l.s16 %v371
    %v385 = vunpack.i.h.s16 %v371
    %v387 = vunpack.i.l.s16 %v372
    %v388 = vunpack.i.h.s16 %v372
    %v390 = vunpack.i.l.s16 %v373
    %v391 = vunpack.i.h.s16 %v373
    %v393 = vunpack.i.l.s16 %v374
    %v394 = vunpack.i.h.s16 %v374
    %v396 = vunpack.i.l.s16 %v375
    %v397 = vunpack.i.h.s16 %v375
    %v399 = vunpack.i.l.s16 %v376
    %v400 = vunpack.i.h.s16 %v376
    %v401 = vld [vmem:[%s4] sm:$0xf]
    %v402 = vld [vmem:[%s4 + $0x4] sm:$0xf]
    %v405 = vunpack.c.l.b16 %v401
    %v406 = vunpack.c.l.b16 %v402
    %v407 = vpack.c.b16 %v406, %v405
    %v408 = vpack.c.b16 %v381, %v378
    %v409 = vpack.c.b16 %v382, %v379
    %v410 = vpack.c.b16 %v387, %v384
    %v411 = vpack.c.b16 %v388, %v385
    %v412 = vpack.c.b16 %v393, %v390
    %v413 = vpack.c.b16 %v394, %v391
    %v414 = vpack.c.b16 %v399, %v396
    %v415 = vpack.c.b16 %v400, %v397
    %vm424 = vcmask 523264
    %v426 = vsel %vm424, %v407, 0
    %428 = vmatprep.subr.bf16.mxu0 %v409
    %429 = vmatpush1.bf16.msra.mxu0 %v408
    %430 = vmatprep.subr.bf16.mxu0 %v411
    %431 = vmatpush1.bf16.msra.mxu0 %v410
    %432 = vmatprep.subr.bf16.mxu0 %v413
    %433 = vmatpush1.bf16.msra.mxu0 %v412
    %434 = vmatprep.subr.bf16.mxu0 %v415
    %435 = vmatpush1.bf16.msra.mxu0 %v414
    %436 = vmatprep.subr.bf16.mxu0 0
    %437 = vmatpush1.bf16.msra.mxu0 0
    %438 = vmatprep.subr.bf16.mxu0 0
    %439 = vmatpush1.bf16.msra.mxu0 0
    %440 = vmatprep.subr.bf16.mxu0 0
    %441 = vmatpush1.bf16.msra.mxu0 0
    %442 = vmatprep.subr.bf16.mxu0 0
    %443 = vmatpush1.bf16.msra.mxu0 0
    %444 = vmatprep.subr.bf16.mxu0 0
    %445 = vmatpush1.bf16.msra.mxu0 0
    %446 = vmatprep.subr.bf16.mxu0 0
    %447 = vmatpush1.bf16.msra.mxu0 0
    %448 = vmatprep.subr.bf16.mxu0 0
    %449 = vmatpush1.bf16.msra.mxu0 0
    %450 = vmatprep.subr.bf16.mxu0 0
    %451 = vmatpush1.bf16.msra.mxu0 0
    %452 = vmatprep.subr.bf16.mxu0 0
    %453 = vmatpush1.bf16.msra.mxu0 0
    %454 = vmatprep.subr.bf16.mxu0 0
    %455 = vmatpush1.bf16.msra.mxu0 0
    %456 = vmatprep.subr.bf16.mxu0 0
    %457 = vmatpush1.bf16.msra.mxu0 0
    %458 = vmatprep.subr.bf16.mxu0 0
    %459 = vmatpush1.bf16.msra.mxu0 0
    %460 = vmatprep.mubr.bf16.mxu0 0
    %461 = vmatmul.mubr.bf16.gmra.mrb[0].mxu0 %v426
    %v462 = vpop.f32.mrb[0].mxu0
    %v463 = vadd.f32 0.0, %v462
    %v464 = vpop.f32.mrb[0].mxu0
    %v465 = vadd.f32 0.0, %v464
    %v466 = vpop.f32.mrb[0].mxu0
    %v467 = vadd.f32 0.0, %v466
    %v468 = vpop.f32.mrb[0].mxu0
    %v469 = vadd.f32 0.0, %v468
    %470 = vdwg.mxu0
    %v471 = vpack.c.bf16 %v467, %v463
    %v472 = vpack.c.bf16 %v469, %v465
    %v475 = vunpack.c.l.b16 %v471
    %v476 = vunpack.c.l.b16 %v472
    %v477 = vunpack.c.h.b16 %v471
    %v478 = vunpack.c.h.b16 %v472
    %v479 = vpack.i.b16 %v476, %v475
    %v481 = vpack.i.b16 %v478, %v477
    %s483 = scalar_lea.vmem %s4, 8
    %v484 = vld [vmem:[%s483] sm:$0xf]
    %v485 = vld [vmem:[%s483 + $0x4] sm:$0xf]
    %v488 = vunpack.c.l.b16 %v484
    %v489 = vunpack.c.l.b16 %v485
    %v490 = vpack.c.b16 %v489, %v488
    %v492 = vsel %vm424, %v490, 0
    %494 = vmatprep.subr.bf16.mxu0 %v409
    %495 = vmatpush1.bf16.msra.mxu0 %v408
    %496 = vmatprep.subr.bf16.mxu0 %v411
    %497 = vmatpush1.bf16.msra.mxu0 %v410
    %498 = vmatprep.subr.bf16.mxu0 %v413
    %499 = vmatpush1.bf16.msra.mxu0 %v412
    %500 = vmatprep.subr.bf16.mxu0 %v415
    %501 = vmatpush1.bf16.msra.mxu0 %v414
    %502 = vmatprep.subr.bf16.mxu0 0
    %503 = vmatpush1.bf16.msra.mxu0 0
    %504 = vmatprep.subr.bf16.mxu0 0
    %505 = vmatpush1.bf16.msra.mxu0 0
    %506 = vmatprep.subr.bf16.mxu0 0
    %507 = vmatpush1.bf16.msra.mxu0 0
    %508 = vmatprep.subr.bf16.mxu0 0
    %509 = vmatpush1.bf16.msra.mxu0 0
    %510 = vmatprep.subr.bf16.mxu0 0
    %511 = vmatpush1.bf16.msra.mxu0 0
    %512 = vmatprep.subr.bf16.mxu0 0
    %513 = vmatpush1.bf16.msra.mxu0 0
    %514 = vmatprep.subr.bf16.mxu0 0
    %515 = vmatpush1.bf16.msra.mxu0 0
    %516 = vmatprep.subr.bf16.mxu0 0
    %517 = vmatpush1.bf16.msra.mxu0 0
    %518 = vmatprep.subr.bf16.mxu0 0
    %519 = vmatpush1.bf16.msra.mxu0 0
    %520 = vmatprep.subr.bf16.mxu0 0
    %521 = vmatpush1.bf16.msra.mxu0 0
    %522 = vmatprep.subr.bf16.mxu0 0
    %523 = vmatpush1.bf16.msra.mxu0 0
    %524 = vmatprep.subr.bf16.mxu0 0
    %525 = vmatpush1.bf16.msra.mxu0 0
    %526 = vmatprep.mubr.bf16.mxu0 0
    %527 = vmatmul.mubr.bf16.gmra.mrb[0].mxu0 %v492
    %v528 = vpop.f32.mrb[0].mxu0
    %v529 = vadd.f32 0.0, %v528
    %v530 = vpop.f32.mrb[0].mxu0
    %v531 = vadd.f32 0.0, %v530
    %v532 = vpop.f32.mrb[0].mxu0
    %v533 = vadd.f32 0.0, %v532
    %v534 = vpop.f32.mrb[0].mxu0
    %v535 = vadd.f32 0.0, %v534
    %536 = vdwg.mxu0
    %v537 = vpack.c.bf16 %v533, %v529
    %v538 = vpack.c.bf16 %v535, %v531
    %v541 = vunpack.c.l.b16 %v537
    %v542 = vunpack.c.l.b16 %v538
    %v543 = vunpack.c.h.b16 %v537
    %v544 = vunpack.c.h.b16 %v538
    %v545 = vpack.i.b16 %v542, %v541
    %v547 = vpack.i.b16 %v544, %v543
    %s549 = scalar_lea.vmem %s4, 16
    %v550 = vld [vmem:[%s549] sm:$0xf]
    %v551 = vld [vmem:[%s549 + $0x4] sm:$0xf]
    %v554 = vunpack.c.l.b16 %v550
    %v555 = vunpack.c.l.b16 %v551
    %v556 = vpack.c.b16 %v555, %v554
    %v558 = vsel %vm424, %v556, 0
    %560 = vmatprep.subr.bf16.mxu0 %v409
    %561 = vmatpush1.bf16.msra.mxu0 %v408
    %562 = vmatprep.subr.bf16.mxu0 %v411
    %563 = vmatpush1.bf16.msra.mxu0 %v410
    %564 = vmatprep.subr.bf16.mxu0 %v413
    %565 = vmatpush1.bf16.msra.mxu0 %v412
    %566 = vmatprep.subr.bf16.mxu0 %v415
    %567 = vmatpush1.bf16.msra.mxu0 %v414
    %568 = vmatprep.subr.bf16.mxu0 0
    %569 = vmatpush1.bf16.msra.mxu0 0
    %570 = vmatprep.subr.bf16.mxu0 0
    %571 = vmatpush1.bf16.msra.mxu0 0
    %572 = vmatprep.subr.bf16.mxu0 0
    %573 = vmatpush1.bf16.msra.mxu0 0
    %574 = vmatprep.subr.bf16.mxu0 0
    %575 = vmatpush1.bf16.msra.mxu0 0
    %576 = vmatprep.subr.bf16.mxu0 0
    %577 = vmatpush1.bf16.msra.mxu0 0
    %578 = vmatprep.subr.bf16.mxu0 0
    %579 = vmatpush1.bf16.msra.mxu0 0
    %580 = vmatprep.subr.bf16.mxu0 0
    %581 = vmatpush1.bf16.msra.mxu0 0
    %582 = vmatprep.subr.bf16.mxu0 0
    %583 = vmatpush1.bf16.msra.mxu0 0
    %584 = vmatprep.subr.bf16.mxu0 0
    %585 = vmatpush1.bf16.msra.mxu0 0
    %586 = vmatprep.subr.bf16.mxu0 0
    %587 = vmatpush1.bf16.msra.mxu0 0
    %588 = vmatprep.subr.bf16.mxu0 0
    %589 = vmatpush1.bf16.msra.mxu0 0
    %590 = vmatprep.subr.bf16.mxu0 0
    %591 = vmatpush1.bf16.msra.mxu0 0
    %592 = vmatprep.mubr.bf16.mxu0 0
    %593 = vmatmul.mubr.bf16.gmra.mrb[0].mxu0 %v558
    %v594 = vpop.f32.mrb[0].mxu0
    %v595 = vadd.f32 0.0, %v594
    %v596 = vpop.f32.mrb[0].mxu0
    %v597 = vadd.f32 0.0, %v596
    %v598 = vpop.f32.mrb[0].mxu0
    %v599 = vadd.f32 0.0, %v598
    %v600 = vpop.f32.mrb[0].mxu0
    %v601 = vadd.f32 0.0, %v600
    %602 = vdwg.mxu0
    %v603 = vpack.c.bf16 %v599, %v595
    %v604 = vpack.c.bf16 %v601, %v597
    %v607 = vunpack.c.l.b16 %v603
    %v608 = vunpack.c.l.b16 %v604
    %v609 = vunpack.c.h.b16 %v603
    %v610 = vunpack.c.h.b16 %v604
    %v611 = vpack.i.b16 %v608, %v607
    %v613 = vpack.i.b16 %v610, %v609
    %s615 = scalar_lea.vmem %s4, 24
    %v616 = vld [vmem:[%s615] sm:$0xf]
    %v617 = vld [vmem:[%s615 + $0x4] sm:$0xf]
    %v620 = vunpack.c.l.b16 %v616
    %v621 = vunpack.c.l.b16 %v617
    %v622 = vpack.c.b16 %v621, %v620
    %v624 = vsel %vm424, %v622, 0
    %626 = vmatprep.subr.bf16.mxu0 %v409
    %627 = vmatpush1.bf16.msra.mxu0 %v408
    %628 = vmatprep.subr.bf16.mxu0 %v411
    %629 = vmatpush1.bf16.msra.mxu0 %v410
    %630 = vmatprep.subr.bf16.mxu0 %v413
    %631 = vmatpush1.bf16.msra.mxu0 %v412
    %632 = vmatprep.subr.bf16.mxu0 %v415
    %633 = vmatpush1.bf16.msra.mxu0 %v414
    %634 = vmatprep.subr.bf16.mxu0 0
    %635 = vmatpush1.bf16.msra.mxu0 0
    %636 = vmatprep.subr.bf16.mxu0 0
    %637 = vmatpush1.bf16.msra.mxu0 0
    %638 = vmatprep.subr.bf16.mxu0 0
    %639 = vmatpush1.bf16.msra.mxu0 0
    %640 = vmatprep.subr.bf16.mxu0 0
    %641 = vmatpush1.bf16.msra.mxu0 0
    %642 = vmatprep.subr.bf16.mxu0 0
    %643 = vmatpush1.bf16.msra.mxu0 0
    %644 = vmatprep.subr.bf16.mxu0 0
    %645 = vmatpush1.bf16.msra.mxu0 0
    %646 = vmatprep.subr.bf16.mxu0 0
    %647 = vmatpush1.bf16.msra.mxu0 0
    %648 = vmatprep.subr.bf16.mxu0 0
    %649 = vmatpush1.bf16.msra.mxu0 0
    %650 = vmatprep.subr.bf16.mxu0 0
    %651 = vmatpush1.bf16.msra.mxu0 0
    %652 = vmatprep.subr.bf16.mxu0 0
    %653 = vmatpush1.bf16.msra.mxu0 0
    %654 = vmatprep.subr.bf16.mxu0 0
    %655 = vmatpush1.bf16.msra.mxu0 0
    %656 = vmatprep.subr.bf16.mxu0 0
    %657 = vmatpush1.bf16.msra.mxu0 0
    %658 = vmatprep.mubr.bf16.mxu0 0
    %659 = vmatmul.mubr.bf16.gmra.mrb[0].mxu0 %v624
    %v660 = vpop.f32.mrb[0].mxu0
    %v661 = vadd.f32 0.0, %v660
    %v662 = vpop.f32.mrb[0].mxu0
    %v663 = vadd.f32 0.0, %v662
    %v664 = vpop.f32.mrb[0].mxu0
    %v665 = vadd.f32 0.0, %v664
    %v666 = vpop.f32.mrb[0].mxu0
    %v667 = vadd.f32 0.0, %v666
    %668 = vdwg.mxu0
    %v669 = vpack.c.bf16 %v665, %v661
    %v670 = vpack.c.bf16 %v667, %v663
    %v673 = vunpack.c.l.b16 %v669
    %v674 = vunpack.c.l.b16 %v670
    %v675 = vunpack.c.h.b16 %v669
    %v676 = vunpack.c.h.b16 %v670
    %v677 = vpack.i.b16 %v674, %v673
    %v679 = vpack.i.b16 %v676, %v675
    %s681 = scalar_lea.vmem %s4, 32
    %v682 = vld [vmem:[%s681] sm:$0xf]
    %v683 = vld [vmem:[%s681 + $0x4] sm:$0xf]
    %v686 = vunpack.c.l.b16 %v682
    %v687 = vunpack.c.l.b16 %v683
    %v688 = vpack.c.b16 %v687, %v686
    %v690 = vsel %vm424, %v688, 0
    %692 = vmatprep.subr.bf16.mxu0 %v409
    %693 = vmatpush1.bf16.msra.mxu0 %v408
    %694 = vmatprep.subr.bf16.mxu0 %v411
    %695 = vmatpush1.bf16.msra.mxu0 %v410
    %696 = vmatprep.subr.bf16.mxu0 %v413
    %697 = vmatpush1.bf16.msra.mxu0 %v412
    %698 = vmatprep.subr.bf16.mxu0 %v415
    %699 = vmatpush1.bf16.msra.mxu0 %v414
    %700 = vmatprep.subr.bf16.mxu0 0
    %701 = vmatpush1.bf16.msra.mxu0 0
    %702 = vmatprep.subr.bf16.mxu0 0
    %703 = vmatpush1.bf16.msra.mxu0 0
    %704 = vmatprep.subr.bf16.mxu0 0
    %705 = vmatpush1.bf16.msra.mxu0 0
    %706 = vmatprep.subr.bf16.mxu0 0
    %707 = vmatpush1.bf16.msra.mxu0 0
    %708 = vmatprep.subr.bf16.mxu0 0
    %709 = vmatpush1.bf16.msra.mxu0 0
    %710 = vmatprep.subr.bf16.mxu0 0
    %711 = vmatpush1.bf16.msra.mxu0 0
    %712 = vmatprep.subr.bf16.mxu0 0
    %713 = vmatpush1.bf16.msra.mxu0 0
    %714 = vmatprep.subr.bf16.mxu0 0
    %715 = vmatpush1.bf16.msra.mxu0 0
    %716 = vmatprep.subr.bf16.mxu0 0
    %717 = vmatpush1.bf16.msra.mxu0 0
    %718 = vmatprep.subr.bf16.mxu0 0
    %719 = vmatpush1.bf16.msra.mxu0 0
    %720 = vmatprep.subr.bf16.mxu0 0
    %721 = vmatpush1.bf16.msra.mxu0 0
    %722 = vmatprep.subr.bf16.mxu0 0
    %723 = vmatpush1.bf16.msra.mxu0 0
    %724 = vmatprep.mubr.bf16.mxu0 0
    %725 = vmatmul.mubr.bf16.gmra.mrb[0].mxu0 %v690
    %v726 = vpop.f32.mrb[0].mxu0
    %v727 = vadd.f32 0.0, %v726
    %v728 = vpop.f32.mrb[0].mxu0
    %v729 = vadd.f32 0.0, %v728
    %v730 = vpop.f32.mrb[0].mxu0
    %v731 = vadd.f32 0.0, %v730
    %v732 = vpop.f32.mrb[0].mxu0
    %v733 = vadd.f32 0.0, %v732
    %734 = vdwg.mxu0
    %v735 = vpack.c.bf16 %v731, %v727
    %v736 = vpack.c.bf16 %v733, %v729
    %v739 = vunpack.c.l.b16 %v735
    %v740 = vunpack.c.l.b16 %v736
    %v741 = vunpack.c.h.b16 %v735
    %v742 = vunpack.c.h.b16 %v736
    %v743 = vpack.i.b16 %v740, %v739
    %v745 = vpack.i.b16 %v742, %v741
    %s747 = scalar_lea.vmem %s4, 40
    %v748 = vld [vmem:[%s747] sm:$0xf]
    %v749 = vld [vmem:[%s747 + $0x4] sm:$0xf]
    %v752 = vunpack.c.l.b16 %v748
    %v753 = vunpack.c.l.b16 %v749
    %v754 = vpack.c.b16 %v753, %v752
    %v756 = vsel %vm424, %v754, 0
    %758 = vmatprep.subr.bf16.mxu0 %v409
    %759 = vmatpush1.bf16.msra.mxu0 %v408
    %760 = vmatprep.subr.bf16.mxu0 %v411
    %761 = vmatpush1.bf16.msra.mxu0 %v410
    %762 = vmatprep.subr.bf16.mxu0 %v413
    %763 = vmatpush1.bf16.msra.mxu0 %v412
    %764 = vmatprep.subr.bf16.mxu0 %v415
    %765 = vmatpush1.bf16.msra.mxu0 %v414
    %766 = vmatprep.subr.bf16.mxu0 0
    %767 = vmatpush1.bf16.msra.mxu0 0
    %768 = vmatprep.subr.bf16.mxu0 0
    %769 = vmatpush1.bf16.msra.mxu0 0
    %770 = vmatprep.subr.bf16.mxu0 0
    %771 = vmatpush1.bf16.msra.mxu0 0
    %772 = vmatprep.subr.bf16.mxu0 0
    %773 = vmatpush1.bf16.msra.mxu0 0
    %774 = vmatprep.subr.bf16.mxu0 0
    %775 = vmatpush1.bf16.msra.mxu0 0
    %776 = vmatprep.subr.bf16.mxu0 0
    %777 = vmatpush1.bf16.msra.mxu0 0
    %778 = vmatprep.subr.bf16.mxu0 0
    %779 = vmatpush1.bf16.msra.mxu0 0
    %780 = vmatprep.subr.bf16.mxu0 0
    %781 = vmatpush1.bf16.msra.mxu0 0
    %782 = vmatprep.subr.bf16.mxu0 0
    %783 = vmatpush1.bf16.msra.mxu0 0
    %784 = vmatprep.subr.bf16.mxu0 0
    %785 = vmatpush1.bf16.msra.mxu0 0
    %786 = vmatprep.subr.bf16.mxu0 0
    %787 = vmatpush1.bf16.msra.mxu0 0
    %788 = vmatprep.subr.bf16.mxu0 0
    %789 = vmatpush1.bf16.msra.mxu0 0
    %790 = vmatprep.mubr.bf16.mxu0 0
    %791 = vmatmul.mubr.bf16.gmra.mrb[0].mxu0 %v756
    %v792 = vpop.f32.mrb[0].mxu0
    %v793 = vadd.f32 0.0, %v792
    %v794 = vpop.f32.mrb[0].mxu0
    %v795 = vadd.f32 0.0, %v794
    %v796 = vpop.f32.mrb[0].mxu0
    %v797 = vadd.f32 0.0, %v796
    %v798 = vpop.f32.mrb[0].mxu0
    %v799 = vadd.f32 0.0, %v798
    %800 = vdwg.mxu0
    %v801 = vpack.c.bf16 %v797, %v793
    %v802 = vpack.c.bf16 %v799, %v795
    %v805 = vunpack.c.l.b16 %v801
    %v806 = vunpack.c.l.b16 %v802
    %v807 = vunpack.c.h.b16 %v801
    %v808 = vunpack.c.h.b16 %v802
    %v809 = vpack.i.b16 %v806, %v805
    %v811 = vpack.i.b16 %v808, %v807
    %s813 = scalar_lea.vmem %s4, 48
    %v814 = vld [vmem:[%s813] sm:$0xf]
    %v815 = vld [vmem:[%s813 + $0x4] sm:$0xf]
    %v818 = vunpack.c.l.b16 %v814
    %v819 = vunpack.c.l.b16 %v815
    %v820 = vpack.c.b16 %v819, %v818
    %v822 = vsel %vm424, %v820, 0
    %824 = vmatprep.subr.bf16.mxu0 %v409
    %825 = vmatpush1.bf16.msra.mxu0 %v408
    %826 = vmatprep.subr.bf16.mxu0 %v411
    %827 = vmatpush1.bf16.msra.mxu0 %v410
    %828 = vmatprep.subr.bf16.mxu0 %v413
    %829 = vmatpush1.bf16.msra.mxu0 %v412
    %830 = vmatprep.subr.bf16.mxu0 %v415
    %831 = vmatpush1.bf16.msra.mxu0 %v414
    %832 = vmatprep.subr.bf16.mxu0 0
    %833 = vmatpush1.bf16.msra.mxu0 0
    %834 = vmatprep.subr.bf16.mxu0 0
    %835 = vmatpush1.bf16.msra.mxu0 0
    %836 = vmatprep.subr.bf16.mxu0 0
    %837 = vmatpush1.bf16.msra.mxu0 0
    %838 = vmatprep.subr.bf16.mxu0 0
    %839 = vmatpush1.bf16.msra.mxu0 0
    %840 = vmatprep.subr.bf16.mxu0 0
    %841 = vmatpush1.bf16.msra.mxu0 0
    %842 = vmatprep.subr.bf16.mxu0 0
    %843 = vmatpush1.bf16.msra.mxu0 0
    %844 = vmatprep.subr.bf16.mxu0 0
    %845 = vmatpush1.bf16.msra.mxu0 0
    %846 = vmatprep.subr.bf16.mxu0 0
    %847 = vmatpush1.bf16.msra.mxu0 0
    %848 = vmatprep.subr.bf16.mxu0 0
    %849 = vmatpush1.bf16.msra.mxu0 0
    %850 = vmatprep.subr.bf16.mxu0 0
    %851 = vmatpush1.bf16.msra.mxu0 0
    %852 = vmatprep.subr.bf16.mxu0 0
    %853 = vmatpush1.bf16.msra.mxu0 0
    %854 = vmatprep.subr.bf16.mxu0 0
    %855 = vmatpush1.bf16.msra.mxu0 0
    %856 = vmatprep.mubr.bf16.mxu0 0
    %857 = vmatmul.mubr.bf16.gmra.mrb[0].mxu0 %v822
    %v858 = vpop.f32.mrb[0].mxu0
    %v859 = vadd.f32 0.0, %v858
    %v860 = vpop.f32.mrb[0].mxu0
    %v861 = vadd.f32 0.0, %v860
    %v862 = vpop.f32.mrb[0].mxu0
    %v863 = vadd.f32 0.0, %v862
    %v864 = vpop.f32.mrb[0].mxu0
    %v865 = vadd.f32 0.0, %v864
    %866 = vdwg.mxu0
    %v867 = vpack.c.bf16 %v863, %v859
    %v868 = vpack.c.bf16 %v865, %v861
    %v871 = vunpack.c.l.b16 %v867
    %v872 = vunpack.c.l.b16 %v868
    %v873 = vunpack.c.h.b16 %v867
    %v874 = vunpack.c.h.b16 %v868
    %v875 = vpack.i.b16 %v872, %v871
    %v877 = vpack.i.b16 %v874, %v873
    %s879 = scalar_lea.vmem %s4, 56
    %v880 = vld [vmem:[%s879] sm:$0xf]
    %v881 = vld [vmem:[%s879 + $0x4] sm:$0xf]
    %v884 = vunpack.c.l.b16 %v880
    %v885 = vunpack.c.l.b16 %v881
    %v886 = vpack.c.b16 %v885, %v884
    %v888 = vsel %vm424, %v886, 0
    %890 = vmatprep.subr.bf16.mxu0 %v409
    %891 = vmatpush1.bf16.msra.mxu0 %v408
    %892 = vmatprep.subr.bf16.mxu0 %v411
    %893 = vmatpush1.bf16.msra.mxu0 %v410
    %894 = vmatprep.subr.bf16.mxu0 %v413
    %895 = vmatpush1.bf16.msra.mxu0 %v412
    %896 = vmatprep.subr.bf16.mxu0 %v415
    %897 = vmatpush1.bf16.msra.mxu0 %v414
    %898 = vmatprep.subr.bf16.mxu0 0
    %899 = vmatpush1.bf16.msra.mxu0 0
    %900 = vmatprep.subr.bf16.mxu0 0
    %901 = vmatpush1.bf16.msra.mxu0 0
    %902 = vmatprep.subr.bf16.mxu0 0
    %903 = vmatpush1.bf16.msra.mxu0 0
    %904 = vmatprep.subr.bf16.mxu0 0
    %905 = vmatpush1.bf16.msra.mxu0 0
    %906 = vmatprep.subr.bf16.mxu0 0
    %907 = vmatpush1.bf16.msra.mxu0 0
    %908 = vmatprep.subr.bf16.mxu0 0
    %909 = vmatpush1.bf16.msra.mxu0 0
    %910 = vmatprep.subr.bf16.mxu0 0
    %911 = vmatpush1.bf16.msra.mxu0 0
    %912 = vmatprep.subr.bf16.mxu0 0
    %913 = vmatpush1.bf16.msra.mxu0 0
    %914 = vmatprep.subr.bf16.mxu0 0
    %915 = vmatpush1.bf16.msra.mxu0 0
    %916 = vmatprep.subr.bf16.mxu0 0
    %917 = vmatpush1.bf16.msra.mxu0 0
    %918 = vmatprep.subr.bf16.mxu0 0
    %919 = vmatpush1.bf16.msra.mxu0 0
    %920 = vmatprep.subr.bf16.mxu0 0
    %921 = vmatpush1.bf16.msra.mxu0 0
    %922 = vmatprep.mubr.bf16.mxu0 0
    %923 = vmatmul.mubr.bf16.gmra.mrb[0].mxu0 %v888
    %v924 = vpop.f32.mrb[0].mxu0
    %v925 = vadd.f32 0.0, %v924
    %v926 = vpop.f32.mrb[0].mxu0
    %v927 = vadd.f32 0.0, %v926
    %v928 = vpop.f32.mrb[0].mxu0
    %v929 = vadd.f32 0.0, %v928
    %v930 = vpop.f32.mrb[0].mxu0
    %v931 = vadd.f32 0.0, %v930
    %932 = vdwg.mxu0
    %v933 = vpack.c.bf16 %v929, %v925
    %v934 = vpack.c.bf16 %v931, %v927
    %v937 = vunpack.c.l.b16 %v933
    %v938 = vunpack.c.l.b16 %v934
    %v939 = vunpack.c.h.b16 %v933
    %v940 = vunpack.c.h.b16 %v934
    %v941 = vpack.i.b16 %v938, %v937
    %v943 = vpack.i.b16 %v940, %v939
    %s945 = scalar_lea.vmem %s4, 64
    %v946 = vld [vmem:[%s945] sm:$0xf]
    %v947 = vld [vmem:[%s945 + $0x4] sm:$0xf]
    %v950 = vunpack.c.l.b16 %v946
    %v951 = vunpack.c.l.b16 %v947
    %v952 = vpack.c.b16 %v951, %v950
    %v954 = vsel %vm424, %v952, 0
    %956 = vmatprep.subr.bf16.mxu0 %v409
    %957 = vmatpush1.bf16.msra.mxu0 %v408
    %958 = vmatprep.subr.bf16.mxu0 %v411
    %959 = vmatpush1.bf16.msra.mxu0 %v410
    %960 = vmatprep.subr.bf16.mxu0 %v413
    %961 = vmatpush1.bf16.msra.mxu0 %v412
    %962 = vmatprep.subr.bf16.mxu0 %v415
    %963 = vmatpush1.bf16.msra.mxu0 %v414
    %964 = vmatprep.subr.bf16.mxu0 0
    %965 = vmatpush1.bf16.msra.mxu0 0
    %966 = vmatprep.subr.bf16.mxu0 0
    %967 = vmatpush1.bf16.msra.mxu0 0
    %968 = vmatprep.subr.bf16.mxu0 0
    %969 = vmatpush1.bf16.msra.mxu0 0
    %970 = vmatprep.subr.bf16.mxu0 0
    %971 = vmatpush1.bf16.msra.mxu0 0
    %972 = vmatprep.subr.bf16.mxu0 0
    %973 = vmatpush1.bf16.msra.mxu0 0
    %974 = vmatprep.subr.bf16.mxu0 0
    %975 = vmatpush1.bf16.msra.mxu0 0
    %976 = vmatprep.subr.bf16.mxu0 0
    %977 = vmatpush1.bf16.msra.mxu0 0
    %978 = vmatprep.subr.bf16.mxu0 0
    %979 = vmatpush1.bf16.msra.mxu0 0
    %980 = vmatprep.subr.bf16.mxu0 0
    %981 = vmatpush1.bf16.msra.mxu0 0
    %982 = vmatprep.subr.bf16.mxu0 0
    %983 = vmatpush1.bf16.msra.mxu0 0
    %984 = vmatprep.subr.bf16.mxu0 0
    %985 = vmatpush1.bf16.msra.mxu0 0
    %986 = vmatprep.subr.bf16.mxu0 0
    %987 = vmatpush1.bf16.msra.mxu0 0
    %988 = vmatprep.mubr.bf16.mxu0 0
    %989 = vmatmul.mubr.bf16.gmra.mrb[0].mxu0 %v954
    %v990 = vpop.f32.mrb[0].mxu0
    %v991 = vadd.f32 0.0, %v990
    %v992 = vpop.f32.mrb[0].mxu0
    %v993 = vadd.f32 0.0, %v992
    %v994 = vpop.f32.mrb[0].mxu0
    %v995 = vadd.f32 0.0, %v994
    %v996 = vpop.f32.mrb[0].mxu0
    %v997 = vadd.f32 0.0, %v996
    %998 = vdwg.mxu0
    %v999 = vpack.c.bf16 %v995, %v991
    %v1000 = vpack.c.bf16 %v997, %v993
    %v1003 = vunpack.c.l.b16 %v999
    %v1004 = vunpack.c.l.b16 %v1000
    %v1005 = vunpack.c.h.b16 %v999
    %v1006 = vunpack.c.h.b16 %v1000
    %v1007 = vpack.i.b16 %v1004, %v1003
    %v1009 = vpack.i.b16 %v1006, %v1005
    %v1011 = vld [vmem:[%s5] sm:$0xff]
    %v1012 = vld [vmem:[%s5 + $0x8] sm:$0xff]
    %v1013 = vld [vmem:[%s5 + $0x10] sm:$0xff]
    %v1014 = vld [vmem:[%s5 + $0x18] sm:$0xff]
    %v1015 = vld [vmem:[%s5 + $0x20] sm:$0xff]
    %v1016 = vld [vmem:[%s5 + $0x28] sm:$0xff]
    %v1017 = vld [vmem:[%s5 + $0x30] sm:$0xff]
    %v1018 = vld [vmem:[%s5 + $0x38] sm:$0xff]
    %v1019 = vld [vmem:[%s5 + $0x40] sm:$0xff]
    %v1020 = vld [vmem:[%s5 + $0x48] sm:$0xff]
    %v1021 = vld [vmem:[%s5 + $0x50] sm:$0xff]
    %v1022 = vld [vmem:[%s5 + $0x58] sm:$0xff]
    %v1023 = vld [vmem:[%s5 + $0x60] sm:$0xff]
    %v1024 = vld [vmem:[%s5 + $0x68] sm:$0xff]
    %v1025 = vld [vmem:[%s5 + $0x70] sm:$0xff]
    %v1026 = vld [vmem:[%s5 + $0x78] sm:$0xff]
    %v1027 = vld [vmem:[%s5 + $0x80] sm:$0xff]
    %v1028 = vld [vmem:[%s5 + $0x88] sm:$0xff]
    %v1029 = vld [vmem:[%s5 + $0x90] sm:$0xff]
    %v1030 = vld [vmem:[%s5 + $0x98] sm:$0xff]
    %v1031 = vld [vmem:[%s5 + $0xa0] sm:$0xff]
    %v1032 = vld [vmem:[%s5 + $0xa8] sm:$0xff]
    %v1033 = vld [vmem:[%s5 + $0xb0] sm:$0xff]
    %v1034 = vld [vmem:[%s5 + $0xb8] sm:$0xff]
    %v1035 = vld [vmem:[%s5 + $0xc0] sm:$0xff]
    %v1036 = vld [vmem:[%s5 + $0xc8] sm:$0xff]
    %v1037 = vld [vmem:[%s5 + $0xd0] sm:$0xff]
    %v1038 = vld [vmem:[%s5 + $0xd8] sm:$0xff]
    %v1039 = vld [vmem:[%s5 + $0xe0] sm:$0xff]
    %v1040 = vld [vmem:[%s5 + $0xe8] sm:$0xff]
    %v1041 = vld [vmem:[%s5 + $0xf0] sm:$0xff]
    %v1042 = vld [vmem:[%s5 + $0xf8] sm:$0xff]
    %v1043 = vld [vmem:[%s5 + $0x100] sm:$0xff]
    %v1044 = vld [vmem:[%s5 + $0x108] sm:$0xff]
    %v1045 = vld [vmem:[%s5 + $0x110] sm:$0xff]
    %v1046 = vld [vmem:[%s5 + $0x118] sm:$0xff]
    %v1047 = vld [vmem:[%s5 + $0x120] sm:$0xff]
    %v1048 = vld [vmem:[%s5 + $0x128] sm:$0xff]
    %v1049 = vld [vmem:[%s5 + $0x130] sm:$0xff]
    %v1050 = vld [vmem:[%s5 + $0x138] sm:$0xff]
    %v1051 = vld [vmem:[%s5 + $0x140] sm:$0xff]
    %v1052 = vld [vmem:[%s5 + $0x148] sm:$0xff]
    %v1053 = vld [vmem:[%s5 + $0x150] sm:$0xff]
    %v1054 = vld [vmem:[%s5 + $0x158] sm:$0xff]
    %v1055 = vld [vmem:[%s5 + $0x160] sm:$0xff]
    %v1056 = vld [vmem:[%s5 + $0x168] sm:$0xff]
    %v1057 = vld [vmem:[%s5 + $0x170] sm:$0xff]
    %v1058 = vld [vmem:[%s5 + $0x178] sm:$0xff]
    %v1059 = vld [vmem:[%s5 + $0x180] sm:$0xff]
    %v1060 = vld [vmem:[%s5 + $0x188] sm:$0xff]
    %v1061 = vld [vmem:[%s5 + $0x190] sm:$0xff]
    %v1062 = vld [vmem:[%s5 + $0x198] sm:$0xff]
    %v1063 = vld [vmem:[%s5 + $0x1a0] sm:$0xff]
    %v1064 = vld [vmem:[%s5 + $0x1a8] sm:$0xff]
    %v1065 = vld [vmem:[%s5 + $0x1b0] sm:$0xff]
    %v1066 = vld [vmem:[%s5 + $0x1b8] sm:$0xff]
    %v1067 = vld [vmem:[%s5 + $0x1c0] sm:$0xff]
    %v1068 = vld [vmem:[%s5 + $0x1c8] sm:$0xff]
    %v1069 = vld [vmem:[%s5 + $0x1d0] sm:$0xff]
    %v1070 = vld [vmem:[%s5 + $0x1d8] sm:$0xff]
    %v1071 = vld [vmem:[%s5 + $0x1e0] sm:$0xff]
    %v1072 = vld [vmem:[%s5 + $0x1e8] sm:$0xff]
    %v1073 = vld [vmem:[%s5 + $0x1f0] sm:$0xff]
    %v1074 = vld [vmem:[%s5 + $0x1f8] sm:$0xff]
    %v1075 = vld [vmem:[%s5 + $0x200] sm:$0xff]
    %v1076 = vld [vmem:[%s5 + $0x208] sm:$0xff]
    %v1077 = vld [vmem:[%s5 + $0x210] sm:$0xff]
    %v1078 = vld [vmem:[%s5 + $0x218] sm:$0xff]
    %v1079 = vld [vmem:[%s5 + $0x220] sm:$0xff]
    %v1080 = vld [vmem:[%s5 + $0x228] sm:$0xff]
    %v1081 = vld [vmem:[%s5 + $0x230] sm:$0xff]
    %v1082 = vld [vmem:[%s5 + $0x238] sm:$0xff]
    %v1083 = vld [vmem:[%s5 + $0x240] sm:$0xff]
    %v1084 = vld [vmem:[%s5 + $0x248] sm:$0xff]
    %v1085 = vld [vmem:[%s5 + $0x250] sm:$0xff]
    %v1086 = vld [vmem:[%s5 + $0x258] sm:$0xff]
    %v1087 = vld [vmem:[%s5 + $0x260] sm:$0xff]
    %v1088 = vld [vmem:[%s5 + $0x268] sm:$0xff]
    %v1089 = vld [vmem:[%s5 + $0x270] sm:$0xff]
    %v1090 = vld [vmem:[%s5 + $0x278] sm:$0xff]
    %v1091 = vld [vmem:[%s5 + $0x280] sm:$0xff]
    %v1092 = vld [vmem:[%s5 + $0x288] sm:$0xff]
    %v1093 = vld [vmem:[%s5 + $0x290] sm:$0xff]
    %v1094 = vld [vmem:[%s5 + $0x298] sm:$0xff]
    %v1095 = vld [vmem:[%s5 + $0x2a0] sm:$0xff]
    %v1096 = vld [vmem:[%s5 + $0x2a8] sm:$0xff]
    %v1097 = vld [vmem:[%s5 + $0x2b0] sm:$0xff]
    %v1098 = vld [vmem:[%s5 + $0x2b8] sm:$0xff]
    %v1099 = vld [vmem:[%s5 + $0x2c0] sm:$0xff]
    %v1100 = vld [vmem:[%s5 + $0x2c8] sm:$0xff]
    %v1101 = vld [vmem:[%s5 + $0x2d0] sm:$0xff]
    %v1102 = vld [vmem:[%s5 + $0x2d8] sm:$0xff]
    %v1103 = vld [vmem:[%s5 + $0x2e0] sm:$0xff]
    %v1104 = vld [vmem:[%s5 + $0x2e8] sm:$0xff]
    %v1105 = vld [vmem:[%s5 + $0x2f0] sm:$0xff]
    %v1106 = vld [vmem:[%s5 + $0x2f8] sm:$0xff]
    %v1107 = vld [vmem:[%s5 + $0x300] sm:$0xff]
    %v1108 = vld [vmem:[%s5 + $0x308] sm:$0xff]
    %v1109 = vld [vmem:[%s5 + $0x310] sm:$0xff]
    %v1110 = vld [vmem:[%s5 + $0x318] sm:$0xff]
    %v1111 = vld [vmem:[%s5 + $0x320] sm:$0xff]
    %v1112 = vld [vmem:[%s5 + $0x328] sm:$0xff]
    %v1113 = vld [vmem:[%s5 + $0x330] sm:$0xff]
    %v1114 = vld [vmem:[%s5 + $0x338] sm:$0xff]
    %v1115 = vld [vmem:[%s5 + $0x340] sm:$0xff]
    %v1116 = vld [vmem:[%s5 + $0x348] sm:$0xff]
    %v1117 = vld [vmem:[%s5 + $0x350] sm:$0xff]
    %v1118 = vld [vmem:[%s5 + $0x358] sm:$0xff]
    %v1119 = vld [vmem:[%s5 + $0x360] sm:$0xff]
    %v1120 = vld [vmem:[%s5 + $0x368] sm:$0xff]
    %v1121 = vld [vmem:[%s5 + $0x370] sm:$0xff]
    %v1122 = vld [vmem:[%s5 + $0x378] sm:$0xff]
    %v1123 = vld [vmem:[%s5 + $0x380] sm:$0xff]
    %v1124 = vld [vmem:[%s5 + $0x388] sm:$0xff]
    %v1125 = vld [vmem:[%s5 + $0x390] sm:$0xff]
    %v1126 = vld [vmem:[%s5 + $0x398] sm:$0xff]
    %v1127 = vld [vmem:[%s5 + $0x3a0] sm:$0xff]
    %v1128 = vld [vmem:[%s5 + $0x3a8] sm:$0xff]
    %v1129 = vld [vmem:[%s5 + $0x3b0] sm:$0xff]
    %v1130 = vld [vmem:[%s5 + $0x3b8] sm:$0xff]
    %v1131 = vld [vmem:[%s5 + $0x3c0] sm:$0xff]
    %v1132 = vld [vmem:[%s5 + $0x3c8] sm:$0xff]
    %v1133 = vld [vmem:[%s5 + $0x3d0] sm:$0xff]
    %v1134 = vld [vmem:[%s5 + $0x3d8] sm:$0xff]
    %v1135 = vld [vmem:[%s5 + $0x3e0] sm:$0xff]
    %v1136 = vld [vmem:[%s5 + $0x3e8] sm:$0xff]
    %v1137 = vld [vmem:[%s5 + $0x3f0] sm:$0xff]
    %v1138 = vld [vmem:[%s5 + $0x3f8] sm:$0xff]
    %v1139 = vld [vmem:[%s5 + $0x400] sm:$0xff]
    %v1140 = vld [vmem:[%s5 + $0x408] sm:$0xff]
    %v1141 = vld [vmem:[%s5 + $0x410] sm:$0xff]
    %v1142 = vld [vmem:[%s5 + $0x418] sm:$0xff]
    %v1143 = vld [vmem:[%s5 + $0x420] sm:$0xff]
    %v1144 = vld [vmem:[%s5 + $0x428] sm:$0xff]
    %v1145 = vld [vmem:[%s5 + $0x430] sm:$0xff]
    %v1146 = vld [vmem:[%s5 + $0x438] sm:$0xff]
    %v1147 = vld [vmem:[%s5 + $0x440] sm:$0xff]
    %v1148 = vld [vmem:[%s5 + $0x448] sm:$0xff]
    %v1149 = vld [vmem:[%s5 + $0x450] sm:$0xff]
    %v1150 = vld [vmem:[%s5 + $0x458] sm:$0xff]
    %v1151 = vld [vmem:[%s5 + $0x460] sm:$0xff]
    %v1152 = vld [vmem:[%s5 + $0x468] sm:$0xff]
    %v1153 = vld [vmem:[%s5 + $0x470] sm:$0xff]
    %v1154 = vld [vmem:[%s5 + $0x478] sm:$0xff]
    %v1155 = vld [vmem:[%s6] sm:$0x3]
    %v1157 = vlaneseq
    %v1158 = vshrl.u32 %v1157, 7
    %v1159 = vsub.s32 0, %v1158
    %v1160 = vrot.slane %v1155, %v1159
    %v1161 = vlaneseq
    %v1162 = vshrl.u32 %v1161, 7
    %v1163 = vsub.s32 1, %v1162
    %v1164 = vrot.slane %v1155, %v1163
    %v1311 = vunpack.c.l.b16 %v1011
    %v1312 = vunpack.c.h.b16 %v1011
    %v1313 = vunpack.c.l.b16 %v1012
    %v1314 = vunpack.c.h.b16 %v1012
    %v1315 = vunpack.c.l.b16 %v1013
    %v1316 = vunpack.c.h.b16 %v1013
    %v1317 = vunpack.c.l.b16 %v1014
    %v1318 = vunpack.c.h.b16 %v1014
    %v1319 = vunpack.c.l.b16 %v1015
    %v1320 = vunpack.c.h.b16 %v1015
    %v1321 = vunpack.c.l.b16 %v1016
    %v1322 = vunpack.c.h.b16 %v1016
    %v1323 = vunpack.c.l.b16 %v1017
    %v1324 = vunpack.c.h.b16 %v1017
    %v1325 = vunpack.c.l.b16 %v1018
    %v1326 = vunpack.c.h.b16 %v1018
    %v1327 = vunpack.c.l.b16 %v1019
    %v1328 = vunpack.c.h.b16 %v1019
    %v1329 = vunpack.c.l.b16 %v1020
    %v1330 = vunpack.c.h.b16 %v1020
    %v1331 = vunpack.c.l.b16 %v1021
    %v1332 = vunpack.c.h.b16 %v1021
    %v1333 = vunpack.c.l.b16 %v1022
    %v1334 = vunpack.c.h.b16 %v1022
    %v1335 = vunpack.c.l.b16 %v1023
    %v1336 = vunpack.c.h.b16 %v1023
    %v1337 = vunpack.c.l.b16 %v1024
    %v1338 = vunpack.c.h.b16 %v1024
    %v1339 = vunpack.c.l.b16 %v1025
    %v1340 = vunpack.c.h.b16 %v1025
    %v1341 = vunpack.c.l.b16 %v1026
    %v1342 = vunpack.c.h.b16 %v1026
    %v1343 = vunpack.c.l.b16 %v1027
    %v1344 = vunpack.c.h.b16 %v1027
    %v1345 = vunpack.c.l.b16 %v1028
    %v1346 = vunpack.c.h.b16 %v1028
    %v1347 = vunpack.c.l.b16 %v1029
    %v1348 = vunpack.c.h.b16 %v1029
    %v1349 = vunpack.c.l.b16 %v1030
    %v1350 = vunpack.c.h.b16 %v1030
    %v1351 = vunpack.c.l.b16 %v1031
    %v1352 = vunpack.c.h.b16 %v1031
    %v1353 = vunpack.c.l.b16 %v1032
    %v1354 = vunpack.c.h.b16 %v1032
    %v1355 = vunpack.c.l.b16 %v1033
    %v1356 = vunpack.c.h.b16 %v1033
    %v1357 = vunpack.c.l.b16 %v1034
    %v1358 = vunpack.c.h.b16 %v1034
    %v1359 = vunpack.c.l.b16 %v1035
    %v1360 = vunpack.c.h.b16 %v1035
    %v1361 = vunpack.c.l.b16 %v1036
    %v1362 = vunpack.c.h.b16 %v1036
    %v1363 = vunpack.c.l.b16 %v1037
    %v1364 = vunpack.c.h.b16 %v1037
    %v1365 = vunpack.c.l.b16 %v1038
    %v1366 = vunpack.c.h.b16 %v1038
    %v1367 = vunpack.c.l.b16 %v1039
    %v1368 = vunpack.c.h.b16 %v1039
    %v1369 = vunpack.c.l.b16 %v1040
    %v1370 = vunpack.c.h.b16 %v1040
    %v1371 = vunpack.c.l.b16 %v1041
    %v1372 = vunpack.c.h.b16 %v1041
    %v1373 = vunpack.c.l.b16 %v1042
    %v1374 = vunpack.c.h.b16 %v1042
    %v1375 = vunpack.c.l.b16 %v1043
    %v1376 = vunpack.c.h.b16 %v1043
    %v1377 = vunpack.c.l.b16 %v1044
    %v1378 = vunpack.c.h.b16 %v1044
    %v1379 = vunpack.c.l.b16 %v1045
    %v1380 = vunpack.c.h.b16 %v1045
    %v1381 = vunpack.c.l.b16 %v1046
    %v1382 = vunpack.c.h.b16 %v1046
    %v1383 = vunpack.c.l.b16 %v1047
    %v1384 = vunpack.c.h.b16 %v1047
    %v1385 = vunpack.c.l.b16 %v1048
    %v1386 = vunpack.c.h.b16 %v1048
    %v1387 = vunpack.c.l.b16 %v1049
    %v1388 = vunpack.c.h.b16 %v1049
    %v1389 = vunpack.c.l.b16 %v1050
    %v1390 = vunpack.c.h.b16 %v1050
    %v1391 = vunpack.c.l.b16 %v1051
    %v1392 = vunpack.c.h.b16 %v1051
    %v1393 = vunpack.c.l.b16 %v1052
    %v1394 = vunpack.c.h.b16 %v1052
    %v1395 = vunpack.c.l.b16 %v1053
    %v1396 = vunpack.c.h.b16 %v1053
    %v1397 = vunpack.c.l.b16 %v1054
    %v1398 = vunpack.c.h.b16 %v1054
    %v1399 = vunpack.c.l.b16 %v1055
    %v1400 = vunpack.c.h.b16 %v1055
    %v1401 = vunpack.c.l.b16 %v1056
    %v1402 = vunpack.c.h.b16 %v1056
    %v1403 = vunpack.c.l.b16 %v1057
    %v1404 = vunpack.c.h.b16 %v1057
    %v1405 = vunpack.c.l.b16 %v1058
    %v1406 = vunpack.c.h.b16 %v1058
    %v1407 = vunpack.c.l.b16 %v1059
    %v1408 = vunpack.c.h.b16 %v1059
    %v1409 = vunpack.c.l.b16 %v1060
    %v1410 = vunpack.c.h.b16 %v1060
    %v1411 = vunpack.c.l.b16 %v1061
    %v1412 = vunpack.c.h.b16 %v1061
    %v1413 = vunpack.c.l.b16 %v1062
    %v1414 = vunpack.c.h.b16 %v1062
    %v1415 = vunpack.c.l.b16 %v1063
    %v1416 = vunpack.c.h.b16 %v1063
    %v1417 = vunpack.c.l.b16 %v1064
    %v1418 = vunpack.c.h.b16 %v1064
    %v1419 = vunpack.c.l.b16 %v1065
    %v1420 = vunpack.c.h.b16 %v1065
    %v1421 = vunpack.c.l.b16 %v1066
    %v1422 = vunpack.c.h.b16 %v1066
    %v1423 = vunpack.c.l.b16 %v1067
    %v1424 = vunpack.c.h.b16 %v1067
    %v1425 = vunpack.c.l.b16 %v1068
    %v1426 = vunpack.c.h.b16 %v1068
    %v1427 = vunpack.c.l.b16 %v1069
    %v1428 = vunpack.c.h.b16 %v1069
    %v1429 = vunpack.c.l.b16 %v1070
    %v1430 = vunpack.c.h.b16 %v1070
    %v1431 = vunpack.c.l.b16 %v1071
    %v1432 = vunpack.c.h.b16 %v1071
    %v1433 = vunpack.c.l.b16 %v1072
    %v1434 = vunpack.c.h.b16 %v1072
    %v1435 = vunpack.c.l.b16 %v1073
    %v1436 = vunpack.c.h.b16 %v1073
    %v1437 = vunpack.c.l.b16 %v1074
    %v1438 = vunpack.c.h.b16 %v1074
    %v1439 = vunpack.c.l.b16 %v1075
    %v1440 = vunpack.c.h.b16 %v1075
    %v1441 = vunpack.c.l.b16 %v1076
    %v1442 = vunpack.c.h.b16 %v1076
    %v1443 = vunpack.c.l.b16 %v1077
    %v1444 = vunpack.c.h.b16 %v1077
    %v1445 = vunpack.c.l.b16 %v1078
    %v1446 = vunpack.c.h.b16 %v1078
    %v1447 = vunpack.c.l.b16 %v1079
    %v1448 = vunpack.c.h.b16 %v1079
    %v1449 = vunpack.c.l.b16 %v1080
    %v1450 = vunpack.c.h.b16 %v1080
    %v1451 = vunpack.c.l.b16 %v1081
    %v1452 = vunpack.c.h.b16 %v1081
    %v1453 = vunpack.c.l.b16 %v1082
    %v1454 = vunpack.c.h.b16 %v1082
    %v1455 = vunpack.c.l.b16 %v1083
    %v1456 = vunpack.c.h.b16 %v1083
    %v1457 = vunpack.c.l.b16 %v1084
    %v1458 = vunpack.c.h.b16 %v1084
    %v1459 = vunpack.c.l.b16 %v1085
    %v1460 = vunpack.c.h.b16 %v1085
    %v1461 = vunpack.c.l.b16 %v1086
    %v1462 = vunpack.c.h.b16 %v1086
    %v1463 = vunpack.c.l.b16 %v1087
    %v1464 = vunpack.c.h.b16 %v1087
    %v1465 = vunpack.c.l.b16 %v1088
    %v1466 = vunpack.c.h.b16 %v1088
    %v1467 = vunpack.c.l.b16 %v1089
    %v1468 = vunpack.c.h.b16 %v1089
    %v1469 = vunpack.c.l.b16 %v1090
    %v1470 = vunpack.c.h.b16 %v1090
    %v1471 = vunpack.c.l.b16 %v1091
    %v1472 = vunpack.c.h.b16 %v1091
    %v1473 = vunpack.c.l.b16 %v1092
    %v1474 = vunpack.c.h.b16 %v1092
    %v1475 = vunpack.c.l.b16 %v1093
    %v1476 = vunpack.c.h.b16 %v1093
    %v1477 = vunpack.c.l.b16 %v1094
    %v1478 = vunpack.c.h.b16 %v1094
    %v1479 = vunpack.c.l.b16 %v1095
    %v1480 = vunpack.c.h.b16 %v1095
    %v1481 = vunpack.c.l.b16 %v1096
    %v1482 = vunpack.c.h.b16 %v1096
    %v1483 = vunpack.c.l.b16 %v1097
    %v1484 = vunpack.c.h.b16 %v1097
    %v1485 = vunpack.c.l.b16 %v1098
    %v1486 = vunpack.c.h.b16 %v1098
    %v1487 = vunpack.c.l.b16 %v1099
    %v1488 = vunpack.c.h.b16 %v1099
    %v1489 = vunpack.c.l.b16 %v1100
    %v1490 = vunpack.c.h.b16 %v1100
    %v1491 = vunpack.c.l.b16 %v1101
    %v1492 = vunpack.c.h.b16 %v1101
    %v1493 = vunpack.c.l.b16 %v1102
    %v1494 = vunpack.c.h.b16 %v1102
    %v1495 = vunpack.c.l.b16 %v1103
    %v1496 = vunpack.c.h.b16 %v1103
    %v1497 = vunpack.c.l.b16 %v1104
    %v1498 = vunpack.c.h.b16 %v1104
    %v1499 = vunpack.c.l.b16 %v1105
    %v1500 = vunpack.c.h.b16 %v1105
    %v1501 = vunpack.c.l.b16 %v1106
    %v1502 = vunpack.c.h.b16 %v1106
    %v1503 = vunpack.c.l.b16 %v1107
    %v1504 = vunpack.c.h.b16 %v1107
    %v1505 = vunpack.c.l.b16 %v1108
    %v1506 = vunpack.c.h.b16 %v1108
    %v1507 = vunpack.c.l.b16 %v1109
    %v1508 = vunpack.c.h.b16 %v1109
    %v1509 = vunpack.c.l.b16 %v1110
    %v1510 = vunpack.c.h.b16 %v1110
    %v1511 = vunpack.c.l.b16 %v1111
    %v1512 = vunpack.c.h.b16 %v1111
    %v1513 = vunpack.c.l.b16 %v1112
    %v1514 = vunpack.c.h.b16 %v1112
    %v1515 = vunpack.c.l.b16 %v1113
    %v1516 = vunpack.c.h.b16 %v1113
    %v1517 = vunpack.c.l.b16 %v1114
    %v1518 = vunpack.c.h.b16 %v1114
    %v1519 = vunpack.c.l.b16 %v1115
    %v1520 = vunpack.c.h.b16 %v1115
    %v1521 = vunpack.c.l.b16 %v1116
    %v1522 = vunpack.c.h.b16 %v1116
    %v1523 = vunpack.c.l.b16 %v1117
    %v1524 = vunpack.c.h.b16 %v1117
    %v1525 = vunpack.c.l.b16 %v1118
    %v1526 = vunpack.c.h.b16 %v1118
    %v1527 = vunpack.c.l.b16 %v1119
    %v1528 = vunpack.c.h.b16 %v1119
    %v1529 = vunpack.c.l.b16 %v1120
    %v1530 = vunpack.c.h.b16 %v1120
    %v1531 = vunpack.c.l.b16 %v1121
    %v1532 = vunpack.c.h.b16 %v1121
    %v1533 = vunpack.c.l.b16 %v1122
    %v1534 = vunpack.c.h.b16 %v1122
    %v1535 = vunpack.c.l.b16 %v1123
    %v1536 = vunpack.c.h.b16 %v1123
    %v1537 = vunpack.c.l.b16 %v1124
    %v1538 = vunpack.c.h.b16 %v1124
    %v1539 = vunpack.c.l.b16 %v1125
    %v1540 = vunpack.c.h.b16 %v1125
    %v1541 = vunpack.c.l.b16 %v1126
    %v1542 = vunpack.c.h.b16 %v1126
    %v1543 = vunpack.c.l.b16 %v1127
    %v1544 = vunpack.c.h.b16 %v1127
    %v1545 = vunpack.c.l.b16 %v1128
    %v1546 = vunpack.c.h.b16 %v1128
    %v1547 = vunpack.c.l.b16 %v1129
    %v1548 = vunpack.c.h.b16 %v1129
    %v1549 = vunpack.c.l.b16 %v1130
    %v1550 = vunpack.c.h.b16 %v1130
    %v1551 = vunpack.c.l.b16 %v1131
    %v1552 = vunpack.c.h.b16 %v1131
    %v1553 = vunpack.c.l.b16 %v1132
    %v1554 = vunpack.c.h.b16 %v1132
    %v1555 = vunpack.c.l.b16 %v1133
    %v1556 = vunpack.c.h.b16 %v1133
    %v1557 = vunpack.c.l.b16 %v1134
    %v1558 = vunpack.c.h.b16 %v1134
    %v1559 = vunpack.c.l.b16 %v1135
    %v1560 = vunpack.c.h.b16 %v1135
    %v1561 = vunpack.c.l.b16 %v1136
    %v1562 = vunpack.c.h.b16 %v1136
    %v1563 = vunpack.c.l.b16 %v1137
    %v1564 = vunpack.c.h.b16 %v1137
    %v1565 = vunpack.c.l.b16 %v1138
    %v1566 = vunpack.c.h.b16 %v1138
    %v1567 = vunpack.c.l.b16 %v1139
    %v1568 = vunpack.c.h.b16 %v1139
    %v1569 = vunpack.c.l.b16 %v1140
    %v1570 = vunpack.c.h.b16 %v1140
    %v1571 = vunpack.c.l.b16 %v1141
    %v1572 = vunpack.c.h.b16 %v1141
    %v1573 = vunpack.c.l.b16 %v1142
    %v1574 = vunpack.c.h.b16 %v1142
    %v1575 = vunpack.c.l.b16 %v1143
    %v1576 = vunpack.c.h.b16 %v1143
    %v1577 = vunpack.c.l.b16 %v1144
    %v1578 = vunpack.c.h.b16 %v1144
    %v1579 = vunpack.c.l.b16 %v1145
    %v1580 = vunpack.c.h.b16 %v1145
    %v1581 = vunpack.c.l.b16 %v1146
    %v1582 = vunpack.c.h.b16 %v1146
    %v1583 = vunpack.c.l.b16 %v1147
    %v1584 = vunpack.c.h.b16 %v1147
    %v1585 = vunpack.c.l.b16 %v1148
    %v1586 = vunpack.c.h.b16 %v1148
    %v1587 = vunpack.c.l.b16 %v1149
    %v1588 = vunpack.c.h.b16 %v1149
    %v1589 = vunpack.c.l.b16 %v1150
    %v1590 = vunpack.c.h.b16 %v1150
    %v1591 = vunpack.c.l.b16 %v1151
    %v1592 = vunpack.c.h.b16 %v1151
    %v1593 = vunpack.c.l.b16 %v1152
    %v1594 = vunpack.c.h.b16 %v1152
    %v1595 = vunpack.c.l.b16 %v1153
    %v1596 = vunpack.c.h.b16 %v1153
    %v1597 = vunpack.c.l.b16 %v1154
    %v1598 = vunpack.c.h.b16 %v1154
    %v1599 = vpack.c.b16 %v1313, %v1311
    %v1600 = vpack.c.b16 %v1314, %v1312
    %v1601 = vpack.c.b16 %v1317, %v1315
    %v1602 = vpack.c.b16 %v1318, %v1316
    %v1603 = vpack.c.b16 %v1321, %v1319
    %v1604 = vpack.c.b16 %v1322, %v1320
    %v1605 = vpack.c.b16 %v1325, %v1323
    %v1606 = vpack.c.b16 %v1326, %v1324
    %v1607 = vpack.c.b16 %v1329, %v1327
    %v1608 = vpack.c.b16 %v1330, %v1328
    %v1609 = vpack.c.b16 %v1333, %v1331
    %v1610 = vpack.c.b16 %v1334, %v1332
    %v1611 = vpack.c.b16 %v1337, %v1335
    %v1612 = vpack.c.b16 %v1338, %v1336
    %v1613 = vpack.c.b16 %v1341, %v1339
    %v1614 = vpack.c.b16 %v1342, %v1340
    %v1615 = vpack.c.b16 %v1345, %v1343
    %v1616 = vpack.c.b16 %v1346, %v1344
    %v1617 = vpack.c.b16 %v1349, %v1347
    %v1618 = vpack.c.b16 %v1350, %v1348
    %v1619 = vpack.c.b16 %v1353, %v1351
    %v1620 = vpack.c.b16 %v1354, %v1352
    %v1621 = vpack.c.b16 %v1357, %v1355
    %v1622 = vpack.c.b16 %v1358, %v1356
    %v1623 = vpack.c.b16 %v1361, %v1359
    %v1624 = vpack.c.b16 %v1362, %v1360
    %v1625 = vpack.c.b16 %v1365, %v1363
    %v1626 = vpack.c.b16 %v1366, %v1364
    %v1627 = vpack.c.b16 %v1369, %v1367
    %v1628 = vpack.c.b16 %v1370, %v1368
    %v1629 = vpack.c.b16 %v1373, %v1371
    %v1630 = vpack.c.b16 %v1374, %v1372
    %v1631 = vpack.c.b16 %v1377, %v1375
    %v1632 = vpack.c.b16 %v1378, %v1376
    %v1633 = vpack.c.b16 %v1381, %v1379
    %v1634 = vpack.c.b16 %v1382, %v1380
    %v1635 = vpack.c.b16 %v1385, %v1383
    %v1636 = vpack.c.b16 %v1386, %v1384
    %v1637 = vpack.c.b16 %v1389, %v1387
    %v1638 = vpack.c.b16 %v1390, %v1388
    %v1639 = vpack.c.b16 %v1393, %v1391
    %v1640 = vpack.c.b16 %v1394, %v1392
    %v1641 = vpack.c.b16 %v1397, %v1395
    %v1642 = vpack.c.b16 %v1398, %v1396
    %v1643 = vpack.c.b16 %v1401, %v1399
    %v1644 = vpack.c.b16 %v1402, %v1400
    %v1645 = vpack.c.b16 %v1405, %v1403
    %v1646 = vpack.c.b16 %v1406, %v1404
    %v1647 = vpack.c.b16 %v1409, %v1407
    %v1648 = vpack.c.b16 %v1410, %v1408
    %v1649 = vpack.c.b16 %v1413, %v1411
    %v1650 = vpack.c.b16 %v1414, %v1412
    %v1651 = vpack.c.b16 %v1417, %v1415
    %v1652 = vpack.c.b16 %v1418, %v1416
    %v1653 = vpack.c.b16 %v1421, %v1419
    %v1654 = vpack.c.b16 %v1422, %v1420
    %v1655 = vpack.c.b16 %v1425, %v1423
    %v1656 = vpack.c.b16 %v1426, %v1424
    %v1657 = vpack.c.b16 %v1429, %v1427
    %v1658 = vpack.c.b16 %v1430, %v1428
    %v1659 = vpack.c.b16 %v1433, %v1431
    %v1660 = vpack.c.b16 %v1434, %v1432
    %v1661 = vpack.c.b16 %v1437, %v1435
    %v1662 = vpack.c.b16 %v1438, %v1436
    %v1663 = vpack.c.b16 %v1441, %v1439
    %v1664 = vpack.c.b16 %v1442, %v1440
    %v1665 = vpack.c.b16 %v1445, %v1443
    %v1666 = vpack.c.b16 %v1446, %v1444
    %v1667 = vpack.c.b16 %v1449, %v1447
    %v1668 = vpack.c.b16 %v1450, %v1448
    %v1669 = vpack.c.b16 %v1453, %v1451
    %v1670 = vpack.c.b16 %v1454, %v1452
    %v1671 = vpack.c.b16 %v1457, %v1455
    %v1672 = vpack.c.b16 %v1458, %v1456
    %v1673 = vpack.c.b16 %v1461, %v1459
    %v1674 = vpack.c.b16 %v1462, %v1460
    %v1675 = vpack.c.b16 %v1465, %v1463
    %v1676 = vpack.c.b16 %v1466, %v1464
    %v1677 = vpack.c.b16 %v1469, %v1467
    %v1678 = vpack.c.b16 %v1470, %v1468
    %v1679 = vpack.c.b16 %v1473, %v1471
    %v1680 = vpack.c.b16 %v1474, %v1472
    %v1681 = vpack.c.b16 %v1477, %v1475
    %v1682 = vpack.c.b16 %v1478, %v1476
    %v1683 = vpack.c.b16 %v1481, %v1479
    %v1684 = vpack.c.b16 %v1482, %v1480
    %v1685 = vpack.c.b16 %v1485, %v1483
    %v1686 = vpack.c.b16 %v1486, %v1484
    %v1687 = vpack.c.b16 %v1489, %v1487
    %v1688 = vpack.c.b16 %v1490, %v1488
    %v1689 = vpack.c.b16 %v1493, %v1491
    %v1690 = vpack.c.b16 %v1494, %v1492
    %v1691 = vpack.c.b16 %v1497, %v1495
    %v1692 = vpack.c.b16 %v1498, %v1496
    %v1693 = vpack.c.b16 %v1501, %v1499
    %v1694 = vpack.c.b16 %v1502, %v1500
    %v1695 = vpack.c.b16 %v1505, %v1503
    %v1696 = vpack.c.b16 %v1506, %v1504
    %v1697 = vpack.c.b16 %v1509, %v1507
    %v1698 = vpack.c.b16 %v1510, %v1508
    %v1699 = vpack.c.b16 %v1513, %v1511
    %v1700 = vpack.c.b16 %v1514, %v1512
    %v1701 = vpack.c.b16 %v1517, %v1515
    %v1702 = vpack.c.b16 %v1518, %v1516
    %v1703 = vpack.c.b16 %v1521, %v1519
    %v1704 = vpack.c.b16 %v1522, %v1520
    %v1705 = vpack.c.b16 %v1525, %v1523
    %v1706 = vpack.c.b16 %v1526, %v1524
    %v1707 = vpack.c.b16 %v1529, %v1527
    %v1708 = vpack.c.b16 %v1530, %v1528
    %v1709 = vpack.c.b16 %v1533, %v1531
    %v1710 = vpack.c.b16 %v1534, %v1532
    %v1711 = vpack.c.b16 %v1537, %v1535
    %v1712 = vpack.c.b16 %v1538, %v1536
    %v1713 = vpack.c.b16 %v1541, %v1539
    %v1714 = vpack.c.b16 %v1542, %v1540
    %v1715 = vpack.c.b16 %v1545, %v1543
    %v1716 = vpack.c.b16 %v1546, %v1544
    %v1717 = vpack.c.b16 %v1549, %v1547
    %v1718 = vpack.c.b16 %v1550, %v1548
    %v1719 = vpack.c.b16 %v1553, %v1551
    %v1720 = vpack.c.b16 %v1554, %v1552
    %v1721 = vpack.c.b16 %v1557, %v1555
    %v1722 = vpack.c.b16 %v1558, %v1556
    %v1723 = vpack.c.b16 %v1561, %v1559
    %v1724 = vpack.c.b16 %v1562, %v1560
    %v1725 = vpack.c.b16 %v1565, %v1563
    %v1726 = vpack.c.b16 %v1566, %v1564
    %v1727 = vpack.c.b16 %v1569, %v1567
    %v1728 = vpack.c.b16 %v1570, %v1568
    %v1729 = vpack.c.b16 %v1573, %v1571
    %v1730 = vpack.c.b16 %v1574, %v1572
    %v1731 = vpack.c.b16 %v1577, %v1575
    %v1732 = vpack.c.b16 %v1578, %v1576
    %v1733 = vpack.c.b16 %v1581, %v1579
    %v1734 = vpack.c.b16 %v1582, %v1580
    %v1735 = vpack.c.b16 %v1585, %v1583
    %v1736 = vpack.c.b16 %v1586, %v1584
    %v1737 = vpack.c.b16 %v1589, %v1587
    %v1738 = vpack.c.b16 %v1590, %v1588
    %v1739 = vpack.c.b16 %v1593, %v1591
    %v1740 = vpack.c.b16 %v1594, %v1592
    %v1741 = vpack.c.b16 %v1597, %v1595
    %v1742 = vpack.c.b16 %v1598, %v1596
    %1887 = vmatprep.subr.bf16.mxu0 %v1600
    %1888 = vmatpush1.bf16.msra.mxu0 %v1599
    %1889 = vmatprep.subr.bf16.mxu0 %v1602
    %1890 = vmatpush1.bf16.msra.mxu0 %v1601
    %1891 = vmatprep.subr.bf16.mxu0 %v1604
    %1892 = vmatpush1.bf16.msra.mxu0 %v1603
    %1893 = vmatprep.subr.bf16.mxu0 %v1606
    %1894 = vmatpush1.bf16.msra.mxu0 %v1605
    %1895 = vmatprep.subr.bf16.mxu0 %v1608
    %1896 = vmatpush1.bf16.msra.mxu0 %v1607
    %1897 = vmatprep.subr.bf16.mxu0 %v1610
    %1898 = vmatpush1.bf16.msra.mxu0 %v1609
    %1899 = vmatprep.subr.bf16.mxu0 %v1612
    %1900 = vmatpush1.bf16.msra.mxu0 %v1611
    %1901 = vmatprep.subr.bf16.mxu0 %v1614
    %1902 = vmatpush1.bf16.msra.mxu0 %v1613
    %1903 = vmatprep.subr.bf16.mxu0 %v1616
    %1904 = vmatpush1.bf16.msra.mxu0 %v1615
    %1905 = vmatprep.subr.bf16.mxu0 %v1618
    %1906 = vmatpush1.bf16.msra.mxu0 %v1617
    %1907 = vmatprep.subr.bf16.mxu0 %v1620
    %1908 = vmatpush1.bf16.msra.mxu0 %v1619
    %1909 = vmatprep.subr.bf16.mxu0 %v1622
    %1910 = vmatpush1.bf16.msra.mxu0 %v1621
    %1911 = vmatprep.subr.bf16.mxu0 %v1624
    %1912 = vmatpush1.bf16.msra.mxu0 %v1623
    %1913 = vmatprep.subr.bf16.mxu0 %v1626
    %1914 = vmatpush1.bf16.msra.mxu0 %v1625
    %1915 = vmatprep.subr.bf16.mxu0 %v1628
    %1916 = vmatpush1.bf16.msra.mxu0 %v1627
    %1917 = vmatprep.subr.bf16.mxu0 %v1630
    %1918 = vmatpush1.bf16.msra.mxu0 %v1629
    %1919 = vmatprep.mubr.bf16.mxu0 %v545
    %1920 = vmatmul.mubr.bf16.gmra.mrb[0].mxu0 %v479
    %v1921 = vpop.f32.mrb[0].mxu0
    %v1922 = vadd.f32 %v1160, %v1921
    %v1923 = vpop.f32.mrb[0].mxu0
    %v1924 = vadd.f32 %v1164, %v1923
    %v1925 = vpop.f32.mrb[0].mxu0
    %v1926 = vadd.f32 %v1160, %v1925
    %v1927 = vpop.f32.mrb[0].mxu0
    %v1928 = vadd.f32 %v1164, %v1927
    %1929 = vmatprep.mubr.bf16.mxu0 %v547
    %1930 = vmatmul.mubr.bf16.gmra.mrb[0].mxu0 %v481
    %v1931 = vpop.f32.mrb[0].mxu0
    %v1932 = vadd.f32 %v1160, %v1931
    %v1933 = vpop.f32.mrb[0].mxu0
    %v1934 = vadd.f32 %v1164, %v1933
    %v1935 = vpop.f32.mrb[0].mxu0
    %v1936 = vadd.f32 %v1160, %v1935
    %v1937 = vpop.f32.mrb[0].mxu0
    %v1938 = vadd.f32 %v1164, %v1937
    %1939 = vdwg.mxu0
    %1940 = vmatprep.subr.bf16.mxu0 %v1632
    %1941 = vmatpush1.bf16.msra.mxu0 %v1631
    %1942 = vmatprep.subr.bf16.mxu0 %v1634
    %1943 = vmatpush1.bf16.msra.mxu0 %v1633
    %1944 = vmatprep.subr.bf16.mxu0 %v1636
    %1945 = vmatpush1.bf16.msra.mxu0 %v1635
    %1946 = vmatprep.subr.bf16.mxu0 %v1638
    %1947 = vmatpush1.bf16.msra.mxu0 %v1637
    %1948 = vmatprep.subr.bf16.mxu0 %v1640
    %1949 = vmatpush1.bf16.msra.mxu0 %v1639
    %1950 = vmatprep.subr.bf16.mxu0 %v1642
    %1951 = vmatpush1.bf16.msra.mxu0 %v1641
    %1952 = vmatprep.subr.bf16.mxu0 %v1644
    %1953 = vmatpush1.bf16.msra.mxu0 %v1643
    %1954 = vmatprep.subr.bf16.mxu0 %v1646
    %1955 = vmatpush1.bf16.msra.mxu0 %v1645
    %1956 = vmatprep.subr.bf16.mxu0 %v1648
    %1957 = vmatpush1.bf16.msra.mxu0 %v1647
    %1958 = vmatprep.subr.bf16.mxu0 %v1650
    %1959 = vmatpush1.bf16.msra.mxu0 %v1649
    %1960 = vmatprep.subr.bf16.mxu0 %v1652
    %1961 = vmatpush1.bf16.msra.mxu0 %v1651
    %1962 = vmatprep.subr.bf16.mxu0 %v1654
    %1963 = vmatpush1.bf16.msra.mxu0 %v1653
    %1964 = vmatprep.subr.bf16.mxu0 %v1656
    %1965 = vmatpush1.bf16.msra.mxu0 %v1655
    %1966 = vmatprep.subr.bf16.mxu0 %v1658
    %1967 = vmatpush1.bf16.msra.mxu0 %v1657
    %1968 = vmatprep.subr.bf16.mxu0 %v1660
    %1969 = vmatpush1.bf16.msra.mxu0 %v1659
    %1970 = vmatprep.subr.bf16.mxu0 %v1662
    %1971 = vmatpush1.bf16.msra.mxu0 %v1661
    %1972 = vmatprep.mubr.bf16.mxu0 %v677
    %1973 = vmatmul.mubr.bf16.gmra.mrb[0].mxu0 %v611
    %v1974 = vpop.f32.mrb[0].mxu0
    %v1975 = vadd.f32 %v1922, %v1974
    %v1976 = vpop.f32.mrb[0].mxu0
    %v1977 = vadd.f32 %v1924, %v1976
    %v1978 = vpop.f32.mrb[0].mxu0
    %v1979 = vadd.f32 %v1926, %v1978
    %v1980 = vpop.f32.mrb[0].mxu0
    %v1981 = vadd.f32 %v1928, %v1980
    %1982 = vmatprep.mubr.bf16.mxu0 %v679
    %1983 = vmatmul.mubr.bf16.gmra.mrb[0].mxu0 %v613
    %v1984 = vpop.f32.mrb[0].mxu0
    %v1985 = vadd.f32 %v1932, %v1984
    %v1986 = vpop.f32.mrb[0].mxu0
    %v1987 = vadd.f32 %v1934, %v1986
    %v1988 = vpop.f32.mrb[0].mxu0
    %v1989 = vadd.f32 %v1936, %v1988
    %v1990 = vpop.f32.mrb[0].mxu0
    %v1991 = vadd.f32 %v1938, %v1990
    %1992 = vdwg.mxu0
    %1993 = vmatprep.subr.bf16.mxu0 %v1664
    %1994 = vmatpush1.bf16.msra.mxu0 %v1663
    %1995 = vmatprep.subr.bf16.mxu0 %v1666
    %1996 = vmatpush1.bf16.msra.mxu0 %v1665
    %1997 = vmatprep.subr.bf16.mxu0 %v1668
    %1998 = vmatpush1.bf16.msra.mxu0 %v1667
    %1999 = vmatprep.subr.bf16.mxu0 %v1670
    %2000 = vmatpush1.bf16.msra.mxu0 %v1669
    %2001 = vmatprep.subr.bf16.mxu0 %v1672
    %2002 = vmatpush1.bf16.msra.mxu0 %v1671
    %2003 = vmatprep.subr.bf16.mxu0 %v1674
    %2004 = vmatpush1.bf16.msra.mxu0 %v1673
    %2005 = vmatprep.subr.bf16.mxu0 %v1676
    %2006 = vmatpush1.bf16.msra.mxu0 %v1675
    %2007 = vmatprep.subr.bf16.mxu0 %v1678
    %2008 = vmatpush1.bf16.msra.mxu0 %v1677
    %2009 = vmatprep.subr.bf16.mxu0 %v1680
    %2010 = vmatpush1.bf16.msra.mxu0 %v1679
    %2011 = vmatprep.subr.bf16.mxu0 %v1682
    %2012 = vmatpush1.bf16.msra.mxu0 %v1681
    %2013 = vmatprep.subr.bf16.mxu0 %v1684
    %2014 = vmatpush1.bf16.msra.mxu0 %v1683
    %2015 = vmatprep.subr.bf16.mxu0 %v1686
    %2016 = vmatpush1.bf16.msra.mxu0 %v1685
    %2017 = vmatprep.subr.bf16.mxu0 %v1688
    %2018 = vmatpush1.bf16.msra.mxu0 %v1687
    %2019 = vmatprep.subr.bf16.mxu0 %v1690
    %2020 = vmatpush1.bf16.msra.mxu0 %v1689
    %2021 = vmatprep.subr.bf16.mxu0 %v1692
    %2022 = vmatpush1.bf16.msra.mxu0 %v1691
    %2023 = vmatprep.subr.bf16.mxu0 %v1694
    %2024 = vmatpush1.bf16.msra.mxu0 %v1693
    %2025 = vmatprep.mubr.bf16.mxu0 %v809
    %2026 = vmatmul.mubr.bf16.gmra.mrb[0].mxu0 %v743
    %v2027 = vpop.f32.mrb[0].mxu0
    %v2028 = vadd.f32 %v1975, %v2027
    %v2029 = vpop.f32.mrb[0].mxu0
    %v2030 = vadd.f32 %v1977, %v2029
    %v2031 = vpop.f32.mrb[0].mxu0
    %v2032 = vadd.f32 %v1979, %v2031
    %v2033 = vpop.f32.mrb[0].mxu0
    %v2034 = vadd.f32 %v1981, %v2033
    %2035 = vmatprep.mubr.bf16.mxu0 %v811
    %2036 = vmatmul.mubr.bf16.gmra.mrb[0].mxu0 %v745
    %v2037 = vpop.f32.mrb[0].mxu0
    %v2038 = vadd.f32 %v1985, %v2037
    %v2039 = vpop.f32.mrb[0].mxu0
    %v2040 = vadd.f32 %v1987, %v2039
    %v2041 = vpop.f32.mrb[0].mxu0
    %v2042 = vadd.f32 %v1989, %v2041
    %v2043 = vpop.f32.mrb[0].mxu0
    %v2044 = vadd.f32 %v1991, %v2043
    %2045 = vdwg.mxu0
    %2046 = vmatprep.subr.bf16.mxu0 %v1696
    %2047 = vmatpush1.bf16.msra.mxu0 %v1695
    %2048 = vmatprep.subr.bf16.mxu0 %v1698
    %2049 = vmatpush1.bf16.msra.mxu0 %v1697
    %2050 = vmatprep.subr.bf16.mxu0 %v1700
    %2051 = vmatpush1.bf16.msra.mxu0 %v1699
    %2052 = vmatprep.subr.bf16.mxu0 %v1702
    %2053 = vmatpush1.bf16.msra.mxu0 %v1701
    %2054 = vmatprep.subr.bf16.mxu0 %v1704
    %2055 = vmatpush1.bf16.msra.mxu0 %v1703
    %2056 = vmatprep.subr.bf16.mxu0 %v1706
    %2057 = vmatpush1.bf16.msra.mxu0 %v1705
    %2058 = vmatprep.subr.bf16.mxu0 %v1708
    %2059 = vmatpush1.bf16.msra.mxu0 %v1707
    %2060 = vmatprep.subr.bf16.mxu0 %v1710
    %2061 = vmatpush1.bf16.msra.mxu0 %v1709
    %2062 = vmatprep.subr.bf16.mxu0 %v1712
    %2063 = vmatpush1.bf16.msra.mxu0 %v1711
    %2064 = vmatprep.subr.bf16.mxu0 %v1714
    %2065 = vmatpush1.bf16.msra.mxu0 %v1713
    %2066 = vmatprep.subr.bf16.mxu0 %v1716
    %2067 = vmatpush1.bf16.msra.mxu0 %v1715
    %2068 = vmatprep.subr.bf16.mxu0 %v1718
    %2069 = vmatpush1.bf16.msra.mxu0 %v1717
    %2070 = vmatprep.subr.bf16.mxu0 %v1720
    %2071 = vmatpush1.bf16.msra.mxu0 %v1719
    %2072 = vmatprep.subr.bf16.mxu0 %v1722
    %2073 = vmatpush1.bf16.msra.mxu0 %v1721
    %2074 = vmatprep.subr.bf16.mxu0 %v1724
    %2075 = vmatpush1.bf16.msra.mxu0 %v1723
    %2076 = vmatprep.subr.bf16.mxu0 %v1726
    %2077 = vmatpush1.bf16.msra.mxu0 %v1725
    %2078 = vmatprep.mubr.bf16.mxu0 %v941
    %2079 = vmatmul.mubr.bf16.gmra.mrb[0].mxu0 %v875
    %v2080 = vpop.f32.mrb[0].mxu0
    %v2081 = vadd.f32 %v2028, %v2080
    %v2082 = vpop.f32.mrb[0].mxu0
    %v2083 = vadd.f32 %v2030, %v2082
    %v2084 = vpop.f32.mrb[0].mxu0
    %v2085 = vadd.f32 %v2032, %v2084
    %v2086 = vpop.f32.mrb[0].mxu0
    %v2087 = vadd.f32 %v2034, %v2086
    %2088 = vmatprep.mubr.bf16.mxu0 %v943
    %2089 = vmatmul.mubr.bf16.gmra.mrb[0].mxu0 %v877
    %v2090 = vpop.f32.mrb[0].mxu0
    %v2091 = vadd.f32 %v2038, %v2090
    %v2092 = vpop.f32.mrb[0].mxu0
    %v2093 = vadd.f32 %v2040, %v2092
    %v2094 = vpop.f32.mrb[0].mxu0
    %v2095 = vadd.f32 %v2042, %v2094
    %v2096 = vpop.f32.mrb[0].mxu0
    %v2097 = vadd.f32 %v2044, %v2096
    %2098 = vdwg.mxu0
    %2099 = vmatprep.subr.bf16.mxu0 %v1728
    %2100 = vmatpush1.bf16.msra.mxu0 %v1727
    %2101 = vmatprep.subr.bf16.mxu0 %v1730
    %2102 = vmatpush1.bf16.msra.mxu0 %v1729
    %2103 = vmatprep.subr.bf16.mxu0 %v1732
    %2104 = vmatpush1.bf16.msra.mxu0 %v1731
    %2105 = vmatprep.subr.bf16.mxu0 %v1734
    %2106 = vmatpush1.bf16.msra.mxu0 %v1733
    %2107 = vmatprep.subr.bf16.mxu0 %v1736
    %2108 = vmatpush1.bf16.msra.mxu0 %v1735
    %2109 = vmatprep.subr.bf16.mxu0 %v1738
    %2110 = vmatpush1.bf16.msra.mxu0 %v1737
    %2111 = vmatprep.subr.bf16.mxu0 %v1740
    %2112 = vmatpush1.bf16.msra.mxu0 %v1739
    %2113 = vmatprep.subr.bf16.mxu0 %v1742
    %2114 = vmatpush1.bf16.msra.mxu0 %v1741
    %2115 = vmatprep.subr.bf16.mxu0 0
    %2116 = vmatpush1.bf16.msra.mxu0 0
    %2117 = vmatprep.subr.bf16.mxu0 0
    %2118 = vmatpush1.bf16.msra.mxu0 0
    %2119 = vmatprep.subr.bf16.mxu0 0
    %2120 = vmatpush1.bf16.msra.mxu0 0
    %2121 = vmatprep.subr.bf16.mxu0 0
    %2122 = vmatpush1.bf16.msra.mxu0 0
    %2123 = vmatprep.subr.bf16.mxu0 0
    %2124 = vmatpush1.bf16.msra.mxu0 0
    %2125 = vmatprep.subr.bf16.mxu0 0
    %2126 = vmatpush1.bf16.msra.mxu0 0
    %2127 = vmatprep.subr.bf16.mxu0 0
    %2128 = vmatpush1.bf16.msra.mxu0 0
    %2129 = vmatprep.subr.bf16.mxu0 0
    %2130 = vmatpush1.bf16.msra.mxu0 0
    %2131 = vmatprep.mubr.bf16.mxu0 0
    %2132 = vmatmul.mubr.bf16.gmra.mrb[0].mxu0 %v1007
    %v2133 = vpop.f32.mrb[0].mxu0
    %v2134 = vadd.f32 %v2081, %v2133
    %v2135 = vpop.f32.mrb[0].mxu0
    %v2136 = vadd.f32 %v2083, %v2135
    %v2137 = vpop.f32.mrb[0].mxu0
    %v2138 = vadd.f32 %v2085, %v2137
    %v2139 = vpop.f32.mrb[0].mxu0
    %v2140 = vadd.f32 %v2087, %v2139
    %2141 = vmatprep.mubr.bf16.mxu0 0
    %2142 = vmatmul.mubr.bf16.gmra.mrb[0].mxu0 %v1009
    %v2143 = vpop.f32.mrb[0].mxu0
    %v2144 = vadd.f32 %v2091, %v2143
    %v2145 = vpop.f32.mrb[0].mxu0
    %v2146 = vadd.f32 %v2093, %v2145
    %v2147 = vpop.f32.mrb[0].mxu0
    %v2148 = vadd.f32 %v2095, %v2147
    %v2149 = vpop.f32.mrb[0].mxu0
    %v2150 = vadd.f32 %v2097, %v2149
    %2151 = vdwg.mxu0
    %v2152 = vmax.f32 %v2134, 0.0
    %v2153 = vmax.f32 %v2136, 0.0
    %v2154 = vmax.f32 %v2138, 0.0
    %v2155 = vmax.f32 %v2140, 0.0
    %v2156 = vmax.f32 %v2144, 0.0
    %v2157 = vmax.f32 %v2146, 0.0
    %v2158 = vmax.f32 %v2148, 0.0
    %v2159 = vmax.f32 %v2150, 0.0
    %v2160 = vpack.c.bf16 %v2154, %v2152
    %v2161 = vpack.c.bf16 %v2155, %v2153
    %v2162 = vpack.c.bf16 %v2158, %v2156
    %v2163 = vpack.c.bf16 %v2159, %v2157
    %v2168 = vunpack.c.l.b16 %v2160
    %v2169 = vunpack.c.l.b16 %v2161
    %v2170 = vunpack.c.h.b16 %v2160
    %v2171 = vunpack.c.h.b16 %v2161
    %v2172 = vunpack.c.l.b16 %v2162
    %v2173 = vunpack.c.l.b16 %v2163
    %v2174 = vunpack.c.h.b16 %v2162
    %v2175 = vunpack.c.h.b16 %v2163
    %v2176 = vpack.c.b16 %v2169, %v2168
    %v2177 = vpack.c.b16 %v2171, %v2170
    %v2178 = vpack.c.b16 %v2173, %v2172
    %v2179 = vpack.c.b16 %v2175, %v2174
    %v2180 = vunpack.i.l.s16 %v2176
    %v2181 = vunpack.i.h.s16 %v2176
    %v2182 = vpack.c.b16 %v2181, %v2180
    %v2183 = vunpack.i.l.s16 %v2177
    %v2184 = vunpack.i.h.s16 %v2177
    %v2185 = vpack.c.b16 %v2184, %v2183
    %v2186 = vunpack.i.l.s16 %v2178
    %v2187 = vunpack.i.h.s16 %v2178
    %v2188 = vpack.c.b16 %v2187, %v2186
    %v2189 = vunpack.i.l.s16 %v2179
    %v2190 = vunpack.i.h.s16 %v2179
    %v2191 = vpack.c.b16 %v2190, %v2189
    %v2192 = vld [vmem:[%s7] sm:$0x3]
    %v2193 = vcombine.low %v2182, %v2185
    %v2194 = vcombine.high %v2182, %v2185
    %v2195 = vcombine.low %v2188, %v2191
    %v2196 = vcombine.high %v2188, %v2191
    %v2198 = vunpack.c.l.s4 1983009808
    %v2199 = vunpack.c.0.s8 %v2198
    %v2200 = vlaneseq
    %v2201 = vshrl.u32 %v2200, 7
    %v2202 = vsub.s32 %v2199, %v2201
    %v2203 = vrot.slane %v2193, %v2202
    %v2205 = vunpack.c.l.s4 1983009808
    %v2206 = vunpack.c.0.s8 %v2205
    %v2207 = vlaneseq
    %v2208 = vshrl.u32 %v2207, 7
    %v2209 = vsub.s32 %v2206, %v2208
    %v2210 = vrot.slane %v2194, %v2209
    %v2212 = vunpack.c.l.s4 1983009808
    %v2213 = vunpack.c.0.s8 %v2212
    %v2214 = vlaneseq
    %v2215 = vshrl.u32 %v2214, 7
    %v2216 = vsub.s32 %v2213, %v2215
    %v2217 = vrot.slane %v2195, %v2216
    %v2219 = vunpack.c.l.s4 1983009808
    %v2220 = vunpack.c.0.s8 %v2219
    %v2221 = vlaneseq
    %v2222 = vshrl.u32 %v2221, 7
    %v2223 = vsub.s32 %v2220, %v2222
    %v2224 = vrot.slane %v2196, %v2223
    %v2225 = vcombine.low %v2203, %v2217
    %v2226 = vcombine.high %v2203, %v2217
    %v2227 = vcombine.low %v2210, %v2224
    %v2228 = vcombine.high %v2210, %v2224
    %v2234 = vsel %vm231, %v2192, 0
    %2236 = vmatprep.subr.bf16.mxu0 %v2226
    %2237 = vmatpush1.bf16.msra.mxu0 %v2225
    %2238 = vmatprep.subr.bf16.mxu0 0
    %2239 = vmatpush1.bf16.msra.mxu0 0
    %2240 = vmatprep.subr.bf16.mxu0 0
    %2241 = vmatpush1.bf16.msra.mxu0 0
    %2242 = vmatprep.subr.bf16.mxu0 0
    %2243 = vmatpush1.bf16.msra.mxu0 0
    %2244 = vmatprep.subr.bf16.mxu0 0
    %2245 = vmatpush1.bf16.msra.mxu0 0
    %2246 = vmatprep.subr.bf16.mxu0 0
    %2247 = vmatpush1.bf16.msra.mxu0 0
    %2248 = vmatprep.subr.bf16.mxu0 0
    %2249 = vmatpush1.bf16.msra.mxu0 0
    %2250 = vmatprep.subr.bf16.mxu0 0
    %2251 = vmatpush1.bf16.msra.mxu0 0
    %2252 = vmatprep.subr.bf16.mxu0 0
    %2253 = vmatpush1.bf16.msra.mxu0 0
    %2254 = vmatprep.subr.bf16.mxu0 0
    %2255 = vmatpush1.bf16.msra.mxu0 0
    %2256 = vmatprep.subr.bf16.mxu0 0
    %2257 = vmatpush1.bf16.msra.mxu0 0
    %2258 = vmatprep.subr.bf16.mxu0 0
    %2259 = vmatpush1.bf16.msra.mxu0 0
    %2260 = vmatprep.subr.bf16.mxu0 0
    %2261 = vmatpush1.bf16.msra.mxu0 0
    %2262 = vmatprep.subr.bf16.mxu0 0
    %2263 = vmatpush1.bf16.msra.mxu0 0
    %2264 = vmatprep.subr.bf16.mxu0 0
    %2265 = vmatpush1.bf16.msra.mxu0 0
    %2266 = vmatprep.subr.bf16.mxu0 0
    %2267 = vmatpush1.bf16.msra.mxu0 0
    %2268 = vmatprep.mubr.bf16.mxu0 0
    %2269 = vmatmul.mubr.bf16.gmra.mrb[0].mxu0 %v2234
    %v2270 = vpop.f32.mrb[0].mxu0
    %v2271 = vadd.f32 0.0, %v2270
    %v2272 = vpop.f32.mrb[0].mxu0
    %v2273 = vadd.f32 0.0, %v2272
    %v2274 = vpop.f32.mrb[0].mxu0
    %v2275 = vpop.f32.mrb[0].mxu0
    %2276 = vdwg.mxu0
    %2277 = vmatprep.subr.bf16.mxu0 %v2228
    %2278 = vmatpush1.bf16.msra.mxu0 %v2227
    %2279 = vmatprep.subr.bf16.mxu0 0
    %2280 = vmatpush1.bf16.msra.mxu0 0
    %2281 = vmatprep.subr.bf16.mxu0 0
    %2282 = vmatpush1.bf16.msra.mxu0 0
    %2283 = vmatprep.subr.bf16.mxu0 0
    %2284 = vmatpush1.bf16.msra.mxu0 0
    %2285 = vmatprep.subr.bf16.mxu0 0
    %2286 = vmatpush1.bf16.msra.mxu0 0
    %2287 = vmatprep.subr.bf16.mxu0 0
    %2288 = vmatpush1.bf16.msra.mxu0 0
    %2289 = vmatprep.subr.bf16.mxu0 0
    %2290 = vmatpush1.bf16.msra.mxu0 0
    %2291 = vmatprep.subr.bf16.mxu0 0
    %2292 = vmatpush1.bf16.msra.mxu0 0
    %2293 = vmatprep.subr.bf16.mxu0 0
    %2294 = vmatpush1.bf16.msra.mxu0 0
    %2295 = vmatprep.subr.bf16.mxu0 0
    %2296 = vmatpush1.bf16.msra.mxu0 0
    %2297 = vmatprep.subr.bf16.mxu0 0
    %2298 = vmatpush1.bf16.msra.mxu0 0
    %2299 = vmatprep.subr.bf16.mxu0 0
    %2300 = vmatpush1.bf16.msra.mxu0 0
    %2301 = vmatprep.subr.bf16.mxu0 0
    %2302 = vmatpush1.bf16.msra.mxu0 0
    %2303 = vmatprep.subr.bf16.mxu0 0
    %2304 = vmatpush1.bf16.msra.mxu0 0
    %2305 = vmatprep.subr.bf16.mxu0 0
    %2306 = vmatpush1.bf16.msra.mxu0 0
    %2307 = vmatprep.subr.bf16.mxu0 0
    %2308 = vmatpush1.bf16.msra.mxu0 0
    %2309 = vmatprep.mubr.bf16.mxu0 0
    %2310 = vmatmul.mubr.bf16.gmra.mrb[0].mxu0 %v2234
    %v2311 = vpop.f32.mrb[0].mxu0
    %v2312 = vadd.f32 0.0, %v2311
    %v2313 = vpop.f32.mrb[0].mxu0
    %v2314 = vadd.f32 0.0, %v2313
    %v2315 = vpop.f32.mrb[0].mxu0
    %v2316 = vpop.f32.mrb[0].mxu0
    %2317 = vdwg.mxu0
    %v2318 = vpack.c.bf16 %v2271, %v2271
    %v2319 = vpack.c.bf16 %v2273, %v2273
    %v2320 = vpack.c.bf16 %v2312, %v2312
    %v2321 = vpack.c.bf16 %v2314, %v2314
    %v2326 = vcombine.low %v2318, %v2319
    %v2327 = vcombine.low %v2320, %v2321
    %v2329 = vunpack.c.l.s4 1983009808
    %v2330 = vunpack.c.0.s8 %v2329
    %v2331 = vlaneseq
    %v2332 = vshrl.u32 %v2331, 7
    %v2333 = vsub.s32 %v2330, %v2332
    %v2334 = vrot.slane %v2326, %v2333
    %v2336 = vunpack.c.l.s4 1983009808
    %v2337 = vunpack.c.0.s8 %v2336
    %v2338 = vlaneseq
    %v2339 = vshrl.u32 %v2338, 7
    %v2340 = vsub.s32 %v2337, %v2339
    %v2341 = vrot.slane %v2327, %v2340
    %v2342 = vcombine.low %v2334, %v2341
    %v2343 = vunpack.c.l.b16 %v2342
    %v2344 = vunpack.c.h.b16 %v2342
    %v2345 = vpack.i.b16 %v2344, %v2343
    %s2346 = scalar_lea.vmem %s7, 2
    %v2347 = vld [vmem:[%s2346] sm:$0x3]
    %v2349 = vsel %vm231, %v2347, 0
    %2351 = vmatprep.subr.bf16.mxu0 %v2226
    %2352 = vmatpush1.bf16.msra.mxu0 %v2225
    %2353 = vmatprep.subr.bf16.mxu0 0
    %2354 = vmatpush1.bf16.msra.mxu0 0
    %2355 = vmatprep.subr.bf16.mxu0 0
    %2356 = vmatpush1.bf16.msra.mxu0 0
    %2357 = vmatprep.subr.bf16.mxu0 0
    %2358 = vmatpush1.bf16.msra.mxu0 0
    %2359 = vmatprep.subr.bf16.mxu0 0
    %2360 = vmatpush1.bf16.msra.mxu0 0
    %2361 = vmatprep.subr.bf16.mxu0 0
    %2362 = vmatpush1.bf16.msra.mxu0 0
    %2363 = vmatprep.subr.bf16.mxu0 0
    %2364 = vmatpush1.bf16.msra.mxu0 0
    %2365 = vmatprep.subr.bf16.mxu0 0
    %2366 = vmatpush1.bf16.msra.mxu0 0
    %2367 = vmatprep.subr.bf16.mxu0 0
    %2368 = vmatpush1.bf16.msra.mxu0 0
    %2369 = vmatprep.subr.bf16.mxu0 0
    %2370 = vmatpush1.bf16.msra.mxu0 0
    %2371 = vmatprep.subr.bf16.mxu0 0
    %2372 = vmatpush1.bf16.msra.mxu0 0
    %2373 = vmatprep.subr.bf16.mxu0 0
    %2374 = vmatpush1.bf16.msra.mxu0 0
    %2375 = vmatprep.subr.bf16.mxu0 0
    %2376 = vmatpush1.bf16.msra.mxu0 0
    %2377 = vmatprep.subr.bf16.mxu0 0
    %2378 = vmatpush1.bf16.msra.mxu0 0
    %2379 = vmatprep.subr.bf16.mxu0 0
    %2380 = vmatpush1.bf16.msra.mxu0 0
    %2381 = vmatprep.subr.bf16.mxu0 0
    %2382 = vmatpush1.bf16.msra.mxu0 0
    %2383 = vmatprep.mubr.bf16.mxu0 0
    %2384 = vmatmul.mubr.bf16.gmra.mrb[0].mxu0 %v2349
    %v2385 = vpop.f32.mrb[0].mxu0
    %v2386 = vadd.f32 0.0, %v2385
    %v2387 = vpop.f32.mrb[0].mxu0
    %v2388 = vadd.f32 0.0, %v2387
    %v2389 = vpop.f32.mrb[0].mxu0
    %v2390 = vpop.f32.mrb[0].mxu0
    %2391 = vdwg.mxu0
    %2392 = vmatprep.subr.bf16.mxu0 %v2228
    %2393 = vmatpush1.bf16.msra.mxu0 %v2227
    %2394 = vmatprep.subr.bf16.mxu0 0
    %2395 = vmatpush1.bf16.msra.mxu0 0
    %2396 = vmatprep.subr.bf16.mxu0 0
    %2397 = vmatpush1.bf16.msra.mxu0 0
    %2398 = vmatprep.subr.bf16.mxu0 0
    %2399 = vmatpush1.bf16.msra.mxu0 0
    %2400 = vmatprep.subr.bf16.mxu0 0
    %2401 = vmatpush1.bf16.msra.mxu0 0
    %2402 = vmatprep.subr.bf16.mxu0 0
    %2403 = vmatpush1.bf16.msra.mxu0 0
    %2404 = vmatprep.subr.bf16.mxu0 0
    %2405 = vmatpush1.bf16.msra.mxu0 0
    %2406 = vmatprep.subr.bf16.mxu0 0
    %2407 = vmatpush1.bf16.msra.mxu0 0
    %2408 = vmatprep.subr.bf16.mxu0 0
    %2409 = vmatpush1.bf16.msra.mxu0 0
    %2410 = vmatprep.subr.bf16.mxu0 0
    %2411 = vmatpush1.bf16.msra.mxu0 0
    %2412 = vmatprep.subr.bf16.mxu0 0
    %2413 = vmatpush1.bf16.msra.mxu0 0
    %2414 = vmatprep.subr.bf16.mxu0 0
    %2415 = vmatpush1.bf16.msra.mxu0 0
    %2416 = vmatprep.subr.bf16.mxu0 0
    %2417 = vmatpush1.bf16.msra.mxu0 0
    %2418 = vmatprep.subr.bf16.mxu0 0
    %2419 = vmatpush1.bf16.msra.mxu0 0
    %2420 = vmatprep.subr.bf16.mxu0 0
    %2421 = vmatpush1.bf16.msra.mxu0 0
    %2422 = vmatprep.subr.bf16.mxu0 0
    %2423 = vmatpush1.bf16.msra.mxu0 0
    %2424 = vmatprep.mubr.bf16.mxu0 0
    %2425 = vmatmul.mubr.bf16.gmra.mrb[0].mxu0 %v2349
    %v2426 = vpop.f32.mrb[0].mxu0
    %v2427 = vadd.f32 0.0, %v2426
    %v2428 = vpop.f32.mrb[0].mxu0
    %v2429 = vadd.f32 0.0, %v2428
    %v2430 = vpop.f32.mrb[0].mxu0
    %v2431 = vpop.f32.mrb[0].mxu0
    %2432 = vdwg.mxu0
    %v2433 = vpack.c.bf16 %v2386, %v2386
    %v2434 = vpack.c.bf16 %v2388, %v2388
    %v2435 = vpack.c.bf16 %v2427, %v2427
    %v2436 = vpack.c.bf16 %v2429, %v2429
    %v2441 = vcombine.low %v2433, %v2434
    %v2442 = vcombine.low %v2435, %v2436
    %v2444 = vunpack.c.l.s4 1983009808
    %v2445 = vunpack.c.0.s8 %v2444
    %v2446 = vlaneseq
    %v2447 = vshrl.u32 %v2446, 7
    %v2448 = vsub.s32 %v2445, %v2447
    %v2449 = vrot.slane %v2441, %v2448
    %v2451 = vunpack.c.l.s4 1983009808
    %v2452 = vunpack.c.0.s8 %v2451
    %v2453 = vlaneseq
    %v2454 = vshrl.u32 %v2453, 7
    %v2455 = vsub.s32 %v2452, %v2454
    %v2456 = vrot.slane %v2442, %v2455
    %v2457 = vcombine.low %v2449, %v2456
    %v2458 = vunpack.c.l.b16 %v2457
    %v2459 = vunpack.c.h.b16 %v2457
    %v2460 = vpack.i.b16 %v2459, %v2458
    %s2461 = scalar_lea.vmem %s7, 4
    %v2462 = vld [vmem:[%s2461] sm:$0x3]
    %v2464 = vsel %vm231, %v2462, 0
    %2466 = vmatprep.subr.bf16.mxu0 %v2226
    %2467 = vmatpush1.bf16.msra.mxu0 %v2225
    %2468 = vmatprep.subr.bf16.mxu0 0
    %2469 = vmatpush1.bf16.msra.mxu0 0
    %2470 = vmatprep.subr.bf16.mxu0 0
    %2471 = vmatpush1.bf16.msra.mxu0 0
    %2472 = vmatprep.subr.bf16.mxu0 0
    %2473 = vmatpush1.bf16.msra.mxu0 0
    %2474 = vmatprep.subr.bf16.mxu0 0
    %2475 = vmatpush1.bf16.msra.mxu0 0
    %2476 = vmatprep.subr.bf16.mxu0 0
    %2477 = vmatpush1.bf16.msra.mxu0 0
    %2478 = vmatprep.subr.bf16.mxu0 0
    %2479 = vmatpush1.bf16.msra.mxu0 0
    %2480 = vmatprep.subr.bf16.mxu0 0
    %2481 = vmatpush1.bf16.msra.mxu0 0
    %2482 = vmatprep.subr.bf16.mxu0 0
    %2483 = vmatpush1.bf16.msra.mxu0 0
    %2484 = vmatprep.subr.bf16.mxu0 0
    %2485 = vmatpush1.bf16.msra.mxu0 0
    %2486 = vmatprep.subr.bf16.mxu0 0
    %2487 = vmatpush1.bf16.msra.mxu0 0
    %2488 = vmatprep.subr.bf16.mxu0 0
    %2489 = vmatpush1.bf16.msra.mxu0 0
    %2490 = vmatprep.subr.bf16.mxu0 0
    %2491 = vmatpush1.bf16.msra.mxu0 0
    %2492 = vmatprep.subr.bf16.mxu0 0
    %2493 = vmatpush1.bf16.msra.mxu0 0
    %2494 = vmatprep.subr.bf16.mxu0 0
    %2495 = vmatpush1.bf16.msra.mxu0 0
    %2496 = vmatprep.subr.bf16.mxu0 0
    %2497 = vmatpush1.bf16.msra.mxu0 0
    %2498 = vmatprep.mubr.bf16.mxu0 0
    %2499 = vmatmul.mubr.bf16.gmra.mrb[0].mxu0 %v2464
    %v2500 = vpop.f32.mrb[0].mxu0
    %v2501 = vadd.f32 0.0, %v2500
    %v2502 = vpop.f32.mrb[0].mxu0
    %v2503 = vadd.f32 0.0, %v2502
    %v2504 = vpop.f32.mrb[0].mxu0
    %v2505 = vpop.f32.mrb[0].mxu0
    %2506 = vdwg.mxu0
    %2507 = vmatprep.subr.bf16.mxu0 %v2228
    %2508 = vmatpush1.bf16.msra.mxu0 %v2227
    %2509 = vmatprep.subr.bf16.mxu0 0
    %2510 = vmatpush1.bf16.msra.mxu0 0
    %2511 = vmatprep.subr.bf16.mxu0 0
    %2512 = vmatpush1.bf16.msra.mxu0 0
    %2513 = vmatprep.subr.bf16.mxu0 0
    %2514 = vmatpush1.bf16.msra.mxu0 0
    %2515 = vmatprep.subr.bf16.mxu0 0
    %2516 = vmatpush1.bf16.msra.mxu0 0
    %2517 = vmatprep.subr.bf16.mxu0 0
    %2518 = vmatpush1.bf16.msra.mxu0 0
    %2519 = vmatprep.subr.bf16.mxu0 0
    %2520 = vmatpush1.bf16.msra.mxu0 0
    %2521 = vmatprep.subr.bf16.mxu0 0
    %2522 = vmatpush1.bf16.msra.mxu0 0
    %2523 = vmatprep.subr.bf16.mxu0 0
    %2524 = vmatpush1.bf16.msra.mxu0 0
    %2525 = vmatprep.subr.bf16.mxu0 0
    %2526 = vmatpush1.bf16.msra.mxu0 0
    %2527 = vmatprep.subr.bf16.mxu0 0
    %2528 = vmatpush1.bf16.msra.mxu0 0
    %2529 = vmatprep.subr.bf16.mxu0 0
    %2530 = vmatpush1.bf16.msra.mxu0 0
    %2531 = vmatprep.subr.bf16.mxu0 0
    %2532 = vmatpush1.bf16.msra.mxu0 0
    %2533 = vmatprep.subr.bf16.mxu0 0
    %2534 = vmatpush1.bf16.msra.mxu0 0
    %2535 = vmatprep.subr.bf16.mxu0 0
    %2536 = vmatpush1.bf16.msra.mxu0 0
    %2537 = vmatprep.subr.bf16.mxu0 0
    %2538 = vmatpush1.bf16.msra.mxu0 0
    %2539 = vmatprep.mubr.bf16.mxu0 0
    %2540 = vmatmul.mubr.bf16.gmra.mrb[0].mxu0 %v2464
    %v2541 = vpop.f32.mrb[0].mxu0
    %v2542 = vadd.f32 0.0, %v2541
    %v2543 = vpop.f32.mrb[0].mxu0
    %v2544 = vadd.f32 0.0, %v2543
    %v2545 = vpop.f32.mrb[0].mxu0
    %v2546 = vpop.f32.mrb[0].mxu0
    %2547 = vdwg.mxu0
    %v2548 = vpack.c.bf16 %v2501, %v2501
    %v2549 = vpack.c.bf16 %v2503, %v2503
    %v2550 = vpack.c.bf16 %v2542, %v2542
    %v2551 = vpack.c.bf16 %v2544, %v2544
    %v2556 = vcombine.low %v2548, %v2549
    %v2557 = vcombine.low %v2550, %v2551
    %v2559 = vunpack.c.l.s4 1983009808
    %v2560 = vunpack.c.0.s8 %v2559
    %v2561 = vlaneseq
    %v2562 = vshrl.u32 %v2561, 7
    %v2563 = vsub.s32 %v2560, %v2562
    %v2564 = vrot.slane %v2556, %v2563
    %v2566 = vunpack.c.l.s4 1983009808
    %v2567 = vunpack.c.0.s8 %v2566
    %v2568 = vlaneseq
    %v2569 = vshrl.u32 %v2568, 7
    %v2570 = vsub.s32 %v2567, %v2569
    %v2571 = vrot.slane %v2557, %v2570
    %v2572 = vcombine.low %v2564, %v2571
    %v2573 = vunpack.c.l.b16 %v2572
    %v2574 = vunpack.c.h.b16 %v2572
    %v2575 = vpack.i.b16 %v2574, %v2573
    %s2576 = scalar_lea.vmem %s7, 6
    %v2577 = vld [vmem:[%s2576] sm:$0x3]
    %v2579 = vsel %vm231, %v2577, 0
    %2581 = vmatprep.subr.bf16.mxu0 %v2226
    %2582 = vmatpush1.bf16.msra.mxu0 %v2225
    %2583 = vmatprep.subr.bf16.mxu0 0
    %2584 = vmatpush1.bf16.msra.mxu0 0
    %2585 = vmatprep.subr.bf16.mxu0 0
    %2586 = vmatpush1.bf16.msra.mxu0 0
    %2587 = vmatprep.subr.bf16.mxu0 0
    %2588 = vmatpush1.bf16.msra.mxu0 0
    %2589 = vmatprep.subr.bf16.mxu0 0
    %2590 = vmatpush1.bf16.msra.mxu0 0
    %2591 = vmatprep.subr.bf16.mxu0 0
    %2592 = vmatpush1.bf16.msra.mxu0 0
    %2593 = vmatprep.subr.bf16.mxu0 0
    %2594 = vmatpush1.bf16.msra.mxu0 0
    %2595 = vmatprep.subr.bf16.mxu0 0
    %2596 = vmatpush1.bf16.msra.mxu0 0
    %2597 = vmatprep.subr.bf16.mxu0 0
    %2598 = vmatpush1.bf16.msra.mxu0 0
    %2599 = vmatprep.subr.bf16.mxu0 0
    %2600 = vmatpush1.bf16.msra.mxu0 0
    %2601 = vmatprep.subr.bf16.mxu0 0
    %2602 = vmatpush1.bf16.msra.mxu0 0
    %2603 = vmatprep.subr.bf16.mxu0 0
    %2604 = vmatpush1.bf16.msra.mxu0 0
    %2605 = vmatprep.subr.bf16.mxu0 0
    %2606 = vmatpush1.bf16.msra.mxu0 0
    %2607 = vmatprep.subr.bf16.mxu0 0
    %2608 = vmatpush1.bf16.msra.mxu0 0
    %2609 = vmatprep.subr.bf16.mxu0 0
    %2610 = vmatpush1.bf16.msra.mxu0 0
    %2611 = vmatprep.subr.bf16.mxu0 0
    %2612 = vmatpush1.bf16.msra.mxu0 0
    %2613 = vmatprep.mubr.bf16.mxu0 0
    %2614 = vmatmul.mubr.bf16.gmra.mrb[0].mxu0 %v2579
    %v2615 = vpop.f32.mrb[0].mxu0
    %v2616 = vadd.f32 0.0, %v2615
    %v2617 = vpop.f32.mrb[0].mxu0
    %v2618 = vadd.f32 0.0, %v2617
    %v2619 = vpop.f32.mrb[0].mxu0
    %v2620 = vpop.f32.mrb[0].mxu0
    %2621 = vdwg.mxu0
    %2622 = vmatprep.subr.bf16.mxu0 %v2228
    %2623 = vmatpush1.bf16.msra.mxu0 %v2227
    %2624 = vmatprep.subr.bf16.mxu0 0
    %2625 = vmatpush1.bf16.msra.mxu0 0
    %2626 = vmatprep.subr.bf16.mxu0 0
    %2627 = vmatpush1.bf16.msra.mxu0 0
    %2628 = vmatprep.subr.bf16.mxu0 0
    %2629 = vmatpush1.bf16.msra.mxu0 0
    %2630 = vmatprep.subr.bf16.mxu0 0
    %2631 = vmatpush1.bf16.msra.mxu0 0
    %2632 = vmatprep.subr.bf16.mxu0 0
    %2633 = vmatpush1.bf16.msra.mxu0 0
    %2634 = vmatprep.subr.bf16.mxu0 0
    %2635 = vmatpush1.bf16.msra.mxu0 0
    %2636 = vmatprep.subr.bf16.mxu0 0
    %2637 = vmatpush1.bf16.msra.mxu0 0
    %2638 = vmatprep.subr.bf16.mxu0 0
    %2639 = vmatpush1.bf16.msra.mxu0 0
    %2640 = vmatprep.subr.bf16.mxu0 0
    %2641 = vmatpush1.bf16.msra.mxu0 0
    %2642 = vmatprep.subr.bf16.mxu0 0
    %2643 = vmatpush1.bf16.msra.mxu0 0
    %2644 = vmatprep.subr.bf16.mxu0 0
    %2645 = vmatpush1.bf16.msra.mxu0 0
    %2646 = vmatprep.subr.bf16.mxu0 0
    %2647 = vmatpush1.bf16.msra.mxu0 0
    %2648 = vmatprep.subr.bf16.mxu0 0
    %2649 = vmatpush1.bf16.msra.mxu0 0
    %2650 = vmatprep.subr.bf16.mxu0 0
    %2651 = vmatpush1.bf16.msra.mxu0 0
    %2652 = vmatprep.subr.bf16.mxu0 0
    %2653 = vmatpush1.bf16.msra.mxu0 0
    %2654 = vmatprep.mubr.bf16.mxu0 0
    %2655 = vmatmul.mubr.bf16.gmra.mrb[0].mxu0 %v2579
    %v2656 = vpop.f32.mrb[0].mxu0
    %v2657 = vadd.f32 0.0, %v2656
    %v2658 = vpop.f32.mrb[0].mxu0
    %v2659 = vadd.f32 0.0, %v2658
    %v2660 = vpop.f32.mrb[0].mxu0
    %v2661 = vpop.f32.mrb[0].mxu0
    %2662 = vdwg.mxu0
    %v2663 = vpack.c.bf16 %v2616, %v2616
    %v2664 = vpack.c.bf16 %v2618, %v2618
    %v2665 = vpack.c.bf16 %v2657, %v2657
    %v2666 = vpack.c.bf16 %v2659, %v2659
    %v2671 = vcombine.low %v2663, %v2664
    %v2672 = vcombine.low %v2665, %v2666
    %v2674 = vunpack.c.l.s4 1983009808
    %v2675 = vunpack.c.0.s8 %v2674
    %v2676 = vlaneseq
    %v2677 = vshrl.u32 %v2676, 7
    %v2678 = vsub.s32 %v2675, %v2677
    %v2679 = vrot.slane %v2671, %v2678
    %v2681 = vunpack.c.l.s4 1983009808
    %v2682 = vunpack.c.0.s8 %v2681
    %v2683 = vlaneseq
    %v2684 = vshrl.u32 %v2683, 7
    %v2685 = vsub.s32 %v2682, %v2684
    %v2686 = vrot.slane %v2672, %v2685
    %v2687 = vcombine.low %v2679, %v2686
    %v2688 = vunpack.c.l.b16 %v2687
    %v2689 = vunpack.c.h.b16 %v2687
    %v2690 = vpack.i.b16 %v2689, %v2688
    %s2691 = scalar_lea.vmem %s7, 8
    %v2692 = vld [vmem:[%s2691] sm:$0x3]
    %v2694 = vsel %vm231, %v2692, 0
    %2696 = vmatprep.subr.bf16.mxu0 %v2226
    %2697 = vmatpush1.bf16.msra.mxu0 %v2225
    %2698 = vmatprep.subr.bf16.mxu0 0
    %2699 = vmatpush1.bf16.msra.mxu0 0
    %2700 = vmatprep.subr.bf16.mxu0 0
    %2701 = vmatpush1.bf16.msra.mxu0 0
    %2702 = vmatprep.subr.bf16.mxu0 0
    %2703 = vmatpush1.bf16.msra.mxu0 0
    %2704 = vmatprep.subr.bf16.mxu0 0
    %2705 = vmatpush1.bf16.msra.mxu0 0
    %2706 = vmatprep.subr.bf16.mxu0 0
    %2707 = vmatpush1.bf16.msra.mxu0 0
    %2708 = vmatprep.subr.bf16.mxu0 0
    %2709 = vmatpush1.bf16.msra.mxu0 0
    %2710 = vmatprep.subr.bf16.mxu0 0
    %2711 = vmatpush1.bf16.msra.mxu0 0
    %2712 = vmatprep.subr.bf16.mxu0 0
    %2713 = vmatpush1.bf16.msra.mxu0 0
    %2714 = vmatprep.subr.bf16.mxu0 0
    %2715 = vmatpush1.bf16.msra.mxu0 0
    %2716 = vmatprep.subr.bf16.mxu0 0
    %2717 = vmatpush1.bf16.msra.mxu0 0
    %2718 = vmatprep.subr.bf16.mxu0 0
    %2719 = vmatpush1.bf16.msra.mxu0 0
    %2720 = vmatprep.subr.bf16.mxu0 0
    %2721 = vmatpush1.bf16.msra.mxu0 0
    %2722 = vmatprep.subr.bf16.mxu0 0
    %2723 = vmatpush1.bf16.msra.mxu0 0
    %2724 = vmatprep.subr.bf16.mxu0 0
    %2725 = vmatpush1.bf16.msra.mxu0 0
    %2726 = vmatprep.subr.bf16.mxu0 0
    %2727 = vmatpush1.bf16.msra.mxu0 0
    %2728 = vmatprep.mubr.bf16.mxu0 0
    %2729 = vmatmul.mubr.bf16.gmra.mrb[0].mxu0 %v2694
    %v2730 = vpop.f32.mrb[0].mxu0
    %v2731 = vadd.f32 0.0, %v2730
    %v2732 = vpop.f32.mrb[0].mxu0
    %v2733 = vadd.f32 0.0, %v2732
    %v2734 = vpop.f32.mrb[0].mxu0
    %v2735 = vpop.f32.mrb[0].mxu0
    %2736 = vdwg.mxu0
    %2737 = vmatprep.subr.bf16.mxu0 %v2228
    %2738 = vmatpush1.bf16.msra.mxu0 %v2227
    %2739 = vmatprep.subr.bf16.mxu0 0
    %2740 = vmatpush1.bf16.msra.mxu0 0
    %2741 = vmatprep.subr.bf16.mxu0 0
    %2742 = vmatpush1.bf16.msra.mxu0 0
    %2743 = vmatprep.subr.bf16.mxu0 0
    %2744 = vmatpush1.bf16.msra.mxu0 0
    %2745 = vmatprep.subr.bf16.mxu0 0
    %2746 = vmatpush1.bf16.msra.mxu0 0
    %2747 = vmatprep.subr.bf16.mxu0 0
    %2748 = vmatpush1.bf16.msra.mxu0 0
    %2749 = vmatprep.subr.bf16.mxu0 0
    %2750 = vmatpush1.bf16.msra.mxu0 0
    %2751 = vmatprep.subr.bf16.mxu0 0
    %2752 = vmatpush1.bf16.msra.mxu0 0
    %2753 = vmatprep.subr.bf16.mxu0 0
    %2754 = vmatpush1.bf16.msra.mxu0 0
    %2755 = vmatprep.subr.bf16.mxu0 0
    %2756 = vmatpush1.bf16.msra.mxu0 0
    %2757 = vmatprep.subr.bf16.mxu0 0
    %2758 = vmatpush1.bf16.msra.mxu0 0
    %2759 = vmatprep.subr.bf16.mxu0 0
    %2760 = vmatpush1.bf16.msra.mxu0 0
    %2761 = vmatprep.subr.bf16.mxu0 0
    %2762 = vmatpush1.bf16.msra.mxu0 0
    %2763 = vmatprep.subr.bf16.mxu0 0
    %2764 = vmatpush1.bf16.msra.mxu0 0
    %2765 = vmatprep.subr.bf16.mxu0 0
    %2766 = vmatpush1.bf16.msra.mxu0 0
    %2767 = vmatprep.subr.bf16.mxu0 0
    %2768 = vmatpush1.bf16.msra.mxu0 0
    %2769 = vmatprep.mubr.bf16.mxu0 0
    %2770 = vmatmul.mubr.bf16.gmra.mrb[0].mxu0 %v2694
    %v2771 = vpop.f32.mrb[0].mxu0
    %v2772 = vadd.f32 0.0, %v2771
    %v2773 = vpop.f32.mrb[0].mxu0
    %v2774 = vadd.f32 0.0, %v2773
    %v2775 = vpop.f32.mrb[0].mxu0
    %v2776 = vpop.f32.mrb[0].mxu0
    %2777 = vdwg.mxu0
    %v2778 = vpack.c.bf16 %v2731, %v2731
    %v2779 = vpack.c.bf16 %v2733, %v2733
    %v2780 = vpack.c.bf16 %v2772, %v2772
    %v2781 = vpack.c.bf16 %v2774, %v2774
    %v2786 = vcombine.low %v2778, %v2779
    %v2787 = vcombine.low %v2780, %v2781
    %v2789 = vunpack.c.l.s4 1983009808
    %v2790 = vunpack.c.0.s8 %v2789
    %v2791 = vlaneseq
    %v2792 = vshrl.u32 %v2791, 7
    %v2793 = vsub.s32 %v2790, %v2792
    %v2794 = vrot.slane %v2786, %v2793
    %v2796 = vunpack.c.l.s4 1983009808
    %v2797 = vunpack.c.0.s8 %v2796
    %v2798 = vlaneseq
    %v2799 = vshrl.u32 %v2798, 7
    %v2800 = vsub.s32 %v2797, %v2799
    %v2801 = vrot.slane %v2787, %v2800
    %v2802 = vcombine.low %v2794, %v2801
    %v2803 = vunpack.c.l.b16 %v2802
    %v2804 = vunpack.c.h.b16 %v2802
    %v2805 = vpack.i.b16 %v2804, %v2803
    %s2806 = scalar_lea.vmem %s7, 10
    %v2807 = vld [vmem:[%s2806] sm:$0x3]
    %v2809 = vsel %vm231, %v2807, 0
    %2811 = vmatprep.subr.bf16.mxu0 %v2226
    %2812 = vmatpush1.bf16.msra.mxu0 %v2225
    %2813 = vmatprep.subr.bf16.mxu0 0
    %2814 = vmatpush1.bf16.msra.mxu0 0
    %2815 = vmatprep.subr.bf16.mxu0 0
    %2816 = vmatpush1.bf16.msra.mxu0 0
    %2817 = vmatprep.subr.bf16.mxu0 0
    %2818 = vmatpush1.bf16.msra.mxu0 0
    %2819 = vmatprep.subr.bf16.mxu0 0
    %2820 = vmatpush1.bf16.msra.mxu0 0
    %2821 = vmatprep.subr.bf16.mxu0 0
    %2822 = vmatpush1.bf16.msra.mxu0 0
    %2823 = vmatprep.subr.bf16.mxu0 0
    %2824 = vmatpush1.bf16.msra.mxu0 0
    %2825 = vmatprep.subr.bf16.mxu0 0
    %2826 = vmatpush1.bf16.msra.mxu0 0
    %2827 = vmatprep.subr.bf16.mxu0 0
    %2828 = vmatpush1.bf16.msra.mxu0 0
    %2829 = vmatprep.subr.bf16.mxu0 0
    %2830 = vmatpush1.bf16.msra.mxu0 0
    %2831 = vmatprep.subr.bf16.mxu0 0
    %2832 = vmatpush1.bf16.msra.mxu0 0
    %2833 = vmatprep.subr.bf16.mxu0 0
    %2834 = vmatpush1.bf16.msra.mxu0 0
    %2835 = vmatprep.subr.bf16.mxu0 0
    %2836 = vmatpush1.bf16.msra.mxu0 0
    %2837 = vmatprep.subr.bf16.mxu0 0
    %2838 = vmatpush1.bf16.msra.mxu0 0
    %2839 = vmatprep.subr.bf16.mxu0 0
    %2840 = vmatpush1.bf16.msra.mxu0 0
    %2841 = vmatprep.subr.bf16.mxu0 0
    %2842 = vmatpush1.bf16.msra.mxu0 0
    %2843 = vmatprep.mubr.bf16.mxu0 0
    %2844 = vmatmul.mubr.bf16.gmra.mrb[0].mxu0 %v2809
    %v2845 = vpop.f32.mrb[0].mxu0
    %v2846 = vadd.f32 0.0, %v2845
    %v2847 = vpop.f32.mrb[0].mxu0
    %v2848 = vadd.f32 0.0, %v2847
    %v2849 = vpop.f32.mrb[0].mxu0
    %v2850 = vpop.f32.mrb[0].mxu0
    %2851 = vdwg.mxu0
    %2852 = vmatprep.subr.bf16.mxu0 %v2228
    %2853 = vmatpush1.bf16.msra.mxu0 %v2227
    %2854 = vmatprep.subr.bf16.mxu0 0
    %2855 = vmatpush1.bf16.msra.mxu0 0
    %2856 = vmatprep.subr.bf16.mxu0 0
    %2857 = vmatpush1.bf16.msra.mxu0 0
    %2858 = vmatprep.subr.bf16.mxu0 0
    %2859 = vmatpush1.bf16.msra.mxu0 0
    %2860 = vmatprep.subr.bf16.mxu0 0
    %2861 = vmatpush1.bf16.msra.mxu0 0
    %2862 = vmatprep.subr.bf16.mxu0 0
    %2863 = vmatpush1.bf16.msra.mxu0 0
    %2864 = vmatprep.subr.bf16.mxu0 0
    %2865 = vmatpush1.bf16.msra.mxu0 0
    %2866 = vmatprep.subr.bf16.mxu0 0
    %2867 = vmatpush1.bf16.msra.mxu0 0
    %2868 = vmatprep.subr.bf16.mxu0 0
    %2869 = vmatpush1.bf16.msra.mxu0 0
    %2870 = vmatprep.subr.bf16.mxu0 0
    %2871 = vmatpush1.bf16.msra.mxu0 0
    %2872 = vmatprep.subr.bf16.mxu0 0
    %2873 = vmatpush1.bf16.msra.mxu0 0
    %2874 = vmatprep.subr.bf16.mxu0 0
    %2875 = vmatpush1.bf16.msra.mxu0 0
    %2876 = vmatprep.subr.bf16.mxu0 0
    %2877 = vmatpush1.bf16.msra.mxu0 0
    %2878 = vmatprep.subr.bf16.mxu0 0
    %2879 = vmatpush1.bf16.msra.mxu0 0
    %2880 = vmatprep.subr.bf16.mxu0 0
    %2881 = vmatpush1.bf16.msra.mxu0 0
    %2882 = vmatprep.subr.bf16.mxu0 0
    %2883 = vmatpush1.bf16.msra.mxu0 0
    %2884 = vmatprep.mubr.bf16.mxu0 0
    %2885 = vmatmul.mubr.bf16.gmra.mrb[0].mxu0 %v2809
    %v2886 = vpop.f32.mrb[0].mxu0
    %v2887 = vadd.f32 0.0, %v2886
    %v2888 = vpop.f32.mrb[0].mxu0
    %v2889 = vadd.f32 0.0, %v2888
    %v2890 = vpop.f32.mrb[0].mxu0
    %v2891 = vpop.f32.mrb[0].mxu0
    %2892 = vdwg.mxu0
    %v2893 = vpack.c.bf16 %v2846, %v2846
    %v2894 = vpack.c.bf16 %v2848, %v2848
    %v2895 = vpack.c.bf16 %v2887, %v2887
    %v2896 = vpack.c.bf16 %v2889, %v2889
    %v2901 = vcombine.low %v2893, %v2894
    %v2902 = vcombine.low %v2895, %v2896
    %v2904 = vunpack.c.l.s4 1983009808
    %v2905 = vunpack.c.0.s8 %v2904
    %v2906 = vlaneseq
    %v2907 = vshrl.u32 %v2906, 7
    %v2908 = vsub.s32 %v2905, %v2907
    %v2909 = vrot.slane %v2901, %v2908
    %v2911 = vunpack.c.l.s4 1983009808
    %v2912 = vunpack.c.0.s8 %v2911
    %v2913 = vlaneseq
    %v2914 = vshrl.u32 %v2913, 7
    %v2915 = vsub.s32 %v2912, %v2914
    %v2916 = vrot.slane %v2902, %v2915
    %v2917 = vcombine.low %v2909, %v2916
    %v2918 = vunpack.c.l.b16 %v2917
    %v2919 = vunpack.c.h.b16 %v2917
    %v2920 = vpack.i.b16 %v2919, %v2918
    %s2921 = scalar_lea.vmem %s7, 12
    %v2922 = vld [vmem:[%s2921] sm:$0x3]
    %v2924 = vsel %vm231, %v2922, 0
    %2926 = vmatprep.subr.bf16.mxu0 %v2226
    %2927 = vmatpush1.bf16.msra.mxu0 %v2225
    %2928 = vmatprep.subr.bf16.mxu0 0
    %2929 = vmatpush1.bf16.msra.mxu0 0
    %2930 = vmatprep.subr.bf16.mxu0 0
    %2931 = vmatpush1.bf16.msra.mxu0 0
    %2932 = vmatprep.subr.bf16.mxu0 0
    %2933 = vmatpush1.bf16.msra.mxu0 0
    %2934 = vmatprep.subr.bf16.mxu0 0
    %2935 = vmatpush1.bf16.msra.mxu0 0
    %2936 = vmatprep.subr.bf16.mxu0 0
    %2937 = vmatpush1.bf16.msra.mxu0 0
    %2938 = vmatprep.subr.bf16.mxu0 0
    %2939 = vmatpush1.bf16.msra.mxu0 0
    %2940 = vmatprep.subr.bf16.mxu0 0
    %2941 = vmatpush1.bf16.msra.mxu0 0
    %2942 = vmatprep.subr.bf16.mxu0 0
    %2943 = vmatpush1.bf16.msra.mxu0 0
    %2944 = vmatprep.subr.bf16.mxu0 0
    %2945 = vmatpush1.bf16.msra.mxu0 0
    %2946 = vmatprep.subr.bf16.mxu0 0
    %2947 = vmatpush1.bf16.msra.mxu0 0
    %2948 = vmatprep.subr.bf16.mxu0 0
    %2949 = vmatpush1.bf16.msra.mxu0 0
    %2950 = vmatprep.subr.bf16.mxu0 0
    %2951 = vmatpush1.bf16.msra.mxu0 0
    %2952 = vmatprep.subr.bf16.mxu0 0
    %2953 = vmatpush1.bf16.msra.mxu0 0
    %2954 = vmatprep.subr.bf16.mxu0 0
    %2955 = vmatpush1.bf16.msra.mxu0 0
    %2956 = vmatprep.subr.bf16.mxu0 0
    %2957 = vmatpush1.bf16.msra.mxu0 0
    %2958 = vmatprep.mubr.bf16.mxu0 0
    %2959 = vmatmul.mubr.bf16.gmra.mrb[0].mxu0 %v2924
    %v2960 = vpop.f32.mrb[0].mxu0
    %v2961 = vadd.f32 0.0, %v2960
    %v2962 = vpop.f32.mrb[0].mxu0
    %v2963 = vadd.f32 0.0, %v2962
    %v2964 = vpop.f32.mrb[0].mxu0
    %v2965 = vpop.f32.mrb[0].mxu0
    %2966 = vdwg.mxu0
    %2967 = vmatprep.subr.bf16.mxu0 %v2228
    %2968 = vmatpush1.bf16.msra.mxu0 %v2227
    %2969 = vmatprep.subr.bf16.mxu0 0
    %2970 = vmatpush1.bf16.msra.mxu0 0
    %2971 = vmatprep.subr.bf16.mxu0 0
    %2972 = vmatpush1.bf16.msra.mxu0 0
    %2973 = vmatprep.subr.bf16.mxu0 0
    %2974 = vmatpush1.bf16.msra.mxu0 0
    %2975 = vmatprep.subr.bf16.mxu0 0
    %2976 = vmatpush1.bf16.msra.mxu0 0
    %2977 = vmatprep.subr.bf16.mxu0 0
    %2978 = vmatpush1.bf16.msra.mxu0 0
    %2979 = vmatprep.subr.bf16.mxu0 0
    %2980 = vmatpush1.bf16.msra.mxu0 0
    %2981 = vmatprep.subr.bf16.mxu0 0
    %2982 = vmatpush1.bf16.msra.mxu0 0
    %2983 = vmatprep.subr.bf16.mxu0 0
    %2984 = vmatpush1.bf16.msra.mxu0 0
    %2985 = vmatprep.subr.bf16.mxu0 0
    %2986 = vmatpush1.bf16.msra.mxu0 0
    %2987 = vmatprep.subr.bf16.mxu0 0
    %2988 = vmatpush1.bf16.msra.mxu0 0
    %2989 = vmatprep.subr.bf16.mxu0 0
    %2990 = vmatpush1.bf16.msra.mxu0 0
    %2991 = vmatprep.subr.bf16.mxu0 0
    %2992 = vmatpush1.bf16.msra.mxu0 0
    %2993 = vmatprep.subr.bf16.mxu0 0
    %2994 = vmatpush1.bf16.msra.mxu0 0
    %2995 = vmatprep.subr.bf16.mxu0 0
    %2996 = vmatpush1.bf16.msra.mxu0 0
    %2997 = vmatprep.subr.bf16.mxu0 0
    %2998 = vmatpush1.bf16.msra.mxu0 0
    %2999 = vmatprep.mubr.bf16.mxu0 0
    %3000 = vmatmul.mubr.bf16.gmra.mrb[0].mxu0 %v2924
    %v3001 = vpop.f32.mrb[0].mxu0
    %v3002 = vadd.f32 0.0, %v3001
    %v3003 = vpop.f32.mrb[0].mxu0
    %v3004 = vadd.f32 0.0, %v3003
    %v3005 = vpop.f32.mrb[0].mxu0
    %v3006 = vpop.f32.mrb[0].mxu0
    %3007 = vdwg.mxu0
    %v3008 = vpack.c.bf16 %v2961, %v2961
    %v3009 = vpack.c.bf16 %v2963, %v2963
    %v3010 = vpack.c.bf16 %v3002, %v3002
    %v3011 = vpack.c.bf16 %v3004, %v3004
    %v3016 = vcombine.low %v3008, %v3009
    %v3017 = vcombine.low %v3010, %v3011
    %v3019 = vunpack.c.l.s4 1983009808
    %v3020 = vunpack.c.0.s8 %v3019
    %v3021 = vlaneseq
    %v3022 = vshrl.u32 %v3021, 7
    %v3023 = vsub.s32 %v3020, %v3022
    %v3024 = vrot.slane %v3016, %v3023
    %v3026 = vunpack.c.l.s4 1983009808
    %v3027 = vunpack.c.0.s8 %v3026
    %v3028 = vlaneseq
    %v3029 = vshrl.u32 %v3028, 7
    %v3030 = vsub.s32 %v3027, %v3029
    %v3031 = vrot.slane %v3017, %v3030
    %v3032 = vcombine.low %v3024, %v3031
    %v3033 = vunpack.c.l.b16 %v3032
    %v3034 = vunpack.c.h.b16 %v3032
    %v3035 = vpack.i.b16 %v3034, %v3033
    %s3036 = scalar_lea.vmem %s7, 14
    %v3037 = vld [vmem:[%s3036] sm:$0x3]
    %v3039 = vsel %vm231, %v3037, 0
    %3041 = vmatprep.subr.bf16.mxu0 %v2226
    %3042 = vmatpush1.bf16.msra.mxu0 %v2225
    %3043 = vmatprep.subr.bf16.mxu0 0
    %3044 = vmatpush1.bf16.msra.mxu0 0
    %3045 = vmatprep.subr.bf16.mxu0 0
    %3046 = vmatpush1.bf16.msra.mxu0 0
    %3047 = vmatprep.subr.bf16.mxu0 0
    %3048 = vmatpush1.bf16.msra.mxu0 0
    %3049 = vmatprep.subr.bf16.mxu0 0
    %3050 = vmatpush1.bf16.msra.mxu0 0
    %3051 = vmatprep.subr.bf16.mxu0 0
    %3052 = vmatpush1.bf16.msra.mxu0 0
    %3053 = vmatprep.subr.bf16.mxu0 0
    %3054 = vmatpush1.bf16.msra.mxu0 0
    %3055 = vmatprep.subr.bf16.mxu0 0
    %3056 = vmatpush1.bf16.msra.mxu0 0
    %3057 = vmatprep.subr.bf16.mxu0 0
    %3058 = vmatpush1.bf16.msra.mxu0 0
    %3059 = vmatprep.subr.bf16.mxu0 0
    %3060 = vmatpush1.bf16.msra.mxu0 0
    %3061 = vmatprep.subr.bf16.mxu0 0
    %3062 = vmatpush1.bf16.msra.mxu0 0
    %3063 = vmatprep.subr.bf16.mxu0 0
    %3064 = vmatpush1.bf16.msra.mxu0 0
    %3065 = vmatprep.subr.bf16.mxu0 0
    %3066 = vmatpush1.bf16.msra.mxu0 0
    %3067 = vmatprep.subr.bf16.mxu0 0
    %3068 = vmatpush1.bf16.msra.mxu0 0
    %3069 = vmatprep.subr.bf16.mxu0 0
    %3070 = vmatpush1.bf16.msra.mxu0 0
    %3071 = vmatprep.subr.bf16.mxu0 0
    %3072 = vmatpush1.bf16.msra.mxu0 0
    %3073 = vmatprep.mubr.bf16.mxu0 0
    %3074 = vmatmul.mubr.bf16.gmra.mrb[0].mxu0 %v3039
    %v3075 = vpop.f32.mrb[0].mxu0
    %v3076 = vadd.f32 0.0, %v3075
    %v3077 = vpop.f32.mrb[0].mxu0
    %v3078 = vadd.f32 0.0, %v3077
    %v3079 = vpop.f32.mrb[0].mxu0
    %v3080 = vpop.f32.mrb[0].mxu0
    %3081 = vdwg.mxu0
    %3082 = vmatprep.subr.bf16.mxu0 %v2228
    %3083 = vmatpush1.bf16.msra.mxu0 %v2227
    %3084 = vmatprep.subr.bf16.mxu0 0
    %3085 = vmatpush1.bf16.msra.mxu0 0
    %3086 = vmatprep.subr.bf16.mxu0 0
    %3087 = vmatpush1.bf16.msra.mxu0 0
    %3088 = vmatprep.subr.bf16.mxu0 0
    %3089 = vmatpush1.bf16.msra.mxu0 0
    %3090 = vmatprep.subr.bf16.mxu0 0
    %3091 = vmatpush1.bf16.msra.mxu0 0
    %3092 = vmatprep.subr.bf16.mxu0 0
    %3093 = vmatpush1.bf16.msra.mxu0 0
    %3094 = vmatprep.subr.bf16.mxu0 0
    %3095 = vmatpush1.bf16.msra.mxu0 0
    %3096 = vmatprep.subr.bf16.mxu0 0
    %3097 = vmatpush1.bf16.msra.mxu0 0
    %3098 = vmatprep.subr.bf16.mxu0 0
    %3099 = vmatpush1.bf16.msra.mxu0 0
    %3100 = vmatprep.subr.bf16.mxu0 0
    %3101 = vmatpush1.bf16.msra.mxu0 0
    %3102 = vmatprep.subr.bf16.mxu0 0
    %3103 = vmatpush1.bf16.msra.mxu0 0
    %3104 = vmatprep.subr.bf16.mxu0 0
    %3105 = vmatpush1.bf16.msra.mxu0 0
    %3106 = vmatprep.subr.bf16.mxu0 0
    %3107 = vmatpush1.bf16.msra.mxu0 0
    %3108 = vmatprep.subr.bf16.mxu0 0
    %3109 = vmatpush1.bf16.msra.mxu0 0
    %3110 = vmatprep.subr.bf16.mxu0 0
    %3111 = vmatpush1.bf16.msra.mxu0 0
    %3112 = vmatprep.subr.bf16.mxu0 0
    %3113 = vmatpush1.bf16.msra.mxu0 0
    %3114 = vmatprep.mubr.bf16.mxu0 0
    %3115 = vmatmul.mubr.bf16.gmra.mrb[0].mxu0 %v3039
    %v3116 = vpop.f32.mrb[0].mxu0
    %v3117 = vadd.f32 0.0, %v3116
    %v3118 = vpop.f32.mrb[0].mxu0
    %v3119 = vadd.f32 0.0, %v3118
    %v3120 = vpop.f32.mrb[0].mxu0
    %v3121 = vpop.f32.mrb[0].mxu0
    %3122 = vdwg.mxu0
    %v3123 = vpack.c.bf16 %v3076, %v3076
    %v3124 = vpack.c.bf16 %v3078, %v3078
    %v3125 = vpack.c.bf16 %v3117, %v3117
    %v3126 = vpack.c.bf16 %v3119, %v3119
    %v3131 = vcombine.low %v3123, %v3124
    %v3132 = vcombine.low %v3125, %v3126
    %v3134 = vunpack.c.l.s4 1983009808
    %v3135 = vunpack.c.0.s8 %v3134
    %v3136 = vlaneseq
    %v3137 = vshrl.u32 %v3136, 7
    %v3138 = vsub.s32 %v3135, %v3137
    %v3139 = vrot.slane %v3131, %v3138
    %v3141 = vunpack.c.l.s4 1983009808
    %v3142 = vunpack.c.0.s8 %v3141
    %v3143 = vlaneseq
    %v3144 = vshrl.u32 %v3143, 7
    %v3145 = vsub.s32 %v3142, %v3144
    %v3146 = vrot.slane %v3132, %v3145
    %v3147 = vcombine.low %v3139, %v3146
    %v3148 = vunpack.c.l.b16 %v3147
    %v3149 = vunpack.c.h.b16 %v3147
    %v3150 = vpack.i.b16 %v3149, %v3148
    %s3151 = scalar_lea.vmem %s7, 16
    %v3152 = vld [vmem:[%s3151] sm:$0x3]
    %v3154 = vsel %vm231, %v3152, 0
    %3156 = vmatprep.subr.bf16.mxu0 %v2226
    %3157 = vmatpush1.bf16.msra.mxu0 %v2225
    %3158 = vmatprep.subr.bf16.mxu0 0
    %3159 = vmatpush1.bf16.msra.mxu0 0
    %3160 = vmatprep.subr.bf16.mxu0 0
    %3161 = vmatpush1.bf16.msra.mxu0 0
    %3162 = vmatprep.subr.bf16.mxu0 0
    %3163 = vmatpush1.bf16.msra.mxu0 0
    %3164 = vmatprep.subr.bf16.mxu0 0
    %3165 = vmatpush1.bf16.msra.mxu0 0
    %3166 = vmatprep.subr.bf16.mxu0 0
    %3167 = vmatpush1.bf16.msra.mxu0 0
    %3168 = vmatprep.subr.bf16.mxu0 0
    %3169 = vmatpush1.bf16.msra.mxu0 0
    %3170 = vmatprep.subr.bf16.mxu0 0
    %3171 = vmatpush1.bf16.msra.mxu0 0
    %3172 = vmatprep.subr.bf16.mxu0 0
    %3173 = vmatpush1.bf16.msra.mxu0 0
    %3174 = vmatprep.subr.bf16.mxu0 0
    %3175 = vmatpush1.bf16.msra.mxu0 0
    %3176 = vmatprep.subr.bf16.mxu0 0
    %3177 = vmatpush1.bf16.msra.mxu0 0
    %3178 = vmatprep.subr.bf16.mxu0 0
    %3179 = vmatpush1.bf16.msra.mxu0 0
    %3180 = vmatprep.subr.bf16.mxu0 0
    %3181 = vmatpush1.bf16.msra.mxu0 0
    %3182 = vmatprep.subr.bf16.mxu0 0
    %3183 = vmatpush1.bf16.msra.mxu0 0
    %3184 = vmatprep.subr.bf16.mxu0 0
    %3185 = vmatpush1.bf16.msra.mxu0 0
    %3186 = vmatprep.subr.bf16.mxu0 0
    %3187 = vmatpush1.bf16.msra.mxu0 0
    %3188 = vmatprep.mubr.bf16.mxu0 0
    %3189 = vmatmul.mubr.bf16.gmra.mrb[0].mxu0 %v3154
    %v3190 = vpop.f32.mrb[0].mxu0
    %v3191 = vadd.f32 0.0, %v3190
    %v3192 = vpop.f32.mrb[0].mxu0
    %v3193 = vadd.f32 0.0, %v3192
    %v3194 = vpop.f32.mrb[0].mxu0
    %v3195 = vpop.f32.mrb[0].mxu0
    %3196 = vdwg.mxu0
    %3197 = vmatprep.subr.bf16.mxu0 %v2228
    %3198 = vmatpush1.bf16.msra.mxu0 %v2227
    %3199 = vmatprep.subr.bf16.mxu0 0
    %3200 = vmatpush1.bf16.msra.mxu0 0
    %3201 = vmatprep.subr.bf16.mxu0 0
    %3202 = vmatpush1.bf16.msra.mxu0 0
    %3203 = vmatprep.subr.bf16.mxu0 0
    %3204 = vmatpush1.bf16.msra.mxu0 0
    %3205 = vmatprep.subr.bf16.mxu0 0
    %3206 = vmatpush1.bf16.msra.mxu0 0
    %3207 = vmatprep.subr.bf16.mxu0 0
    %3208 = vmatpush1.bf16.msra.mxu0 0
    %3209 = vmatprep.subr.bf16.mxu0 0
    %3210 = vmatpush1.bf16.msra.mxu0 0
    %3211 = vmatprep.subr.bf16.mxu0 0
    %3212 = vmatpush1.bf16.msra.mxu0 0
    %3213 = vmatprep.subr.bf16.mxu0 0
    %3214 = vmatpush1.bf16.msra.mxu0 0
    %3215 = vmatprep.subr.bf16.mxu0 0
    %3216 = vmatpush1.bf16.msra.mxu0 0
    %3217 = vmatprep.subr.bf16.mxu0 0
    %3218 = vmatpush1.bf16.msra.mxu0 0
    %3219 = vmatprep.subr.bf16.mxu0 0
    %3220 = vmatpush1.bf16.msra.mxu0 0
    %3221 = vmatprep.subr.bf16.mxu0 0
    %3222 = vmatpush1.bf16.msra.mxu0 0
    %3223 = vmatprep.subr.bf16.mxu0 0
    %3224 = vmatpush1.bf16.msra.mxu0 0
    %3225 = vmatprep.subr.bf16.mxu0 0
    %3226 = vmatpush1.bf16.msra.mxu0 0
    %3227 = vmatprep.subr.bf16.mxu0 0
    %3228 = vmatpush1.bf16.msra.mxu0 0
    %3229 = vmatprep.mubr.bf16.mxu0 0
    %3230 = vmatmul.mubr.bf16.gmra.mrb[0].mxu0 %v3154
    %v3231 = vpop.f32.mrb[0].mxu0
    %v3232 = vadd.f32 0.0, %v3231
    %v3233 = vpop.f32.mrb[0].mxu0
    %v3234 = vadd.f32 0.0, %v3233
    %v3235 = vpop.f32.mrb[0].mxu0
    %v3236 = vpop.f32.mrb[0].mxu0
    %3237 = vdwg.mxu0
    %v3238 = vpack.c.bf16 %v3191, %v3191
    %v3239 = vpack.c.bf16 %v3193, %v3193
    %v3240 = vpack.c.bf16 %v3232, %v3232
    %v3241 = vpack.c.bf16 %v3234, %v3234
    %v3246 = vcombine.low %v3238, %v3239
    %v3247 = vcombine.low %v3240, %v3241
    %v3249 = vunpack.c.l.s4 1983009808
    %v3250 = vunpack.c.0.s8 %v3249
    %v3251 = vlaneseq
    %v3252 = vshrl.u32 %v3251, 7
    %v3253 = vsub.s32 %v3250, %v3252
    %v3254 = vrot.slane %v3246, %v3253
    %v3256 = vunpack.c.l.s4 1983009808
    %v3257 = vunpack.c.0.s8 %v3256
    %v3258 = vlaneseq
    %v3259 = vshrl.u32 %v3258, 7
    %v3260 = vsub.s32 %v3257, %v3259
    %v3261 = vrot.slane %v3247, %v3260
    %v3262 = vcombine.low %v3254, %v3261
    %v3263 = vunpack.c.l.b16 %v3262
    %v3264 = vunpack.c.h.b16 %v3262
    %v3265 = vpack.i.b16 %v3264, %v3263
    %v3266 = vunpack.c.l.b16 %v2345
    %v3267 = vunpack.c.h.b16 %v2345
    %v3268 = vpack.c.b16 %v3266, %v3266
    %v3269 = vpack.c.b16 %v3267, %v3267
    %v3272 = vunpack.c.l.b16 %v2460
    %v3273 = vunpack.c.h.b16 %v2460
    %v3274 = vpack.c.b16 %v3272, %v3272
    %v3275 = vpack.c.b16 %v3273, %v3273
    %v3278 = vunpack.c.l.b16 %v2575
    %v3279 = vunpack.c.h.b16 %v2575
    %v3280 = vpack.c.b16 %v3278, %v3278
    %v3281 = vpack.c.b16 %v3279, %v3279
    %v3284 = vunpack.c.l.b16 %v2690
    %v3285 = vunpack.c.h.b16 %v2690
    %v3286 = vpack.c.b16 %v3284, %v3284
    %v3287 = vpack.c.b16 %v3285, %v3285
    %v3290 = vunpack.c.l.b16 %v2805
    %v3291 = vunpack.c.h.b16 %v2805
    %v3292 = vpack.c.b16 %v3290, %v3290
    %v3293 = vpack.c.b16 %v3291, %v3291
    %v3296 = vunpack.c.l.b16 %v2920
    %v3297 = vunpack.c.h.b16 %v2920
    %v3298 = vpack.c.b16 %v3296, %v3296
    %v3299 = vpack.c.b16 %v3297, %v3297
    %v3302 = vunpack.c.l.b16 %v3035
    %v3303 = vunpack.c.h.b16 %v3035
    %v3304 = vpack.c.b16 %v3302, %v3302
    %v3305 = vpack.c.b16 %v3303, %v3303
    %v3308 = vunpack.c.l.b16 %v3150
    %v3309 = vunpack.c.h.b16 %v3150
    %v3310 = vpack.c.b16 %v3308, %v3308
    %v3311 = vpack.c.b16 %v3309, %v3309
    %v3314 = vunpack.c.l.b16 %v3265
    %v3315 = vunpack.c.h.b16 %v3265
    %v3316 = vpack.c.b16 %v3314, %v3314
    %v3317 = vpack.c.b16 %v3315, %v3315
    %v3320 = vld [vmem:[%s8] sm:$0xf]
    %v3321 = vld [vmem:[%s8 + $0x4] sm:$0xf]
    %v3322 = vld [vmem:[%s8 + $0x8] sm:$0xf]
    %v3323 = vld [vmem:[%s8 + $0xc] sm:$0xf]
    %v3324 = vld [vmem:[%s8 + $0x10] sm:$0xf]
    %v3325 = vld [vmem:[%s8 + $0x14] sm:$0xf]
    %v3326 = vld [vmem:[%s8 + $0x18] sm:$0xf]
    %v3327 = vld [vmem:[%s8 + $0x1c] sm:$0xf]
    %v3328 = vld [vmem:[%s8 + $0x20] sm:$0xf]
    %v3329 = vld [vmem:[%s8 + $0x24] sm:$0xf]
    %v3330 = vld [vmem:[%s8 + $0x28] sm:$0xf]
    %v3331 = vld [vmem:[%s8 + $0x2c] sm:$0xf]
    %v3332 = vld [vmem:[%s8 + $0x30] sm:$0xf]
    %v3333 = vld [vmem:[%s8 + $0x34] sm:$0xf]
    %v3334 = vld [vmem:[%s8 + $0x38] sm:$0xf]
    %v3335 = vld [vmem:[%s8 + $0x3c] sm:$0xf]
    %v3336 = vld [vmem:[%s8 + $0x40] sm:$0xf]
    %v3337 = vld [vmem:[%s8 + $0x44] sm:$0xf]
    %v3338 = vld [vmem:[%s8 + $0x48] sm:$0xf]
    %v3339 = vld [vmem:[%s8 + $0x4c] sm:$0xf]
    %v3340 = vld [vmem:[%s8 + $0x50] sm:$0xf]
    %v3341 = vld [vmem:[%s8 + $0x54] sm:$0xf]
    %v3342 = vld [vmem:[%s8 + $0x58] sm:$0xf]
    %v3343 = vld [vmem:[%s8 + $0x5c] sm:$0xf]
    %v3344 = vld [vmem:[%s8 + $0x60] sm:$0xf]
    %v3345 = vld [vmem:[%s8 + $0x64] sm:$0xf]
    %v3346 = vld [vmem:[%s8 + $0x68] sm:$0xf]
    %v3347 = vld [vmem:[%s8 + $0x6c] sm:$0xf]
    %v3348 = vld [vmem:[%s8 + $0x70] sm:$0xf]
    %v3349 = vld [vmem:[%s8 + $0x74] sm:$0xf]
    %v3350 = vld [vmem:[%s8 + $0x78] sm:$0xf]
    %v3351 = vld [vmem:[%s8 + $0x7c] sm:$0xf]
    %v3352 = vld [vmem:[%s8 + $0x80] sm:$0xf]
    %v3353 = vld [vmem:[%s8 + $0x84] sm:$0xf]
    %v3354 = vld [vmem:[%s8 + $0x88] sm:$0xf]
    %v3355 = vld [vmem:[%s8 + $0x8c] sm:$0xf]
    %v3356 = vld [vmem:[%s8 + $0x90] sm:$0xf]
    %v3357 = vld [vmem:[%s8 + $0x94] sm:$0xf]
    %v3358 = vld [vmem:[%s8 + $0x98] sm:$0xf]
    %v3359 = vld [vmem:[%s8 + $0x9c] sm:$0xf]
    %v3360 = vld [vmem:[%s8 + $0xa0] sm:$0xf]
    %v3361 = vld [vmem:[%s8 + $0xa4] sm:$0xf]
    %v3362 = vld [vmem:[%s8 + $0xa8] sm:$0xf]
    %v3363 = vld [vmem:[%s8 + $0xac] sm:$0xf]
    %v3364 = vld [vmem:[%s8 + $0xb0] sm:$0xf]
    %v3365 = vld [vmem:[%s8 + $0xb4] sm:$0xf]
    %v3366 = vld [vmem:[%s8 + $0xb8] sm:$0xf]
    %v3367 = vld [vmem:[%s8 + $0xbc] sm:$0xf]
    %v3368 = vld [vmem:[%s8 + $0xc0] sm:$0xf]
    %v3369 = vld [vmem:[%s8 + $0xc4] sm:$0xf]
    %v3370 = vld [vmem:[%s8 + $0xc8] sm:$0xf]
    %v3371 = vld [vmem:[%s8 + $0xcc] sm:$0xf]
    %v3372 = vld [vmem:[%s8 + $0xd0] sm:$0xf]
    %v3373 = vld [vmem:[%s8 + $0xd4] sm:$0xf]
    %v3374 = vld [vmem:[%s8 + $0xd8] sm:$0xf]
    %v3375 = vld [vmem:[%s8 + $0xdc] sm:$0xf]
    %v3376 = vld [vmem:[%s8 + $0xe0] sm:$0xf]
    %v3377 = vld [vmem:[%s8 + $0xe4] sm:$0xf]
    %v3378 = vld [vmem:[%s8 + $0xe8] sm:$0xf]
    %v3379 = vld [vmem:[%s8 + $0xec] sm:$0xf]
    %v3380 = vld [vmem:[%s8 + $0xf0] sm:$0xf]
    %v3381 = vld [vmem:[%s8 + $0xf4] sm:$0xf]
    %v3382 = vld [vmem:[%s8 + $0xf8] sm:$0xf]
    %v3383 = vld [vmem:[%s8 + $0xfc] sm:$0xf]
    %v3384 = vld [vmem:[%s8 + $0x100] sm:$0xf]
    %v3385 = vld [vmem:[%s8 + $0x104] sm:$0xf]
    %v3386 = vld [vmem:[%s8 + $0x108] sm:$0xf]
    %v3387 = vld [vmem:[%s8 + $0x10c] sm:$0xf]
    %v3388 = vld [vmem:[%s8 + $0x110] sm:$0xf]
    %v3389 = vld [vmem:[%s8 + $0x114] sm:$0xf]
    %v3390 = vld [vmem:[%s8 + $0x118] sm:$0xf]
    %v3391 = vld [vmem:[%s8 + $0x11c] sm:$0xf]
    %v3392 = vld [vmem:[%s8 + $0x120] sm:$0xf]
    %v3393 = vld [vmem:[%s8 + $0x124] sm:$0xf]
    %v3394 = vld [vmem:[%s8 + $0x128] sm:$0xf]
    %v3395 = vld [vmem:[%s8 + $0x12c] sm:$0xf]
    %v3396 = vld [vmem:[%s8 + $0x130] sm:$0xf]
    %v3397 = vld [vmem:[%s8 + $0x134] sm:$0xf]
    %v3398 = vld [vmem:[%s8 + $0x138] sm:$0xf]
    %v3399 = vld [vmem:[%s8 + $0x13c] sm:$0xf]
    %v3400 = vld [vmem:[%s8 + $0x140] sm:$0xf]
    %v3401 = vld [vmem:[%s8 + $0x144] sm:$0xf]
    %v3402 = vld [vmem:[%s8 + $0x148] sm:$0xf]
    %v3403 = vld [vmem:[%s8 + $0x14c] sm:$0xf]
    %v3404 = vld [vmem:[%s8 + $0x150] sm:$0xf]
    %v3405 = vld [vmem:[%s8 + $0x154] sm:$0xf]
    %v3406 = vld [vmem:[%s8 + $0x158] sm:$0xf]
    %v3407 = vld [vmem:[%s8 + $0x15c] sm:$0xf]
    %v3408 = vld [vmem:[%s8 + $0x160] sm:$0xf]
    %v3409 = vld [vmem:[%s8 + $0x164] sm:$0xf]
    %v3410 = vld [vmem:[%s8 + $0x168] sm:$0xf]
    %v3411 = vld [vmem:[%s8 + $0x16c] sm:$0xf]
    %v3412 = vld [vmem:[%s8 + $0x170] sm:$0xf]
    %v3413 = vld [vmem:[%s8 + $0x174] sm:$0xf]
    %v3414 = vld [vmem:[%s8 + $0x178] sm:$0xf]
    %v3415 = vld [vmem:[%s8 + $0x17c] sm:$0xf]
    %v3416 = vld [vmem:[%s8 + $0x180] sm:$0xf]
    %v3417 = vld [vmem:[%s8 + $0x184] sm:$0xf]
    %v3418 = vld [vmem:[%s8 + $0x188] sm:$0xf]
    %v3419 = vld [vmem:[%s8 + $0x18c] sm:$0xf]
    %v3420 = vld [vmem:[%s8 + $0x190] sm:$0xf]
    %v3421 = vld [vmem:[%s8 + $0x194] sm:$0xf]
    %v3422 = vld [vmem:[%s8 + $0x198] sm:$0xf]
    %v3423 = vld [vmem:[%s8 + $0x19c] sm:$0xf]
    %v3424 = vld [vmem:[%s8 + $0x1a0] sm:$0xf]
    %v3425 = vld [vmem:[%s8 + $0x1a4] sm:$0xf]
    %v3426 = vld [vmem:[%s8 + $0x1a8] sm:$0xf]
    %v3427 = vld [vmem:[%s8 + $0x1ac] sm:$0xf]
    %v3428 = vld [vmem:[%s8 + $0x1b0] sm:$0xf]
    %v3429 = vld [vmem:[%s8 + $0x1b4] sm:$0xf]
    %v3430 = vld [vmem:[%s8 + $0x1b8] sm:$0xf]
    %v3431 = vld [vmem:[%s8 + $0x1bc] sm:$0xf]
    %v3432 = vld [vmem:[%s8 + $0x1c0] sm:$0xf]
    %v3433 = vld [vmem:[%s8 + $0x1c4] sm:$0xf]
    %v3434 = vld [vmem:[%s8 + $0x1c8] sm:$0xf]
    %v3435 = vld [vmem:[%s8 + $0x1cc] sm:$0xf]
    %v3436 = vld [vmem:[%s8 + $0x1d0] sm:$0xf]
    %v3437 = vld [vmem:[%s8 + $0x1d4] sm:$0xf]
    %v3438 = vld [vmem:[%s8 + $0x1d8] sm:$0xf]
    %v3439 = vld [vmem:[%s8 + $0x1dc] sm:$0xf]
    %v3440 = vld [vmem:[%s8 + $0x1e0] sm:$0xf]
    %v3441 = vld [vmem:[%s8 + $0x1e4] sm:$0xf]
    %v3442 = vld [vmem:[%s8 + $0x1e8] sm:$0xf]
    %v3443 = vld [vmem:[%s8 + $0x1ec] sm:$0xf]
    %v3444 = vld [vmem:[%s8 + $0x1f0] sm:$0xf]
    %v3445 = vld [vmem:[%s8 + $0x1f4] sm:$0xf]
    %v3446 = vld [vmem:[%s8 + $0x1f8] sm:$0xf]
    %v3447 = vld [vmem:[%s8 + $0x1fc] sm:$0xf]
    %v3448 = vld [vmem:[%s8 + $0x200] sm:$0xf]
    %v3449 = vld [vmem:[%s8 + $0x204] sm:$0xf]
    %v3450 = vld [vmem:[%s8 + $0x208] sm:$0xf]
    %v3451 = vld [vmem:[%s8 + $0x20c] sm:$0xf]
    %v3452 = vld [vmem:[%s8 + $0x210] sm:$0xf]
    %v3453 = vld [vmem:[%s8 + $0x214] sm:$0xf]
    %v3454 = vld [vmem:[%s8 + $0x218] sm:$0xf]
    %v3455 = vld [vmem:[%s8 + $0x21c] sm:$0xf]
    %v3456 = vld [vmem:[%s8 + $0x220] sm:$0xf]
    %v3457 = vld [vmem:[%s8 + $0x224] sm:$0xf]
    %v3458 = vld [vmem:[%s8 + $0x228] sm:$0xf]
    %v3459 = vld [vmem:[%s8 + $0x22c] sm:$0xf]
    %v3460 = vld [vmem:[%s8 + $0x230] sm:$0xf]
    %v3461 = vld [vmem:[%s8 + $0x234] sm:$0xf]
    %v3462 = vld [vmem:[%s8 + $0x238] sm:$0xf]
    %v3463 = vld [vmem:[%s8 + $0x23c] sm:$0xf]
    %v3464 = vld [vmem:[%s8 + $0x240] sm:$0xf]
    %v3465 = vld [vmem:[%s8 + $0x244] sm:$0xf]
    %v3466 = vld [vmem:[%s8 + $0x248] sm:$0xf]
    %v3467 = vld [vmem:[%s8 + $0x24c] sm:$0xf]
    %v3468 = vld [vmem:[%s8 + $0x250] sm:$0xf]
    %v3469 = vld [vmem:[%s8 + $0x254] sm:$0xf]
    %v3470 = vld [vmem:[%s8 + $0x258] sm:$0xf]
    %v3471 = vld [vmem:[%s8 + $0x25c] sm:$0xf]
    %v3472 = vld [vmem:[%s8 + $0x260] sm:$0xf]
    %v3473 = vld [vmem:[%s8 + $0x264] sm:$0xf]
    %v3474 = vld [vmem:[%s8 + $0x268] sm:$0xf]
    %v3475 = vld [vmem:[%s8 + $0x26c] sm:$0xf]
    %v3476 = vld [vmem:[%s8 + $0x270] sm:$0xf]
    %v3477 = vld [vmem:[%s8 + $0x274] sm:$0xf]
    %v3478 = vld [vmem:[%s8 + $0x278] sm:$0xf]
    %v3479 = vld [vmem:[%s8 + $0x27c] sm:$0xf]
    %v3480 = vld [vmem:[%s8 + $0x280] sm:$0xf]
    %v3481 = vld [vmem:[%s8 + $0x284] sm:$0xf]
    %v3482 = vld [vmem:[%s8 + $0x288] sm:$0xf]
    %v3483 = vld [vmem:[%s8 + $0x28c] sm:$0xf]
    %v3484 = vld [vmem:[%s8 + $0x290] sm:$0xf]
    %v3485 = vld [vmem:[%s8 + $0x294] sm:$0xf]
    %v3486 = vld [vmem:[%s8 + $0x298] sm:$0xf]
    %v3487 = vld [vmem:[%s8 + $0x29c] sm:$0xf]
    %v3488 = vld [vmem:[%s8 + $0x2a0] sm:$0xf]
    %v3489 = vld [vmem:[%s8 + $0x2a4] sm:$0xf]
    %v3490 = vld [vmem:[%s8 + $0x2a8] sm:$0xf]
    %v3491 = vld [vmem:[%s8 + $0x2ac] sm:$0xf]
    %v3492 = vld [vmem:[%s8 + $0x2b0] sm:$0xf]
    %v3493 = vld [vmem:[%s8 + $0x2b4] sm:$0xf]
    %v3494 = vld [vmem:[%s8 + $0x2b8] sm:$0xf]
    %v3495 = vld [vmem:[%s8 + $0x2bc] sm:$0xf]
    %v3496 = vld [vmem:[%s8 + $0x2c0] sm:$0xf]
    %v3497 = vld [vmem:[%s8 + $0x2c4] sm:$0xf]
    %v3498 = vld [vmem:[%s8 + $0x2c8] sm:$0xf]
    %v3499 = vld [vmem:[%s8 + $0x2cc] sm:$0xf]
    %v3500 = vld [vmem:[%s8 + $0x2d0] sm:$0xf]
    %v3501 = vld [vmem:[%s8 + $0x2d4] sm:$0xf]
    %v3502 = vld [vmem:[%s8 + $0x2d8] sm:$0xf]
    %v3503 = vld [vmem:[%s8 + $0x2dc] sm:$0xf]
    %v3504 = vld [vmem:[%s8 + $0x2e0] sm:$0xf]
    %v3505 = vld [vmem:[%s8 + $0x2e4] sm:$0xf]
    %v3506 = vld [vmem:[%s8 + $0x2e8] sm:$0xf]
    %v3507 = vld [vmem:[%s8 + $0x2ec] sm:$0xf]
    %v3508 = vld [vmem:[%s8 + $0x2f0] sm:$0xf]
    %v3509 = vld [vmem:[%s8 + $0x2f4] sm:$0xf]
    %v3510 = vld [vmem:[%s8 + $0x2f8] sm:$0xf]
    %v3511 = vld [vmem:[%s8 + $0x2fc] sm:$0xf]
    %v3512 = vld [vmem:[%s8 + $0x300] sm:$0xf]
    %v3513 = vld [vmem:[%s8 + $0x304] sm:$0xf]
    %v3514 = vld [vmem:[%s8 + $0x308] sm:$0xf]
    %v3515 = vld [vmem:[%s8 + $0x30c] sm:$0xf]
    %v3516 = vld [vmem:[%s8 + $0x310] sm:$0xf]
    %v3517 = vld [vmem:[%s8 + $0x314] sm:$0xf]
    %v3518 = vld [vmem:[%s8 + $0x318] sm:$0xf]
    %v3519 = vld [vmem:[%s8 + $0x31c] sm:$0xf]
    %v3520 = vld [vmem:[%s8 + $0x320] sm:$0xf]
    %v3521 = vld [vmem:[%s8 + $0x324] sm:$0xf]
    %v3522 = vld [vmem:[%s8 + $0x328] sm:$0xf]
    %v3523 = vld [vmem:[%s8 + $0x32c] sm:$0xf]
    %v3524 = vld [vmem:[%s8 + $0x330] sm:$0xf]
    %v3525 = vld [vmem:[%s8 + $0x334] sm:$0xf]
    %v3526 = vld [vmem:[%s8 + $0x338] sm:$0xf]
    %v3527 = vld [vmem:[%s8 + $0x33c] sm:$0xf]
    %v3528 = vld [vmem:[%s8 + $0x340] sm:$0xf]
    %v3529 = vld [vmem:[%s8 + $0x344] sm:$0xf]
    %v3530 = vld [vmem:[%s8 + $0x348] sm:$0xf]
    %v3531 = vld [vmem:[%s8 + $0x34c] sm:$0xf]
    %v3532 = vld [vmem:[%s8 + $0x350] sm:$0xf]
    %v3533 = vld [vmem:[%s8 + $0x354] sm:$0xf]
    %v3534 = vld [vmem:[%s8 + $0x358] sm:$0xf]
    %v3535 = vld [vmem:[%s8 + $0x35c] sm:$0xf]
    %v3536 = vld [vmem:[%s8 + $0x360] sm:$0xf]
    %v3537 = vld [vmem:[%s8 + $0x364] sm:$0xf]
    %v3538 = vld [vmem:[%s8 + $0x368] sm:$0xf]
    %v3539 = vld [vmem:[%s8 + $0x36c] sm:$0xf]
    %v3540 = vld [vmem:[%s8 + $0x370] sm:$0xf]
    %v3541 = vld [vmem:[%s8 + $0x374] sm:$0xf]
    %v3542 = vld [vmem:[%s8 + $0x378] sm:$0xf]
    %v3543 = vld [vmem:[%s8 + $0x37c] sm:$0xf]
    %v3544 = vld [vmem:[%s8 + $0x380] sm:$0xf]
    %v3545 = vld [vmem:[%s8 + $0x384] sm:$0xf]
    %v3546 = vld [vmem:[%s8 + $0x388] sm:$0xf]
    %v3547 = vld [vmem:[%s8 + $0x38c] sm:$0xf]
    %v3548 = vld [vmem:[%s8 + $0x390] sm:$0xf]
    %v3549 = vld [vmem:[%s8 + $0x394] sm:$0xf]
    %v3550 = vld [vmem:[%s8 + $0x398] sm:$0xf]
    %v3551 = vld [vmem:[%s8 + $0x39c] sm:$0xf]
    %v3552 = vld [vmem:[%s8 + $0x3a0] sm:$0xf]
    %v3553 = vld [vmem:[%s8 + $0x3a4] sm:$0xf]
    %v3554 = vld [vmem:[%s8 + $0x3a8] sm:$0xf]
    %v3555 = vld [vmem:[%s8 + $0x3ac] sm:$0xf]
    %v3556 = vld [vmem:[%s8 + $0x3b0] sm:$0xf]
    %v3557 = vld [vmem:[%s8 + $0x3b4] sm:$0xf]
    %v3558 = vld [vmem:[%s8 + $0x3b8] sm:$0xf]
    %v3559 = vld [vmem:[%s8 + $0x3bc] sm:$0xf]
    %v3560 = vld [vmem:[%s8 + $0x3c0] sm:$0xf]
    %v3561 = vld [vmem:[%s8 + $0x3c4] sm:$0xf]
    %v3562 = vld [vmem:[%s8 + $0x3c8] sm:$0xf]
    %v3563 = vld [vmem:[%s8 + $0x3cc] sm:$0xf]
    %v3564 = vld [vmem:[%s8 + $0x3d0] sm:$0xf]
    %v3565 = vld [vmem:[%s8 + $0x3d4] sm:$0xf]
    %v3566 = vld [vmem:[%s8 + $0x3d8] sm:$0xf]
    %v3567 = vld [vmem:[%s8 + $0x3dc] sm:$0xf]
    %v3568 = vld [vmem:[%s8 + $0x3e0] sm:$0xf]
    %v3569 = vld [vmem:[%s8 + $0x3e4] sm:$0xf]
    %v3570 = vld [vmem:[%s8 + $0x3e8] sm:$0xf]
    %v3571 = vld [vmem:[%s8 + $0x3ec] sm:$0xf]
    %v3572 = vld [vmem:[%s8 + $0x3f0] sm:$0xf]
    %v3573 = vld [vmem:[%s8 + $0x3f4] sm:$0xf]
    %v3574 = vld [vmem:[%s8 + $0x3f8] sm:$0xf]
    %v3575 = vld [vmem:[%s8 + $0x3fc] sm:$0xf]
    %v3576 = vld [vmem:[%s8 + $0x400] sm:$0xf]
    %v3577 = vld [vmem:[%s8 + $0x404] sm:$0xf]
    %v3578 = vld [vmem:[%s8 + $0x408] sm:$0xf]
    %v3579 = vld [vmem:[%s8 + $0x40c] sm:$0xf]
    %v3580 = vld [vmem:[%s8 + $0x410] sm:$0xf]
    %v3581 = vld [vmem:[%s8 + $0x414] sm:$0xf]
    %v3582 = vld [vmem:[%s8 + $0x418] sm:$0xf]
    %v3583 = vld [vmem:[%s8 + $0x41c] sm:$0xf]
    %v3584 = vld [vmem:[%s8 + $0x420] sm:$0xf]
    %v3585 = vld [vmem:[%s8 + $0x424] sm:$0xf]
    %v3586 = vld [vmem:[%s8 + $0x428] sm:$0xf]
    %v3587 = vld [vmem:[%s8 + $0x42c] sm:$0xf]
    %v3588 = vld [vmem:[%s8 + $0x430] sm:$0xf]
    %v3589 = vld [vmem:[%s8 + $0x434] sm:$0xf]
    %v3590 = vld [vmem:[%s8 + $0x438] sm:$0xf]
    %v3591 = vld [vmem:[%s8 + $0x43c] sm:$0xf]
    %v3592 = vld [vmem:[%s8 + $0x440] sm:$0xf]
    %v3593 = vld [vmem:[%s8 + $0x444] sm:$0xf]
    %v3594 = vld [vmem:[%s8 + $0x448] sm:$0xf]
    %v3595 = vld [vmem:[%s8 + $0x44c] sm:$0xf]
    %v3596 = vld [vmem:[%s8 + $0x450] sm:$0xf]
    %v3597 = vld [vmem:[%s8 + $0x454] sm:$0xf]
    %v3598 = vld [vmem:[%s8 + $0x458] sm:$0xf]
    %v3599 = vld [vmem:[%s8 + $0x45c] sm:$0xf]
    %v3600 = vld [vmem:[%s8 + $0x460] sm:$0xf]
    %v3601 = vld [vmem:[%s8 + $0x464] sm:$0xf]
    %v3602 = vld [vmem:[%s8 + $0x468] sm:$0xf]
    %v3603 = vld [vmem:[%s8 + $0x46c] sm:$0xf]
    %v3604 = vld [vmem:[%s8 + $0x470] sm:$0xf]
    %v3605 = vld [vmem:[%s8 + $0x474] sm:$0xf]
    %v3606 = vld [vmem:[%s8 + $0x478] sm:$0xf]
    %v3607 = vld [vmem:[%s8 + $0x47c] sm:$0xf]
    %v3608 = vld [vmem:[%s9] sm:$0x1]
    %v3610 = vlaneseq
    %v3611 = vshrl.u32 %v3610, 7
    %v3612 = vsub.s32 0, %v3611
    %v3613 = vrot.slane %v3608, %v3612
    %v3903 = vunpack.c.l.b16 %v3320
    %v3904 = vunpack.c.l.b16 %v3321
    %v3905 = vunpack.c.l.b16 %v3322
    %v3906 = vunpack.c.l.b16 %v3323
    %v3907 = vunpack.c.l.b16 %v3324
    %v3908 = vunpack.c.l.b16 %v3325
    %v3909 = vunpack.c.l.b16 %v3326
    %v3910 = vunpack.c.l.b16 %v3327
    %v3911 = vunpack.c.l.b16 %v3328
    %v3912 = vunpack.c.l.b16 %v3329
    %v3913 = vunpack.c.l.b16 %v3330
    %v3914 = vunpack.c.l.b16 %v3331
    %v3915 = vunpack.c.l.b16 %v3332
    %v3916 = vunpack.c.l.b16 %v3333
    %v3917 = vunpack.c.l.b16 %v3334
    %v3918 = vunpack.c.l.b16 %v3335
    %v3919 = vunpack.c.l.b16 %v3336
    %v3920 = vunpack.c.l.b16 %v3337
    %v3921 = vunpack.c.l.b16 %v3338
    %v3922 = vunpack.c.l.b16 %v3339
    %v3923 = vunpack.c.l.b16 %v3340
    %v3924 = vunpack.c.l.b16 %v3341
    %v3925 = vunpack.c.l.b16 %v3342
    %v3926 = vunpack.c.l.b16 %v3343
    %v3927 = vunpack.c.l.b16 %v3344
    %v3928 = vunpack.c.l.b16 %v3345
    %v3929 = vunpack.c.l.b16 %v3346
    %v3930 = vunpack.c.l.b16 %v3347
    %v3931 = vunpack.c.l.b16 %v3348
    %v3932 = vunpack.c.l.b16 %v3349
    %v3933 = vunpack.c.l.b16 %v3350
    %v3934 = vunpack.c.l.b16 %v3351
    %v3935 = vunpack.c.l.b16 %v3352
    %v3936 = vunpack.c.l.b16 %v3353
    %v3937 = vunpack.c.l.b16 %v3354
    %v3938 = vunpack.c.l.b16 %v3355
    %v3939 = vunpack.c.l.b16 %v3356
    %v3940 = vunpack.c.l.b16 %v3357
    %v3941 = vunpack.c.l.b16 %v3358
    %v3942 = vunpack.c.l.b16 %v3359
    %v3943 = vunpack.c.l.b16 %v3360
    %v3944 = vunpack.c.l.b16 %v3361
    %v3945 = vunpack.c.l.b16 %v3362
    %v3946 = vunpack.c.l.b16 %v3363
    %v3947 = vunpack.c.l.b16 %v3364
    %v3948 = vunpack.c.l.b16 %v3365
    %v3949 = vunpack.c.l.b16 %v3366
    %v3950 = vunpack.c.l.b16 %v3367
    %v3951 = vunpack.c.l.b16 %v3368
    %v3952 = vunpack.c.l.b16 %v3369
    %v3953 = vunpack.c.l.b16 %v3370
    %v3954 = vunpack.c.l.b16 %v3371
    %v3955 = vunpack.c.l.b16 %v3372
    %v3956 = vunpack.c.l.b16 %v3373
    %v3957 = vunpack.c.l.b16 %v3374
    %v3958 = vunpack.c.l.b16 %v3375
    %v3959 = vunpack.c.l.b16 %v3376
    %v3960 = vunpack.c.l.b16 %v3377
    %v3961 = vunpack.c.l.b16 %v3378
    %v3962 = vunpack.c.l.b16 %v3379
    %v3963 = vunpack.c.l.b16 %v3380
    %v3964 = vunpack.c.l.b16 %v3381
    %v3965 = vunpack.c.l.b16 %v3382
    %v3966 = vunpack.c.l.b16 %v3383
    %v3967 = vunpack.c.l.b16 %v3384
    %v3968 = vunpack.c.l.b16 %v3385
    %v3969 = vunpack.c.l.b16 %v3386
    %v3970 = vunpack.c.l.b16 %v3387
    %v3971 = vunpack.c.l.b16 %v3388
    %v3972 = vunpack.c.l.b16 %v3389
    %v3973 = vunpack.c.l.b16 %v3390
    %v3974 = vunpack.c.l.b16 %v3391
    %v3975 = vunpack.c.l.b16 %v3392
    %v3976 = vunpack.c.l.b16 %v3393
    %v3977 = vunpack.c.l.b16 %v3394
    %v3978 = vunpack.c.l.b16 %v3395
    %v3979 = vunpack.c.l.b16 %v3396
    %v3980 = vunpack.c.l.b16 %v3397
    %v3981 = vunpack.c.l.b16 %v3398
    %v3982 = vunpack.c.l.b16 %v3399
    %v3983 = vunpack.c.l.b16 %v3400
    %v3984 = vunpack.c.l.b16 %v3401
    %v3985 = vunpack.c.l.b16 %v3402
    %v3986 = vunpack.c.l.b16 %v3403
    %v3987 = vunpack.c.l.b16 %v3404
    %v3988 = vunpack.c.l.b16 %v3405
    %v3989 = vunpack.c.l.b16 %v3406
    %v3990 = vunpack.c.l.b16 %v3407
    %v3991 = vunpack.c.l.b16 %v3408
    %v3992 = vunpack.c.l.b16 %v3409
    %v3993 = vunpack.c.l.b16 %v3410
    %v3994 = vunpack.c.l.b16 %v3411
    %v3995 = vunpack.c.l.b16 %v3412
    %v3996 = vunpack.c.l.b16 %v3413
    %v3997 = vunpack.c.l.b16 %v3414
    %v3998 = vunpack.c.l.b16 %v3415
    %v3999 = vunpack.c.l.b16 %v3416
    %v4000 = vunpack.c.l.b16 %v3417
    %v4001 = vunpack.c.l.b16 %v3418
    %v4002 = vunpack.c.l.b16 %v3419
    %v4003 = vunpack.c.l.b16 %v3420
    %v4004 = vunpack.c.l.b16 %v3421
    %v4005 = vunpack.c.l.b16 %v3422
    %v4006 = vunpack.c.l.b16 %v3423
    %v4007 = vunpack.c.l.b16 %v3424
    %v4008 = vunpack.c.l.b16 %v3425
    %v4009 = vunpack.c.l.b16 %v3426
    %v4010 = vunpack.c.l.b16 %v3427
    %v4011 = vunpack.c.l.b16 %v3428
    %v4012 = vunpack.c.l.b16 %v3429
    %v4013 = vunpack.c.l.b16 %v3430
    %v4014 = vunpack.c.l.b16 %v3431
    %v4015 = vunpack.c.l.b16 %v3432
    %v4016 = vunpack.c.l.b16 %v3433
    %v4017 = vunpack.c.l.b16 %v3434
    %v4018 = vunpack.c.l.b16 %v3435
    %v4019 = vunpack.c.l.b16 %v3436
    %v4020 = vunpack.c.l.b16 %v3437
    %v4021 = vunpack.c.l.b16 %v3438
    %v4022 = vunpack.c.l.b16 %v3439
    %v4023 = vunpack.c.l.b16 %v3440
    %v4024 = vunpack.c.l.b16 %v3441
    %v4025 = vunpack.c.l.b16 %v3442
    %v4026 = vunpack.c.l.b16 %v3443
    %v4027 = vunpack.c.l.b16 %v3444
    %v4028 = vunpack.c.l.b16 %v3445
    %v4029 = vunpack.c.l.b16 %v3446
    %v4030 = vunpack.c.l.b16 %v3447
    %v4031 = vunpack.c.l.b16 %v3448
    %v4032 = vunpack.c.l.b16 %v3449
    %v4033 = vunpack.c.l.b16 %v3450
    %v4034 = vunpack.c.l.b16 %v3451
    %v4035 = vunpack.c.l.b16 %v3452
    %v4036 = vunpack.c.l.b16 %v3453
    %v4037 = vunpack.c.l.b16 %v3454
    %v4038 = vunpack.c.l.b16 %v3455
    %v4039 = vunpack.c.l.b16 %v3456
    %v4040 = vunpack.c.l.b16 %v3457
    %v4041 = vunpack.c.l.b16 %v3458
    %v4042 = vunpack.c.l.b16 %v3459
    %v4043 = vunpack.c.l.b16 %v3460
    %v4044 = vunpack.c.l.b16 %v3461
    %v4045 = vunpack.c.l.b16 %v3462
    %v4046 = vunpack.c.l.b16 %v3463
    %v4047 = vunpack.c.l.b16 %v3464
    %v4048 = vunpack.c.l.b16 %v3465
    %v4049 = vunpack.c.l.b16 %v3466
    %v4050 = vunpack.c.l.b16 %v3467
    %v4051 = vunpack.c.l.b16 %v3468
    %v4052 = vunpack.c.l.b16 %v3469
    %v4053 = vunpack.c.l.b16 %v3470
    %v4054 = vunpack.c.l.b16 %v3471
    %v4055 = vunpack.c.l.b16 %v3472
    %v4056 = vunpack.c.l.b16 %v3473
    %v4057 = vunpack.c.l.b16 %v3474
    %v4058 = vunpack.c.l.b16 %v3475
    %v4059 = vunpack.c.l.b16 %v3476
    %v4060 = vunpack.c.l.b16 %v3477
    %v4061 = vunpack.c.l.b16 %v3478
    %v4062 = vunpack.c.l.b16 %v3479
    %v4063 = vunpack.c.l.b16 %v3480
    %v4064 = vunpack.c.l.b16 %v3481
    %v4065 = vunpack.c.l.b16 %v3482
    %v4066 = vunpack.c.l.b16 %v3483
    %v4067 = vunpack.c.l.b16 %v3484
    %v4068 = vunpack.c.l.b16 %v3485
    %v4069 = vunpack.c.l.b16 %v3486
    %v4070 = vunpack.c.l.b16 %v3487
    %v4071 = vunpack.c.l.b16 %v3488
    %v4072 = vunpack.c.l.b16 %v3489
    %v4073 = vunpack.c.l.b16 %v3490
    %v4074 = vunpack.c.l.b16 %v3491
    %v4075 = vunpack.c.l.b16 %v3492
    %v4076 = vunpack.c.l.b16 %v3493
    %v4077 = vunpack.c.l.b16 %v3494
    %v4078 = vunpack.c.l.b16 %v3495
    %v4079 = vunpack.c.l.b16 %v3496
    %v4080 = vunpack.c.l.b16 %v3497
    %v4081 = vunpack.c.l.b16 %v3498
    %v4082 = vunpack.c.l.b16 %v3499
    %v4083 = vunpack.c.l.b16 %v3500
    %v4084 = vunpack.c.l.b16 %v3501
    %v4085 = vunpack.c.l.b16 %v3502
    %v4086 = vunpack.c.l.b16 %v3503
    %v4087 = vunpack.c.l.b16 %v3504
    %v4088 = vunpack.c.l.b16 %v3505
    %v4089 = vunpack.c.l.b16 %v3506
    %v4090 = vunpack.c.l.b16 %v3507
    %v4091 = vunpack.c.l.b16 %v3508
    %v4092 = vunpack.c.l.b16 %v3509
    %v4093 = vunpack.c.l.b16 %v3510
    %v4094 = vunpack.c.l.b16 %v3511
    %v4095 = vunpack.c.l.b16 %v3512
    %v4096 = vunpack.c.l.b16 %v3513
    %v4097 = vunpack.c.l.b16 %v3514
    %v4098 = vunpack.c.l.b16 %v3515
    %v4099 = vunpack.c.l.b16 %v3516
    %v4100 = vunpack.c.l.b16 %v3517
    %v4101 = vunpack.c.l.b16 %v3518
    %v4102 = vunpack.c.l.b16 %v3519
    %v4103 = vunpack.c.l.b16 %v3520
    %v4104 = vunpack.c.l.b16 %v3521
    %v4105 = vunpack.c.l.b16 %v3522
    %v4106 = vunpack.c.l.b16 %v3523
    %v4107 = vunpack.c.l.b16 %v3524
    %v4108 = vunpack.c.l.b16 %v3525
    %v4109 = vunpack.c.l.b16 %v3526
    %v4110 = vunpack.c.l.b16 %v3527
    %v4111 = vunpack.c.l.b16 %v3528
    %v4112 = vunpack.c.l.b16 %v3529
    %v4113 = vunpack.c.l.b16 %v3530
    %v4114 = vunpack.c.l.b16 %v3531
    %v4115 = vunpack.c.l.b16 %v3532
    %v4116 = vunpack.c.l.b16 %v3533
    %v4117 = vunpack.c.l.b16 %v3534
    %v4118 = vunpack.c.l.b16 %v3535
    %v4119 = vunpack.c.l.b16 %v3536
    %v4120 = vunpack.c.l.b16 %v3537
    %v4121 = vunpack.c.l.b16 %v3538
    %v4122 = vunpack.c.l.b16 %v3539
    %v4123 = vunpack.c.l.b16 %v3540
    %v4124 = vunpack.c.l.b16 %v3541
    %v4125 = vunpack.c.l.b16 %v3542
    %v4126 = vunpack.c.l.b16 %v3543
    %v4127 = vunpack.c.l.b16 %v3544
    %v4128 = vunpack.c.l.b16 %v3545
    %v4129 = vunpack.c.l.b16 %v3546
    %v4130 = vunpack.c.l.b16 %v3547
    %v4131 = vunpack.c.l.b16 %v3548
    %v4132 = vunpack.c.l.b16 %v3549
    %v4133 = vunpack.c.l.b16 %v3550
    %v4134 = vunpack.c.l.b16 %v3551
    %v4135 = vunpack.c.l.b16 %v3552
    %v4136 = vunpack.c.l.b16 %v3553
    %v4137 = vunpack.c.l.b16 %v3554
    %v4138 = vunpack.c.l.b16 %v3555
    %v4139 = vunpack.c.l.b16 %v3556
    %v4140 = vunpack.c.l.b16 %v3557
    %v4141 = vunpack.c.l.b16 %v3558
    %v4142 = vunpack.c.l.b16 %v3559
    %v4143 = vunpack.c.l.b16 %v3560
    %v4144 = vunpack.c.l.b16 %v3561
    %v4145 = vunpack.c.l.b16 %v3562
    %v4146 = vunpack.c.l.b16 %v3563
    %v4147 = vunpack.c.l.b16 %v3564
    %v4148 = vunpack.c.l.b16 %v3565
    %v4149 = vunpack.c.l.b16 %v3566
    %v4150 = vunpack.c.l.b16 %v3567
    %v4151 = vunpack.c.l.b16 %v3568
    %v4152 = vunpack.c.l.b16 %v3569
    %v4153 = vunpack.c.l.b16 %v3570
    %v4154 = vunpack.c.l.b16 %v3571
    %v4155 = vunpack.c.l.b16 %v3572
    %v4156 = vunpack.c.l.b16 %v3573
    %v4157 = vunpack.c.l.b16 %v3574
    %v4158 = vunpack.c.l.b16 %v3575
    %v4159 = vunpack.c.l.b16 %v3576
    %v4160 = vunpack.c.l.b16 %v3577
    %v4161 = vunpack.c.l.b16 %v3578
    %v4162 = vunpack.c.l.b16 %v3579
    %v4163 = vunpack.c.l.b16 %v3580
    %v4164 = vunpack.c.l.b16 %v3581
    %v4165 = vunpack.c.l.b16 %v3582
    %v4166 = vunpack.c.l.b16 %v3583
    %v4167 = vunpack.c.l.b16 %v3584
    %v4168 = vunpack.c.l.b16 %v3585
    %v4169 = vunpack.c.l.b16 %v3586
    %v4170 = vunpack.c.l.b16 %v3587
    %v4171 = vunpack.c.l.b16 %v3588
    %v4172 = vunpack.c.l.b16 %v3589
    %v4173 = vunpack.c.l.b16 %v3590
    %v4174 = vunpack.c.l.b16 %v3591
    %v4175 = vunpack.c.l.b16 %v3592
    %v4176 = vunpack.c.l.b16 %v3593
    %v4177 = vunpack.c.l.b16 %v3594
    %v4178 = vunpack.c.l.b16 %v3595
    %v4179 = vunpack.c.l.b16 %v3596
    %v4180 = vunpack.c.l.b16 %v3597
    %v4181 = vunpack.c.l.b16 %v3598
    %v4182 = vunpack.c.l.b16 %v3599
    %v4183 = vunpack.c.l.b16 %v3600
    %v4184 = vunpack.c.l.b16 %v3601
    %v4185 = vunpack.c.l.b16 %v3602
    %v4186 = vunpack.c.l.b16 %v3603
    %v4187 = vunpack.c.l.b16 %v3604
    %v4188 = vunpack.c.l.b16 %v3605
    %v4189 = vunpack.c.l.b16 %v3606
    %v4190 = vunpack.c.l.b16 %v3607
    %v4191 = vpack.c.b16 %v3904, %v3903
    %v4192 = vpack.c.b16 %v3906, %v3905
    %v4193 = vpack.c.b16 %v3908, %v3907
    %v4194 = vpack.c.b16 %v3910, %v3909
    %v4195 = vpack.c.b16 %v3912, %v3911
    %v4196 = vpack.c.b16 %v3914, %v3913
    %v4197 = vpack.c.b16 %v3916, %v3915
    %v4198 = vpack.c.b16 %v3918, %v3917
    %v4199 = vpack.c.b16 %v3920, %v3919
    %v4200 = vpack.c.b16 %v3922, %v3921
    %v4201 = vpack.c.b16 %v3924, %v3923
    %v4202 = vpack.c.b16 %v3926, %v3925
    %v4203 = vpack.c.b16 %v3928, %v3927
    %v4204 = vpack.c.b16 %v3930, %v3929
    %v4205 = vpack.c.b16 %v3932, %v3931
    %v4206 = vpack.c.b16 %v3934, %v3933
    %v4207 = vpack.c.b16 %v3936, %v3935
    %v4208 = vpack.c.b16 %v3938, %v3937
    %v4209 = vpack.c.b16 %v3940, %v3939
    %v4210 = vpack.c.b16 %v3942, %v3941
    %v4211 = vpack.c.b16 %v3944, %v3943
    %v4212 = vpack.c.b16 %v3946, %v3945
    %v4213 = vpack.c.b16 %v3948, %v3947
    %v4214 = vpack.c.b16 %v3950, %v3949
    %v4215 = vpack.c.b16 %v3952, %v3951
    %v4216 = vpack.c.b16 %v3954, %v3953
    %v4217 = vpack.c.b16 %v3956, %v3955
    %v4218 = vpack.c.b16 %v3958, %v3957
    %v4219 = vpack.c.b16 %v3960, %v3959
    %v4220 = vpack.c.b16 %v3962, %v3961
    %v4221 = vpack.c.b16 %v3964, %v3963
    %v4222 = vpack.c.b16 %v3966, %v3965
    %v4223 = vpack.c.b16 %v3968, %v3967
    %v4224 = vpack.c.b16 %v3970, %v3969
    %v4225 = vpack.c.b16 %v3972, %v3971
    %v4226 = vpack.c.b16 %v3974, %v3973
    %v4227 = vpack.c.b16 %v3976, %v3975
    %v4228 = vpack.c.b16 %v3978, %v3977
    %v4229 = vpack.c.b16 %v3980, %v3979
    %v4230 = vpack.c.b16 %v3982, %v3981
    %v4231 = vpack.c.b16 %v3984, %v3983
    %v4232 = vpack.c.b16 %v3986, %v3985
    %v4233 = vpack.c.b16 %v3988, %v3987
    %v4234 = vpack.c.b16 %v3990, %v3989
    %v4235 = vpack.c.b16 %v3992, %v3991
    %v4236 = vpack.c.b16 %v3994, %v3993
    %v4237 = vpack.c.b16 %v3996, %v3995
    %v4238 = vpack.c.b16 %v3998, %v3997
    %v4239 = vpack.c.b16 %v4000, %v3999
    %v4240 = vpack.c.b16 %v4002, %v4001
    %v4241 = vpack.c.b16 %v4004, %v4003
    %v4242 = vpack.c.b16 %v4006, %v4005
    %v4243 = vpack.c.b16 %v4008, %v4007
    %v4244 = vpack.c.b16 %v4010, %v4009
    %v4245 = vpack.c.b16 %v4012, %v4011
    %v4246 = vpack.c.b16 %v4014, %v4013
    %v4247 = vpack.c.b16 %v4016, %v4015
    %v4248 = vpack.c.b16 %v4018, %v4017
    %v4249 = vpack.c.b16 %v4020, %v4019
    %v4250 = vpack.c.b16 %v4022, %v4021
    %v4251 = vpack.c.b16 %v4024, %v4023
    %v4252 = vpack.c.b16 %v4026, %v4025
    %v4253 = vpack.c.b16 %v4028, %v4027
    %v4254 = vpack.c.b16 %v4030, %v4029
    %v4255 = vpack.c.b16 %v4032, %v4031
    %v4256 = vpack.c.b16 %v4034, %v4033
    %v4257 = vpack.c.b16 %v4036, %v4035
    %v4258 = vpack.c.b16 %v4038, %v4037
    %v4259 = vpack.c.b16 %v4040, %v4039
    %v4260 = vpack.c.b16 %v4042, %v4041
    %v4261 = vpack.c.b16 %v4044, %v4043
    %v4262 = vpack.c.b16 %v4046, %v4045
    %v4263 = vpack.c.b16 %v4048, %v4047
    %v4264 = vpack.c.b16 %v4050, %v4049
    %v4265 = vpack.c.b16 %v4052, %v4051
    %v4266 = vpack.c.b16 %v4054, %v4053
    %v4267 = vpack.c.b16 %v4056, %v4055
    %v4268 = vpack.c.b16 %v4058, %v4057
    %v4269 = vpack.c.b16 %v4060, %v4059
    %v4270 = vpack.c.b16 %v4062, %v4061
    %v4271 = vpack.c.b16 %v4064, %v4063
    %v4272 = vpack.c.b16 %v4066, %v4065
    %v4273 = vpack.c.b16 %v4068, %v4067
    %v4274 = vpack.c.b16 %v4070, %v4069
    %v4275 = vpack.c.b16 %v4072, %v4071
    %v4276 = vpack.c.b16 %v4074, %v4073
    %v4277 = vpack.c.b16 %v4076, %v4075
    %v4278 = vpack.c.b16 %v4078, %v4077
    %v4279 = vpack.c.b16 %v4080, %v4079
    %v4280 = vpack.c.b16 %v4082, %v4081
    %v4281 = vpack.c.b16 %v4084, %v4083
    %v4282 = vpack.c.b16 %v4086, %v4085
    %v4283 = vpack.c.b16 %v4088, %v4087
    %v4284 = vpack.c.b16 %v4090, %v4089
    %v4285 = vpack.c.b16 %v4092, %v4091
    %v4286 = vpack.c.b16 %v4094, %v4093
    %v4287 = vpack.c.b16 %v4096, %v4095
    %v4288 = vpack.c.b16 %v4098, %v4097
    %v4289 = vpack.c.b16 %v4100, %v4099
    %v4290 = vpack.c.b16 %v4102, %v4101
    %v4291 = vpack.c.b16 %v4104, %v4103
    %v4292 = vpack.c.b16 %v4106, %v4105
    %v4293 = vpack.c.b16 %v4108, %v4107
    %v4294 = vpack.c.b16 %v4110, %v4109
    %v4295 = vpack.c.b16 %v4112, %v4111
    %v4296 = vpack.c.b16 %v4114, %v4113
    %v4297 = vpack.c.b16 %v4116, %v4115
    %v4298 = vpack.c.b16 %v4118, %v4117
    %v4299 = vpack.c.b16 %v4120, %v4119
    %v4300 = vpack.c.b16 %v4122, %v4121
    %v4301 = vpack.c.b16 %v4124, %v4123
    %v4302 = vpack.c.b16 %v4126, %v4125
    %v4303 = vpack.c.b16 %v4128, %v4127
    %v4304 = vpack.c.b16 %v4130, %v4129
    %v4305 = vpack.c.b16 %v4132, %v4131
    %v4306 = vpack.c.b16 %v4134, %v4133
    %v4307 = vpack.c.b16 %v4136, %v4135
    %v4308 = vpack.c.b16 %v4138, %v4137
    %v4309 = vpack.c.b16 %v4140, %v4139
    %v4310 = vpack.c.b16 %v4142, %v4141
    %v4311 = vpack.c.b16 %v4144, %v4143
    %v4312 = vpack.c.b16 %v4146, %v4145
    %v4313 = vpack.c.b16 %v4148, %v4147
    %v4314 = vpack.c.b16 %v4150, %v4149
    %v4315 = vpack.c.b16 %v4152, %v4151
    %v4316 = vpack.c.b16 %v4154, %v4153
    %v4317 = vpack.c.b16 %v4156, %v4155
    %v4318 = vpack.c.b16 %v4158, %v4157
    %v4319 = vpack.c.b16 %v4160, %v4159
    %v4320 = vpack.c.b16 %v4162, %v4161
    %v4321 = vpack.c.b16 %v4164, %v4163
    %v4322 = vpack.c.b16 %v4166, %v4165
    %v4323 = vpack.c.b16 %v4168, %v4167
    %v4324 = vpack.c.b16 %v4170, %v4169
    %v4325 = vpack.c.b16 %v4172, %v4171
    %v4326 = vpack.c.b16 %v4174, %v4173
    %v4327 = vpack.c.b16 %v4176, %v4175
    %v4328 = vpack.c.b16 %v4178, %v4177
    %v4329 = vpack.c.b16 %v4180, %v4179
    %v4330 = vpack.c.b16 %v4182, %v4181
    %v4331 = vpack.c.b16 %v4184, %v4183
    %v4332 = vpack.c.b16 %v4186, %v4185
    %v4333 = vpack.c.b16 %v4188, %v4187
    %v4334 = vpack.c.b16 %v4190, %v4189
    %4479 = vmatprep.subr.bf16.mxu0 0
    %4480 = vmatpush1.bf16.msra.mxu0 %v4191
    %4481 = vmatprep.subr.bf16.mxu0 0
    %4482 = vmatpush1.bf16.msra.mxu0 %v4192
    %4483 = vmatprep.subr.bf16.mxu0 0
    %4484 = vmatpush1.bf16.msra.mxu0 %v4193
    %4485 = vmatprep.subr.bf16.mxu0 0
    %4486 = vmatpush1.bf16.msra.mxu0 %v4194
    %4487 = vmatprep.subr.bf16.mxu0 0
    %4488 = vmatpush1.bf16.msra.mxu0 %v4195
    %4489 = vmatprep.subr.bf16.mxu0 0
    %4490 = vmatpush1.bf16.msra.mxu0 %v4196
    %4491 = vmatprep.subr.bf16.mxu0 0
    %4492 = vmatpush1.bf16.msra.mxu0 %v4197
    %4493 = vmatprep.subr.bf16.mxu0 0
    %4494 = vmatpush1.bf16.msra.mxu0 %v4198
    %4495 = vmatprep.subr.bf16.mxu0 0
    %4496 = vmatpush1.bf16.msra.mxu0 %v4199
    %4497 = vmatprep.subr.bf16.mxu0 0
    %4498 = vmatpush1.bf16.msra.mxu0 %v4200
    %4499 = vmatprep.subr.bf16.mxu0 0
    %4500 = vmatpush1.bf16.msra.mxu0 %v4201
    %4501 = vmatprep.subr.bf16.mxu0 0
    %4502 = vmatpush1.bf16.msra.mxu0 %v4202
    %4503 = vmatprep.subr.bf16.mxu0 0
    %4504 = vmatpush1.bf16.msra.mxu0 %v4203
    %4505 = vmatprep.subr.bf16.mxu0 0
    %4506 = vmatpush1.bf16.msra.mxu0 %v4204
    %4507 = vmatprep.subr.bf16.mxu0 0
    %4508 = vmatpush1.bf16.msra.mxu0 %v4205
    %4509 = vmatprep.subr.bf16.mxu0 0
    %4510 = vmatpush1.bf16.msra.mxu0 %v4206
    %4511 = vmatprep.mubr.bf16.mxu0 %v3269
    %4512 = vmatmul.mubr.bf16.gmra.mrb[0].mxu0 %v3268
    %v4513 = vpop.f32.mrb[0].mxu0
    %v4514 = vadd.f32 %v3613, %v4513
    %v4515 = vpop.f32.mrb[0].mxu0
    %v4516 = vpop.f32.mrb[0].mxu0
    %v4517 = vpop.f32.mrb[0].mxu0
    %4518 = vdwg.mxu0
    %4519 = vmatprep.subr.bf16.mxu0 0
    %4520 = vmatpush1.bf16.msra.mxu0 %v4207
    %4521 = vmatprep.subr.bf16.mxu0 0
    %4522 = vmatpush1.bf16.msra.mxu0 %v4208
    %4523 = vmatprep.subr.bf16.mxu0 0
    %4524 = vmatpush1.bf16.msra.mxu0 %v4209
    %4525 = vmatprep.subr.bf16.mxu0 0
    %4526 = vmatpush1.bf16.msra.mxu0 %v4210
    %4527 = vmatprep.subr.bf16.mxu0 0
    %4528 = vmatpush1.bf16.msra.mxu0 %v4211
    %4529 = vmatprep.subr.bf16.mxu0 0
    %4530 = vmatpush1.bf16.msra.mxu0 %v4212
    %4531 = vmatprep.subr.bf16.mxu0 0
    %4532 = vmatpush1.bf16.msra.mxu0 %v4213
    %4533 = vmatprep.subr.bf16.mxu0 0
    %4534 = vmatpush1.bf16.msra.mxu0 %v4214
    %4535 = vmatprep.subr.bf16.mxu0 0
    %4536 = vmatpush1.bf16.msra.mxu0 %v4215
    %4537 = vmatprep.subr.bf16.mxu0 0
    %4538 = vmatpush1.bf16.msra.mxu0 %v4216
    %4539 = vmatprep.subr.bf16.mxu0 0
    %4540 = vmatpush1.bf16.msra.mxu0 %v4217
    %4541 = vmatprep.subr.bf16.mxu0 0
    %4542 = vmatpush1.bf16.msra.mxu0 %v4218
    %4543 = vmatprep.subr.bf16.mxu0 0
    %4544 = vmatpush1.bf16.msra.mxu0 %v4219
    %4545 = vmatprep.subr.bf16.mxu0 0
    %4546 = vmatpush1.bf16.msra.mxu0 %v4220
    %4547 = vmatprep.subr.bf16.mxu0 0
    %4548 = vmatpush1.bf16.msra.mxu0 %v4221
    %4549 = vmatprep.subr.bf16.mxu0 0
    %4550 = vmatpush1.bf16.msra.mxu0 %v4222
    %4551 = vmatprep.mubr.bf16.mxu0 %v3275
    %4552 = vmatmul.mubr.bf16.gmra.mrb[0].mxu0 %v3274
    %v4553 = vpop.f32.mrb[0].mxu0
    %v4554 = vadd.f32 %v4514, %v4553
    %v4555 = vpop.f32.mrb[0].mxu0
    %v4556 = vpop.f32.mrb[0].mxu0
    %v4557 = vpop.f32.mrb[0].mxu0
    %4558 = vdwg.mxu0
    %4559 = vmatprep.subr.bf16.mxu0 0
    %4560 = vmatpush1.bf16.msra.mxu0 %v4223
    %4561 = vmatprep.subr.bf16.mxu0 0
    %4562 = vmatpush1.bf16.msra.mxu0 %v4224
    %4563 = vmatprep.subr.bf16.mxu0 0
    %4564 = vmatpush1.bf16.msra.mxu0 %v4225
    %4565 = vmatprep.subr.bf16.mxu0 0
    %4566 = vmatpush1.bf16.msra.mxu0 %v4226
    %4567 = vmatprep.subr.bf16.mxu0 0
    %4568 = vmatpush1.bf16.msra.mxu0 %v4227
    %4569 = vmatprep.subr.bf16.mxu0 0
    %4570 = vmatpush1.bf16.msra.mxu0 %v4228
    %4571 = vmatprep.subr.bf16.mxu0 0
    %4572 = vmatpush1.bf16.msra.mxu0 %v4229
    %4573 = vmatprep.subr.bf16.mxu0 0
    %4574 = vmatpush1.bf16.msra.mxu0 %v4230
    %4575 = vmatprep.subr.bf16.mxu0 0
    %4576 = vmatpush1.bf16.msra.mxu0 %v4231
    %4577 = vmatprep.subr.bf16.mxu0 0
    %4578 = vmatpush1.bf16.msra.mxu0 %v4232
    %4579 = vmatprep.subr.bf16.mxu0 0
    %4580 = vmatpush1.bf16.msra.mxu0 %v4233
    %4581 = vmatprep.subr.bf16.mxu0 0
    %4582 = vmatpush1.bf16.msra.mxu0 %v4234
    %4583 = vmatprep.subr.bf16.mxu0 0
    %4584 = vmatpush1.bf16.msra.mxu0 %v4235
    %4585 = vmatprep.subr.bf16.mxu0 0
    %4586 = vmatpush1.bf16.msra.mxu0 %v4236
    %4587 = vmatprep.subr.bf16.mxu0 0
    %4588 = vmatpush1.bf16.msra.mxu0 %v4237
    %4589 = vmatprep.subr.bf16.mxu0 0
    %4590 = vmatpush1.bf16.msra.mxu0 %v4238
    %4591 = vmatprep.mubr.bf16.mxu0 %v3281
    %4592 = vmatmul.mubr.bf16.gmra.mrb[0].mxu0 %v3280
    %v4593 = vpop.f32.mrb[0].mxu0
    %v4594 = vadd.f32 %v4554, %v4593
    %v4595 = vpop.f32.mrb[0].mxu0
    %v4596 = vpop.f32.mrb[0].mxu0
    %v4597 = vpop.f32.mrb[0].mxu0
    %4598 = vdwg.mxu0
    %4599 = vmatprep.subr.bf16.mxu0 0
    %4600 = vmatpush1.bf16.msra.mxu0 %v4239
    %4601 = vmatprep.subr.bf16.mxu0 0
    %4602 = vmatpush1.bf16.msra.mxu0 %v4240
    %4603 = vmatprep.subr.bf16.mxu0 0
    %4604 = vmatpush1.bf16.msra.mxu0 %v4241
    %4605 = vmatprep.subr.bf16.mxu0 0
    %4606 = vmatpush1.bf16.msra.mxu0 %v4242
    %4607 = vmatprep.subr.bf16.mxu0 0
    %4608 = vmatpush1.bf16.msra.mxu0 %v4243
    %4609 = vmatprep.subr.bf16.mxu0 0
    %4610 = vmatpush1.bf16.msra.mxu0 %v4244
    %4611 = vmatprep.subr.bf16.mxu0 0
    %4612 = vmatpush1.bf16.msra.mxu0 %v4245
    %4613 = vmatprep.subr.bf16.mxu0 0
    %4614 = vmatpush1.bf16.msra.mxu0 %v4246
    %4615 = vmatprep.subr.bf16.mxu0 0
    %4616 = vmatpush1.bf16.msra.mxu0 %v4247
    %4617 = vmatprep.subr.bf16.mxu0 0
    %4618 = vmatpush1.bf16.msra.mxu0 %v4248
    %4619 = vmatprep.subr.bf16.mxu0 0
    %4620 = vmatpush1.bf16.msra.mxu0 %v4249
    %4621 = vmatprep.subr.bf16.mxu0 0
    %4622 = vmatpush1.bf16.msra.mxu0 %v4250
    %4623 = vmatprep.subr.bf16.mxu0 0
    %4624 = vmatpush1.bf16.msra.mxu0 %v4251
    %4625 = vmatprep.subr.bf16.mxu0 0
    %4626 = vmatpush1.bf16.msra.mxu0 %v4252
    %4627 = vmatprep.subr.bf16.mxu0 0
    %4628 = vmatpush1.bf16.msra.mxu0 %v4253
    %4629 = vmatprep.subr.bf16.mxu0 0
    %4630 = vmatpush1.bf16.msra.mxu0 %v4254
    %4631 = vmatprep.mubr.bf16.mxu0 %v3287
    %4632 = vmatmul.mubr.bf16.gmra.mrb[0].mxu0 %v3286
    %v4633 = vpop.f32.mrb[0].mxu0
    %v4634 = vadd.f32 %v4594, %v4633
    %v4635 = vpop.f32.mrb[0].mxu0
    %v4636 = vpop.f32.mrb[0].mxu0
    %v4637 = vpop.f32.mrb[0].mxu0
    %4638 = vdwg.mxu0
    %4639 = vmatprep.subr.bf16.mxu0 0
    %4640 = vmatpush1.bf16.msra.mxu0 %v4255
    %4641 = vmatprep.subr.bf16.mxu0 0
    %4642 = vmatpush1.bf16.msra.mxu0 %v4256
    %4643 = vmatprep.subr.bf16.mxu0 0
    %4644 = vmatpush1.bf16.msra.mxu0 %v4257
    %4645 = vmatprep.subr.bf16.mxu0 0
    %4646 = vmatpush1.bf16.msra.mxu0 %v4258
    %4647 = vmatprep.subr.bf16.mxu0 0
    %4648 = vmatpush1.bf16.msra.mxu0 %v4259
    %4649 = vmatprep.subr.bf16.mxu0 0
    %4650 = vmatpush1.bf16.msra.mxu0 %v4260
    %4651 = vmatprep.subr.bf16.mxu0 0
    %4652 = vmatpush1.bf16.msra.mxu0 %v4261
    %4653 = vmatprep.subr.bf16.mxu0 0
    %4654 = vmatpush1.bf16.msra.mxu0 %v4262
    %4655 = vmatprep.subr.bf16.mxu0 0
    %4656 = vmatpush1.bf16.msra.mxu0 %v4263
    %4657 = vmatprep.subr.bf16.mxu0 0
    %4658 = vmatpush1.bf16.msra.mxu0 %v4264
    %4659 = vmatprep.subr.bf16.mxu0 0
    %4660 = vmatpush1.bf16.msra.mxu0 %v4265
    %4661 = vmatprep.subr.bf16.mxu0 0
    %4662 = vmatpush1.bf16.msra.mxu0 %v4266
    %4663 = vmatprep.subr.bf16.mxu0 0
    %4664 = vmatpush1.bf16.msra.mxu0 %v4267
    %4665 = vmatprep.subr.bf16.mxu0 0
    %4666 = vmatpush1.bf16.msra.mxu0 %v4268
    %4667 = vmatprep.subr.bf16.mxu0 0
    %4668 = vmatpush1.bf16.msra.mxu0 %v4269
    %4669 = vmatprep.subr.bf16.mxu0 0
    %4670 = vmatpush1.bf16.msra.mxu0 %v4270
    %4671 = vmatprep.mubr.bf16.mxu0 %v3293
    %4672 = vmatmul.mubr.bf16.gmra.mrb[0].mxu0 %v3292
    %v4673 = vpop.f32.mrb[0].mxu0
    %v4674 = vadd.f32 %v4634, %v4673
    %v4675 = vpop.f32.mrb[0].mxu0
    %v4676 = vpop.f32.mrb[0].mxu0
    %v4677 = vpop.f32.mrb[0].mxu0
    %4678 = vdwg.mxu0
    %4679 = vmatprep.subr.bf16.mxu0 0
    %4680 = vmatpush1.bf16.msra.mxu0 %v4271
    %4681 = vmatprep.subr.bf16.mxu0 0
    %4682 = vmatpush1.bf16.msra.mxu0 %v4272
    %4683 = vmatprep.subr.bf16.mxu0 0
    %4684 = vmatpush1.bf16.msra.mxu0 %v4273
    %4685 = vmatprep.subr.bf16.mxu0 0
    %4686 = vmatpush1.bf16.msra.mxu0 %v4274
    %4687 = vmatprep.subr.bf16.mxu0 0
    %4688 = vmatpush1.bf16.msra.mxu0 %v4275
    %4689 = vmatprep.subr.bf16.mxu0 0
    %4690 = vmatpush1.bf16.msra.mxu0 %v4276
    %4691 = vmatprep.subr.bf16.mxu0 0
    %4692 = vmatpush1.bf16.msra.mxu0 %v4277
    %4693 = vmatprep.subr.bf16.mxu0 0
    %4694 = vmatpush1.bf16.msra.mxu0 %v4278
    %4695 = vmatprep.subr.bf16.mxu0 0
    %4696 = vmatpush1.bf16.msra.mxu0 %v4279
    %4697 = vmatprep.subr.bf16.mxu0 0
    %4698 = vmatpush1.bf16.msra.mxu0 %v4280
    %4699 = vmatprep.subr.bf16.mxu0 0
    %4700 = vmatpush1.bf16.msra.mxu0 %v4281
    %4701 = vmatprep.subr.bf16.mxu0 0
    %4702 = vmatpush1.bf16.msra.mxu0 %v4282
    %4703 = vmatprep.subr.bf16.mxu0 0
    %4704 = vmatpush1.bf16.msra.mxu0 %v4283
    %4705 = vmatprep.subr.bf16.mxu0 0
    %4706 = vmatpush1.bf16.msra.mxu0 %v4284
    %4707 = vmatprep.subr.bf16.mxu0 0
    %4708 = vmatpush1.bf16.msra.mxu0 %v4285
    %4709 = vmatprep.subr.bf16.mxu0 0
    %4710 = vmatpush1.bf16.msra.mxu0 %v4286
    %4711 = vmatprep.mubr.bf16.mxu0 %v3299
    %4712 = vmatmul.mubr.bf16.gmra.mrb[0].mxu0 %v3298
    %v4713 = vpop.f32.mrb[0].mxu0
    %v4714 = vadd.f32 %v4674, %v4713
    %v4715 = vpop.f32.mrb[0].mxu0
    %v4716 = vpop.f32.mrb[0].mxu0
    %v4717 = vpop.f32.mrb[0].mxu0
    %4718 = vdwg.mxu0
    %4719 = vmatprep.subr.bf16.mxu0 0
    %4720 = vmatpush1.bf16.msra.mxu0 %v4287
    %4721 = vmatprep.subr.bf16.mxu0 0
    %4722 = vmatpush1.bf16.msra.mxu0 %v4288
    %4723 = vmatprep.subr.bf16.mxu0 0
    %4724 = vmatpush1.bf16.msra.mxu0 %v4289
    %4725 = vmatprep.subr.bf16.mxu0 0
    %4726 = vmatpush1.bf16.msra.mxu0 %v4290
    %4727 = vmatprep.subr.bf16.mxu0 0
    %4728 = vmatpush1.bf16.msra.mxu0 %v4291
    %4729 = vmatprep.subr.bf16.mxu0 0
    %4730 = vmatpush1.bf16.msra.mxu0 %v4292
    %4731 = vmatprep.subr.bf16.mxu0 0
    %4732 = vmatpush1.bf16.msra.mxu0 %v4293
    %4733 = vmatprep.subr.bf16.mxu0 0
    %4734 = vmatpush1.bf16.msra.mxu0 %v4294
    %4735 = vmatprep.subr.bf16.mxu0 0
    %4736 = vmatpush1.bf16.msra.mxu0 %v4295
    %4737 = vmatprep.subr.bf16.mxu0 0
    %4738 = vmatpush1.bf16.msra.mxu0 %v4296
    %4739 = vmatprep.subr.bf16.mxu0 0
    %4740 = vmatpush1.bf16.msra.mxu0 %v4297
    %4741 = vmatprep.subr.bf16.mxu0 0
    %4742 = vmatpush1.bf16.msra.mxu0 %v4298
    %4743 = vmatprep.subr.bf16.mxu0 0
    %4744 = vmatpush1.bf16.msra.mxu0 %v4299
    %4745 = vmatprep.subr.bf16.mxu0 0
    %4746 = vmatpush1.bf16.msra.mxu0 %v4300
    %4747 = vmatprep.subr.bf16.mxu0 0
    %4748 = vmatpush1.bf16.msra.mxu0 %v4301
    %4749 = vmatprep.subr.bf16.mxu0 0
    %4750 = vmatpush1.bf16.msra.mxu0 %v4302
    %4751 = vmatprep.mubr.bf16.mxu0 %v3305
    %4752 = vmatmul.mubr.bf16.gmra.mrb[0].mxu0 %v3304
    %v4753 = vpop.f32.mrb[0].mxu0
    %v4754 = vadd.f32 %v4714, %v4753
    %v4755 = vpop.f32.mrb[0].mxu0
    %v4756 = vpop.f32.mrb[0].mxu0
    %v4757 = vpop.f32.mrb[0].mxu0
    %4758 = vdwg.mxu0
    %4759 = vmatprep.subr.bf16.mxu0 0
    %4760 = vmatpush1.bf16.msra.mxu0 %v4303
    %4761 = vmatprep.subr.bf16.mxu0 0
    %4762 = vmatpush1.bf16.msra.mxu0 %v4304
    %4763 = vmatprep.subr.bf16.mxu0 0
    %4764 = vmatpush1.bf16.msra.mxu0 %v4305
    %4765 = vmatprep.subr.bf16.mxu0 0
    %4766 = vmatpush1.bf16.msra.mxu0 %v4306
    %4767 = vmatprep.subr.bf16.mxu0 0
    %4768 = vmatpush1.bf16.msra.mxu0 %v4307
    %4769 = vmatprep.subr.bf16.mxu0 0
    %4770 = vmatpush1.bf16.msra.mxu0 %v4308
    %4771 = vmatprep.subr.bf16.mxu0 0
    %4772 = vmatpush1.bf16.msra.mxu0 %v4309
    %4773 = vmatprep.subr.bf16.mxu0 0
    %4774 = vmatpush1.bf16.msra.mxu0 %v4310
    %4775 = vmatprep.subr.bf16.mxu0 0
    %4776 = vmatpush1.bf16.msra.mxu0 %v4311
    %4777 = vmatprep.subr.bf16.mxu0 0
    %4778 = vmatpush1.bf16.msra.mxu0 %v4312
    %4779 = vmatprep.subr.bf16.mxu0 0
    %4780 = vmatpush1.bf16.msra.mxu0 %v4313
    %4781 = vmatprep.subr.bf16.mxu0 0
    %4782 = vmatpush1.bf16.msra.mxu0 %v4314
    %4783 = vmatprep.subr.bf16.mxu0 0
    %4784 = vmatpush1.bf16.msra.mxu0 %v4315
    %4785 = vmatprep.subr.bf16.mxu0 0
    %4786 = vmatpush1.bf16.msra.mxu0 %v4316
    %4787 = vmatprep.subr.bf16.mxu0 0
    %4788 = vmatpush1.bf16.msra.mxu0 %v4317
    %4789 = vmatprep.subr.bf16.mxu0 0
    %4790 = vmatpush1.bf16.msra.mxu0 %v4318
    %4791 = vmatprep.mubr.bf16.mxu0 %v3311
    %4792 = vmatmul.mubr.bf16.gmra.mrb[0].mxu0 %v3310
    %v4793 = vpop.f32.mrb[0].mxu0
    %v4794 = vadd.f32 %v4754, %v4793
    %v4795 = vpop.f32.mrb[0].mxu0
    %v4796 = vpop.f32.mrb[0].mxu0
    %v4797 = vpop.f32.mrb[0].mxu0
    %4798 = vdwg.mxu0
    %4799 = vmatprep.subr.bf16.mxu0 0
    %4800 = vmatpush1.bf16.msra.mxu0 %v4319
    %4801 = vmatprep.subr.bf16.mxu0 0
    %4802 = vmatpush1.bf16.msra.mxu0 %v4320
    %4803 = vmatprep.subr.bf16.mxu0 0
    %4804 = vmatpush1.bf16.msra.mxu0 %v4321
    %4805 = vmatprep.subr.bf16.mxu0 0
    %4806 = vmatpush1.bf16.msra.mxu0 %v4322
    %4807 = vmatprep.subr.bf16.mxu0 0
    %4808 = vmatpush1.bf16.msra.mxu0 %v4323
    %4809 = vmatprep.subr.bf16.mxu0 0
    %4810 = vmatpush1.bf16.msra.mxu0 %v4324
    %4811 = vmatprep.subr.bf16.mxu0 0
    %4812 = vmatpush1.bf16.msra.mxu0 %v4325
    %4813 = vmatprep.subr.bf16.mxu0 0
    %4814 = vmatpush1.bf16.msra.mxu0 %v4326
    %4815 = vmatprep.subr.bf16.mxu0 0
    %4816 = vmatpush1.bf16.msra.mxu0 %v4327
    %4817 = vmatprep.subr.bf16.mxu0 0
    %4818 = vmatpush1.bf16.msra.mxu0 %v4328
    %4819 = vmatprep.subr.bf16.mxu0 0
    %4820 = vmatpush1.bf16.msra.mxu0 %v4329
    %4821 = vmatprep.subr.bf16.mxu0 0
    %4822 = vmatpush1.bf16.msra.mxu0 %v4330
    %4823 = vmatprep.subr.bf16.mxu0 0
    %4824 = vmatpush1.bf16.msra.mxu0 %v4331
    %4825 = vmatprep.subr.bf16.mxu0 0
    %4826 = vmatpush1.bf16.msra.mxu0 %v4332
    %4827 = vmatprep.subr.bf16.mxu0 0
    %4828 = vmatpush1.bf16.msra.mxu0 %v4333
    %4829 = vmatprep.subr.bf16.mxu0 0
    %4830 = vmatpush1.bf16.msra.mxu0 %v4334
    %4831 = vmatprep.mubr.bf16.mxu0 %v3317
    %4832 = vmatmul.mubr.bf16.gmra.mrb[0].mxu0 %v3316
    %v4833 = vpop.f32.mrb[0].mxu0
    %v4834 = vadd.f32 %v4794, %v4833
    %v4835 = vpop.f32.mrb[0].mxu0
    %v4836 = vpop.f32.mrb[0].mxu0
    %v4837 = vpop.f32.mrb[0].mxu0
    %4838 = vdwg.mxu0
    %v4839 = vmax.f32 %v4834, 0.0
    %v4840 = vpack.c.bf16 %v4839, %v4839
    %v4842 = vrot.slane %v4840, 1
    %v4844 = vrot.slane %v4840, 2
    %v4846 = vrot.slane %v4840, 3
    %v4848 = vld [vmem:[%s10] sm:$0xff]
    %v4849 = vld [vmem:[%s10 + $0x8] sm:$0xff]
    %v4850 = vld [vmem:[%s10 + $0x10] sm:$0xff]
    %v4851 = vld [vmem:[%s10 + $0x18] sm:$0xff]
    %v4852 = vld [vmem:[%s10 + $0x20] sm:$0xff]
    %v4853 = vld [vmem:[%s10 + $0x28] sm:$0xff]
    %v4854 = vld [vmem:[%s10 + $0x30] sm:$0xff]
    %v4855 = vld [vmem:[%s10 + $0x38] sm:$0xff]
    %v4856 = vld [vmem:[%s10 + $0x40] sm:$0xff]
    %v4857 = vld [vmem:[%s10 + $0x48] sm:$0xff]
    %v4858 = vld [vmem:[%s10 + $0x50] sm:$0xff]
    %v4859 = vld [vmem:[%s10 + $0x58] sm:$0xff]
    %v4860 = vld [vmem:[%s10 + $0x60] sm:$0xff]
    %v4861 = vld [vmem:[%s10 + $0x68] sm:$0xff]
    %v4862 = vld [vmem:[%s10 + $0x70] sm:$0xff]
    %v4863 = vld [vmem:[%s10 + $0x78] sm:$0xff]
    %v4864 = vld [vmem:[%s10 + $0x80] sm:$0xff]
    %v4865 = vld [vmem:[%s10 + $0x88] sm:$0xff]
    %v4866 = vld [vmem:[%s10 + $0x90] sm:$0xff]
    %v4867 = vld [vmem:[%s10 + $0x98] sm:$0xff]
    %v4868 = vld [vmem:[%s10 + $0xa0] sm:$0xff]
    %v4869 = vld [vmem:[%s10 + $0xa8] sm:$0xff]
    %v4870 = vld [vmem:[%s10 + $0xb0] sm:$0xff]
    %v4871 = vld [vmem:[%s10 + $0xb8] sm:$0xff]
    %v4872 = vld [vmem:[%s10 + $0xc0] sm:$0xff]
    %v4873 = vld [vmem:[%s10 + $0xc8] sm:$0xff]
    %v4874 = vld [vmem:[%s10 + $0xd0] sm:$0xff]
    %v4875 = vld [vmem:[%s10 + $0xd8] sm:$0xff]
    %v4876 = vld [vmem:[%s10 + $0xe0] sm:$0xff]
    %v4877 = vld [vmem:[%s10 + $0xe8] sm:$0xff]
    %v4878 = vld [vmem:[%s10 + $0xf0] sm:$0xff]
    %v4879 = vld [vmem:[%s10 + $0xf8] sm:$0xff]
    %v4880 = vld [vmem:[%s10 + $0x100] sm:$0xff]
    %v4881 = vld [vmem:[%s10 + $0x108] sm:$0xff]
    %v4882 = vld [vmem:[%s10 + $0x110] sm:$0xff]
    %v4883 = vld [vmem:[%s10 + $0x118] sm:$0xff]
    %v4884 = vld [vmem:[%s10 + $0x120] sm:$0xff]
    %v4885 = vld [vmem:[%s10 + $0x128] sm:$0xff]
    %v4886 = vld [vmem:[%s10 + $0x130] sm:$0xff]
    %v4887 = vld [vmem:[%s10 + $0x138] sm:$0xff]
    %v4888 = vld [vmem:[%s10 + $0x140] sm:$0xff]
    %v4889 = vld [vmem:[%s10 + $0x148] sm:$0xff]
    %v4890 = vld [vmem:[%s10 + $0x150] sm:$0xff]
    %v4891 = vld [vmem:[%s10 + $0x158] sm:$0xff]
    %v4892 = vld [vmem:[%s10 + $0x160] sm:$0xff]
    %v4893 = vld [vmem:[%s10 + $0x168] sm:$0xff]
    %v4894 = vld [vmem:[%s10 + $0x170] sm:$0xff]
    %v4895 = vld [vmem:[%s10 + $0x178] sm:$0xff]
    %v4896 = vld [vmem:[%s10 + $0x180] sm:$0xff]
    %v4897 = vld [vmem:[%s10 + $0x188] sm:$0xff]
    %v4898 = vld [vmem:[%s10 + $0x190] sm:$0xff]
    %v4899 = vld [vmem:[%s10 + $0x198] sm:$0xff]
    %v4900 = vld [vmem:[%s10 + $0x1a0] sm:$0xff]
    %v4901 = vld [vmem:[%s10 + $0x1a8] sm:$0xff]
    %v4902 = vld [vmem:[%s10 + $0x1b0] sm:$0xff]
    %v4903 = vld [vmem:[%s10 + $0x1b8] sm:$0xff]
    %v4904 = vld [vmem:[%s10 + $0x1c0] sm:$0xff]
    %v4905 = vld [vmem:[%s10 + $0x1c8] sm:$0xff]
    %v4906 = vld [vmem:[%s10 + $0x1d0] sm:$0xff]
    %v4907 = vld [vmem:[%s10 + $0x1d8] sm:$0xff]
    %v4908 = vld [vmem:[%s10 + $0x1e0] sm:$0xff]
    %v4909 = vld [vmem:[%s10 + $0x1e8] sm:$0xff]
    %v4910 = vld [vmem:[%s10 + $0x1f0] sm:$0xff]
    %v4911 = vld [vmem:[%s10 + $0x1f8] sm:$0xff]
    %v4912 = vld [vmem:[%s10 + $0x200] sm:$0xff]
    %v4913 = vld [vmem:[%s10 + $0x208] sm:$0xff]
    %v4914 = vld [vmem:[%s10 + $0x210] sm:$0xff]
    %v4915 = vld [vmem:[%s10 + $0x218] sm:$0xff]
    %v4916 = vld [vmem:[%s10 + $0x220] sm:$0xff]
    %v4917 = vld [vmem:[%s10 + $0x228] sm:$0xff]
    %v4918 = vld [vmem:[%s10 + $0x230] sm:$0xff]
    %v4919 = vld [vmem:[%s10 + $0x238] sm:$0xff]
    %v4920 = vld [vmem:[%s10 + $0x240] sm:$0xff]
    %v4921 = vld [vmem:[%s10 + $0x248] sm:$0xff]
    %v4922 = vld [vmem:[%s10 + $0x250] sm:$0xff]
    %v4923 = vld [vmem:[%s10 + $0x258] sm:$0xff]
    %v4924 = vld [vmem:[%s10 + $0x260] sm:$0xff]
    %v4925 = vld [vmem:[%s10 + $0x268] sm:$0xff]
    %v4926 = vld [vmem:[%s10 + $0x270] sm:$0xff]
    %v4927 = vld [vmem:[%s10 + $0x278] sm:$0xff]
    %v4928 = vld [vmem:[%s10 + $0x280] sm:$0xff]
    %v4929 = vld [vmem:[%s10 + $0x288] sm:$0xff]
    %v4930 = vld [vmem:[%s10 + $0x290] sm:$0xff]
    %v4931 = vld [vmem:[%s10 + $0x298] sm:$0xff]
    %v4932 = vld [vmem:[%s10 + $0x2a0] sm:$0xff]
    %v4933 = vld [vmem:[%s10 + $0x2a8] sm:$0xff]
    %v4934 = vld [vmem:[%s10 + $0x2b0] sm:$0xff]
    %v4935 = vld [vmem:[%s10 + $0x2b8] sm:$0xff]
    %v4936 = vld [vmem:[%s10 + $0x2c0] sm:$0xff]
    %v4937 = vld [vmem:[%s10 + $0x2c8] sm:$0xff]
    %v4938 = vld [vmem:[%s10 + $0x2d0] sm:$0xff]
    %v4939 = vld [vmem:[%s10 + $0x2d8] sm:$0xff]
    %v4940 = vld [vmem:[%s10 + $0x2e0] sm:$0xff]
    %v4941 = vld [vmem:[%s10 + $0x2e8] sm:$0xff]
    %v4942 = vld [vmem:[%s10 + $0x2f0] sm:$0xff]
    %v4943 = vld [vmem:[%s10 + $0x2f8] sm:$0xff]
    %v4944 = vld [vmem:[%s10 + $0x300] sm:$0xff]
    %v4945 = vld [vmem:[%s10 + $0x308] sm:$0xff]
    %v4946 = vld [vmem:[%s10 + $0x310] sm:$0xff]
    %v4947 = vld [vmem:[%s10 + $0x318] sm:$0xff]
    %v4948 = vld [vmem:[%s10 + $0x320] sm:$0xff]
    %v4949 = vld [vmem:[%s10 + $0x328] sm:$0xff]
    %v4950 = vld [vmem:[%s10 + $0x330] sm:$0xff]
    %v4951 = vld [vmem:[%s10 + $0x338] sm:$0xff]
    %v4952 = vld [vmem:[%s10 + $0x340] sm:$0xff]
    %v4953 = vld [vmem:[%s10 + $0x348] sm:$0xff]
    %v4954 = vld [vmem:[%s10 + $0x350] sm:$0xff]
    %v4955 = vld [vmem:[%s10 + $0x358] sm:$0xff]
    %v4956 = vld [vmem:[%s10 + $0x360] sm:$0xff]
    %v4957 = vld [vmem:[%s10 + $0x368] sm:$0xff]
    %v4958 = vld [vmem:[%s10 + $0x370] sm:$0xff]
    %v4959 = vld [vmem:[%s10 + $0x378] sm:$0xff]
    %v4960 = vld [vmem:[%s10 + $0x380] sm:$0xff]
    %v4961 = vld [vmem:[%s10 + $0x388] sm:$0xff]
    %v4962 = vld [vmem:[%s10 + $0x390] sm:$0xff]
    %v4963 = vld [vmem:[%s10 + $0x398] sm:$0xff]
    %v4964 = vld [vmem:[%s10 + $0x3a0] sm:$0xff]
    %v4965 = vld [vmem:[%s10 + $0x3a8] sm:$0xff]
    %v4966 = vld [vmem:[%s10 + $0x3b0] sm:$0xff]
    %v4967 = vld [vmem:[%s10 + $0x3b8] sm:$0xff]
    %v4968 = vld [vmem:[%s10 + $0x3c0] sm:$0xff]
    %v4969 = vld [vmem:[%s10 + $0x3c8] sm:$0xff]
    %v4970 = vld [vmem:[%s10 + $0x3d0] sm:$0xff]
    %v4971 = vld [vmem:[%s10 + $0x3d8] sm:$0xff]
    %v4972 = vld [vmem:[%s10 + $0x3e0] sm:$0xff]
    %v4973 = vld [vmem:[%s10 + $0x3e8] sm:$0xff]
    %v4974 = vld [vmem:[%s10 + $0x3f0] sm:$0xff]
    %v4975 = vld [vmem:[%s10 + $0x3f8] sm:$0xff]
    %v4976 = vld [vmem:[%s1] sm:$0x3]
    %v4977 = vld [vmem:[%s11] sm:$0xff]
    %v4978 = vld [vmem:[%s11 + $0x8] sm:$0xff]
    %v4979 = vld [vmem:[%s11 + $0x10] sm:$0xff]
    %v4980 = vld [vmem:[%s11 + $0x18] sm:$0xff]
    %v4981 = vld [vmem:[%s11 + $0x20] sm:$0xff]
    %v4982 = vld [vmem:[%s11 + $0x28] sm:$0xff]
    %v4983 = vld [vmem:[%s11 + $0x30] sm:$0xff]
    %v4984 = vld [vmem:[%s11 + $0x38] sm:$0xff]
    %v4985 = vld [vmem:[%s11 + $0x40] sm:$0xff]
    %v4986 = vld [vmem:[%s11 + $0x48] sm:$0xff]
    %v4987 = vld [vmem:[%s11 + $0x50] sm:$0xff]
    %v4988 = vld [vmem:[%s11 + $0x58] sm:$0xff]
    %vm4989 = vcmask 195584
    %v4991 = vsel %vm4989, %v4976, 0
    %4993 = vmatprep.subr.mxu0 %v4978
    %4994 = vmatpush1.msra.mxu0 %v4977
    %4995 = vmatprep.subr.mxu0 %v4982
    %4996 = vmatpush1.msra.mxu0 %v4981
    %4997 = vmatprep.subr.mxu0 %v4986
    %4998 = vmatpush1.msra.mxu0 %v4985
    %4999 = vmatprep.subr.mxu0 0.0
    %5000 = vmatpush1.msra.mxu0 0.0
    %5001 = vmatprep.subr.mxu0 0.0
    %5002 = vmatpush1.msra.mxu0 0.0
    %5003 = vmatprep.subr.mxu0 0.0
    %5004 = vmatpush1.msra.mxu0 0.0
    %5005 = vmatprep.subr.mxu0 0.0
    %5006 = vmatpush1.msra.mxu0 0.0
    %5007 = vmatprep.subr.mxu0 0.0
    %5008 = vmatpush1.msra.mxu0 0.0
    %5009 = vmatprep.subr.mxu0 0.0
    %5010 = vmatpush1.msra.mxu0 0.0
    %5011 = vmatprep.subr.mxu0 0.0
    %5012 = vmatpush1.msra.mxu0 0.0
    %5013 = vmatprep.subr.mxu0 0.0
    %5014 = vmatpush1.msra.mxu0 0.0
    %5015 = vmatprep.subr.mxu0 0.0
    %5016 = vmatpush1.msra.mxu0 0.0
    %5017 = vmatprep.subr.mxu0 0.0
    %5018 = vmatpush1.msra.mxu0 0.0
    %5019 = vmatprep.subr.mxu0 0.0
    %5020 = vmatpush1.msra.mxu0 0.0
    %5021 = vmatprep.subr.mxu0 0.0
    %5022 = vmatpush1.msra.mxu0 0.0
    %5023 = vmatprep.subr.mxu0 0.0
    %5024 = vmatpush1.msra.mxu0 0.0
    %5025 = vmatprep.subr.mxu0 0.0
    %5026 = vmatpush1.msra.mxu0 0.0
    %5027 = vmatprep.subr.mxu0 0.0
    %5028 = vmatpush1.msra.mxu0 0.0
    %5029 = vmatprep.subr.mxu0 0.0
    %5030 = vmatpush1.msra.mxu0 0.0
    %5031 = vmatprep.subr.mxu0 0.0
    %5032 = vmatpush1.msra.mxu0 0.0
    %5033 = vmatprep.subr.mxu0 0.0
    %5034 = vmatpush1.msra.mxu0 0.0
    %5035 = vmatprep.subr.mxu0 0.0
    %5036 = vmatpush1.msra.mxu0 0.0
    %5037 = vmatprep.subr.mxu0 0.0
    %5038 = vmatpush1.msra.mxu0 0.0
    %5039 = vmatprep.subr.mxu0 0.0
    %5040 = vmatpush1.msra.mxu0 0.0
    %5041 = vmatprep.subr.mxu0 0.0
    %5042 = vmatpush1.msra.mxu0 0.0
    %5043 = vmatprep.subr.mxu0 0.0
    %5044 = vmatpush1.msra.mxu0 0.0
    %5045 = vmatprep.subr.mxu0 0.0
    %5046 = vmatpush1.msra.mxu0 0.0
    %5047 = vmatprep.subr.mxu0 0.0
    %5048 = vmatpush1.msra.mxu0 0.0
    %5049 = vmatprep.subr.mxu0 0.0
    %5050 = vmatpush1.msra.mxu0 0.0
    %5051 = vmatprep.subr.mxu0 0.0
    %5052 = vmatpush1.msra.mxu0 0.0
    %5053 = vmatprep.subr.mxu0 0.0
    %5054 = vmatpush1.msra.mxu0 0.0
    %5055 = vmatprep.subr.mxu0 0.0
    %5056 = vmatpush1.msra.mxu0 0.0
    %5057 = vmatprep.mubr.f32.mxu0 0.0
    %5058 = vmatmul.mubr.f32.gmra.mrb[0].mxu0 %v4991
    %v5059 = vpop.f32.mrb[0].mxu0
    %v5060 = vadd.f32 0.0, %v5059
    %v5061 = vpop.f32.mrb[0].mxu0
    %v5062 = vadd.f32 0.0, %v5061
    %5063 = vdwg.mxu0
    %5064 = vmatprep.subr.mxu0 %v4980
    %5065 = vmatpush1.msra.mxu0 %v4979
    %5066 = vmatprep.subr.mxu0 %v4984
    %5067 = vmatpush1.msra.mxu0 %v4983
    %5068 = vmatprep.subr.mxu0 %v4988
    %5069 = vmatpush1.msra.mxu0 %v4987
    %5070 = vmatprep.subr.mxu0 0.0
    %5071 = vmatpush1.msra.mxu0 0.0
    %5072 = vmatprep.subr.mxu0 0.0
    %5073 = vmatpush1.msra.mxu0 0.0
    %5074 = vmatprep.subr.mxu0 0.0
    %5075 = vmatpush1.msra.mxu0 0.0
    %5076 = vmatprep.subr.mxu0 0.0
    %5077 = vmatpush1.msra.mxu0 0.0
    %5078 = vmatprep.subr.mxu0 0.0
    %5079 = vmatpush1.msra.mxu0 0.0
    %5080 = vmatprep.subr.mxu0 0.0
    %5081 = vmatpush1.msra.mxu0 0.0
    %5082 = vmatprep.subr.mxu0 0.0
    %5083 = vmatpush1.msra.mxu0 0.0
    %5084 = vmatprep.subr.mxu0 0.0
    %5085 = vmatpush1.msra.mxu0 0.0
    %5086 = vmatprep.subr.mxu0 0.0
    %5087 = vmatpush1.msra.mxu0 0.0
    %5088 = vmatprep.subr.mxu0 0.0
    %5089 = vmatpush1.msra.mxu0 0.0
    %5090 = vmatprep.subr.mxu0 0.0
    %5091 = vmatpush1.msra.mxu0 0.0
    %5092 = vmatprep.subr.mxu0 0.0
    %5093 = vmatpush1.msra.mxu0 0.0
    %5094 = vmatprep.subr.mxu0 0.0
    %5095 = vmatpush1.msra.mxu0 0.0
    %5096 = vmatprep.subr.mxu0 0.0
    %5097 = vmatpush1.msra.mxu0 0.0
    %5098 = vmatprep.subr.mxu0 0.0
    %5099 = vmatpush1.msra.mxu0 0.0
    %5100 = vmatprep.subr.mxu0 0.0
    %5101 = vmatpush1.msra.mxu0 0.0
    %5102 = vmatprep.subr.mxu0 0.0
    %5103 = vmatpush1.msra.mxu0 0.0
    %5104 = vmatprep.subr.mxu0 0.0
    %5105 = vmatpush1.msra.mxu0 0.0
    %5106 = vmatprep.subr.mxu0 0.0
    %5107 = vmatpush1.msra.mxu0 0.0
    %5108 = vmatprep.subr.mxu0 0.0
    %5109 = vmatpush1.msra.mxu0 0.0
    %5110 = vmatprep.subr.mxu0 0.0
    %5111 = vmatpush1.msra.mxu0 0.0
    %5112 = vmatprep.subr.mxu0 0.0
    %5113 = vmatpush1.msra.mxu0 0.0
    %5114 = vmatprep.subr.mxu0 0.0
    %5115 = vmatpush1.msra.mxu0 0.0
    %5116 = vmatprep.subr.mxu0 0.0
    %5117 = vmatpush1.msra.mxu0 0.0
    %5118 = vmatprep.subr.mxu0 0.0
    %5119 = vmatpush1.msra.mxu0 0.0
    %5120 = vmatprep.subr.mxu0 0.0
    %5121 = vmatpush1.msra.mxu0 0.0
    %5122 = vmatprep.subr.mxu0 0.0
    %5123 = vmatpush1.msra.mxu0 0.0
    %5124 = vmatprep.subr.mxu0 0.0
    %5125 = vmatpush1.msra.mxu0 0.0
    %5126 = vmatprep.subr.mxu0 0.0
    %5127 = vmatpush1.msra.mxu0 0.0
    %5128 = vmatprep.mubr.f32.mxu0 0.0
    %5129 = vmatmul.mubr.f32.gmra.mrb[0].mxu0 %v4991
    %v5130 = vpop.f32.mrb[0].mxu0
    %v5131 = vadd.f32 0.0, %v5130
    %v5132 = vpop.f32.mrb[0].mxu0
    %v5133 = vadd.f32 0.0, %v5132
    %5134 = vdwg.mxu0
    %v5263 = vunpack.c.l.b16 %v4848
    %v5264 = vunpack.c.h.b16 %v4848
    %v5265 = vunpack.c.l.b16 %v4849
    %v5266 = vunpack.c.h.b16 %v4849
    %v5267 = vunpack.c.l.b16 %v4850
    %v5268 = vunpack.c.h.b16 %v4850
    %v5269 = vunpack.c.l.b16 %v4851
    %v5270 = vunpack.c.h.b16 %v4851
    %v5271 = vunpack.c.l.b16 %v4852
    %v5272 = vunpack.c.h.b16 %v4852
    %v5273 = vunpack.c.l.b16 %v4853
    %v5274 = vunpack.c.h.b16 %v4853
    %v5275 = vunpack.c.l.b16 %v4854
    %v5276 = vunpack.c.h.b16 %v4854
    %v5277 = vunpack.c.l.b16 %v4855
    %v5278 = vunpack.c.h.b16 %v4855
    %v5279 = vunpack.c.l.b16 %v4856
    %v5280 = vunpack.c.h.b16 %v4856
    %v5281 = vunpack.c.l.b16 %v4857
    %v5282 = vunpack.c.h.b16 %v4857
    %v5283 = vunpack.c.l.b16 %v4858
    %v5284 = vunpack.c.h.b16 %v4858
    %v5285 = vunpack.c.l.b16 %v4859
    %v5286 = vunpack.c.h.b16 %v4859
    %v5287 = vunpack.c.l.b16 %v4860
    %v5288 = vunpack.c.h.b16 %v4860
    %v5289 = vunpack.c.l.b16 %v4861
    %v5290 = vunpack.c.h.b16 %v4861
    %v5291 = vunpack.c.l.b16 %v4862
    %v5292 = vunpack.c.h.b16 %v4862
    %v5293 = vunpack.c.l.b16 %v4863
    %v5294 = vunpack.c.h.b16 %v4863
    %v5295 = vunpack.c.l.b16 %v4864
    %v5296 = vunpack.c.h.b16 %v4864
    %v5297 = vunpack.c.l.b16 %v4865
    %v5298 = vunpack.c.h.b16 %v4865
    %v5299 = vunpack.c.l.b16 %v4866
    %v5300 = vunpack.c.h.b16 %v4866
    %v5301 = vunpack.c.l.b16 %v4867
    %v5302 = vunpack.c.h.b16 %v4867
    %v5303 = vunpack.c.l.b16 %v4868
    %v5304 = vunpack.c.h.b16 %v4868
    %v5305 = vunpack.c.l.b16 %v4869
    %v5306 = vunpack.c.h.b16 %v4869
    %v5307 = vunpack.c.l.b16 %v4870
    %v5308 = vunpack.c.h.b16 %v4870
    %v5309 = vunpack.c.l.b16 %v4871
    %v5310 = vunpack.c.h.b16 %v4871
    %v5311 = vunpack.c.l.b16 %v4872
    %v5312 = vunpack.c.h.b16 %v4872
    %v5313 = vunpack.c.l.b16 %v4873
    %v5314 = vunpack.c.h.b16 %v4873
    %v5315 = vunpack.c.l.b16 %v4874
    %v5316 = vunpack.c.h.b16 %v4874
    %v5317 = vunpack.c.l.b16 %v4875
    %v5318 = vunpack.c.h.b16 %v4875
    %v5319 = vunpack.c.l.b16 %v4876
    %v5320 = vunpack.c.h.b16 %v4876
    %v5321 = vunpack.c.l.b16 %v4877
    %v5322 = vunpack.c.h.b16 %v4877
    %v5323 = vunpack.c.l.b16 %v4878
    %v5324 = vunpack.c.h.b16 %v4878
    %v5325 = vunpack.c.l.b16 %v4879
    %v5326 = vunpack.c.h.b16 %v4879
    %v5327 = vunpack.c.l.b16 %v4880
    %v5328 = vunpack.c.h.b16 %v4880
    %v5329 = vunpack.c.l.b16 %v4881
    %v5330 = vunpack.c.h.b16 %v4881
    %v5331 = vunpack.c.l.b16 %v4882
    %v5332 = vunpack.c.h.b16 %v4882
    %v5333 = vunpack.c.l.b16 %v4883
    %v5334 = vunpack.c.h.b16 %v4883
    %v5335 = vunpack.c.l.b16 %v4884
    %v5336 = vunpack.c.h.b16 %v4884
    %v5337 = vunpack.c.l.b16 %v4885
    %v5338 = vunpack.c.h.b16 %v4885
    %v5339 = vunpack.c.l.b16 %v4886
    %v5340 = vunpack.c.h.b16 %v4886
    %v5341 = vunpack.c.l.b16 %v4887
    %v5342 = vunpack.c.h.b16 %v4887
    %v5343 = vunpack.c.l.b16 %v4888
    %v5344 = vunpack.c.h.b16 %v4888
    %v5345 = vunpack.c.l.b16 %v4889
    %v5346 = vunpack.c.h.b16 %v4889
    %v5347 = vunpack.c.l.b16 %v4890
    %v5348 = vunpack.c.h.b16 %v4890
    %v5349 = vunpack.c.l.b16 %v4891
    %v5350 = vunpack.c.h.b16 %v4891
    %v5351 = vunpack.c.l.b16 %v4892
    %v5352 = vunpack.c.h.b16 %v4892
    %v5353 = vunpack.c.l.b16 %v4893
    %v5354 = vunpack.c.h.b16 %v4893
    %v5355 = vunpack.c.l.b16 %v4894
    %v5356 = vunpack.c.h.b16 %v4894
    %v5357 = vunpack.c.l.b16 %v4895
    %v5358 = vunpack.c.h.b16 %v4895
    %v5359 = vunpack.c.l.b16 %v4896
    %v5360 = vunpack.c.h.b16 %v4896
    %v5361 = vunpack.c.l.b16 %v4897
    %v5362 = vunpack.c.h.b16 %v4897
    %v5363 = vunpack.c.l.b16 %v4898
    %v5364 = vunpack.c.h.b16 %v4898
    %v5365 = vunpack.c.l.b16 %v4899
    %v5366 = vunpack.c.h.b16 %v4899
    %v5367 = vunpack.c.l.b16 %v4900
    %v5368 = vunpack.c.h.b16 %v4900
    %v5369 = vunpack.c.l.b16 %v4901
    %v5370 = vunpack.c.h.b16 %v4901
    %v5371 = vunpack.c.l.b16 %v4902
    %v5372 = vunpack.c.h.b16 %v4902
    %v5373 = vunpack.c.l.b16 %v4903
    %v5374 = vunpack.c.h.b16 %v4903
    %v5375 = vunpack.c.l.b16 %v4904
    %v5376 = vunpack.c.h.b16 %v4904
    %v5377 = vunpack.c.l.b16 %v4905
    %v5378 = vunpack.c.h.b16 %v4905
    %v5379 = vunpack.c.l.b16 %v4906
    %v5380 = vunpack.c.h.b16 %v4906
    %v5381 = vunpack.c.l.b16 %v4907
    %v5382 = vunpack.c.h.b16 %v4907
    %v5383 = vunpack.c.l.b16 %v4908
    %v5384 = vunpack.c.h.b16 %v4908
    %v5385 = vunpack.c.l.b16 %v4909
    %v5386 = vunpack.c.h.b16 %v4909
    %v5387 = vunpack.c.l.b16 %v4910
    %v5388 = vunpack.c.h.b16 %v4910
    %v5389 = vunpack.c.l.b16 %v4911
    %v5390 = vunpack.c.h.b16 %v4911
    %v5391 = vunpack.c.l.b16 %v4912
    %v5392 = vunpack.c.h.b16 %v4912
    %v5393 = vunpack.c.l.b16 %v4913
    %v5394 = vunpack.c.h.b16 %v4913
    %v5395 = vunpack.c.l.b16 %v4914
    %v5396 = vunpack.c.h.b16 %v4914
    %v5397 = vunpack.c.l.b16 %v4915
    %v5398 = vunpack.c.h.b16 %v4915
    %v5399 = vunpack.c.l.b16 %v4916
    %v5400 = vunpack.c.h.b16 %v4916
    %v5401 = vunpack.c.l.b16 %v4917
    %v5402 = vunpack.c.h.b16 %v4917
    %v5403 = vunpack.c.l.b16 %v4918
    %v5404 = vunpack.c.h.b16 %v4918
    %v5405 = vunpack.c.l.b16 %v4919
    %v5406 = vunpack.c.h.b16 %v4919
    %v5407 = vunpack.c.l.b16 %v4920
    %v5408 = vunpack.c.h.b16 %v4920
    %v5409 = vunpack.c.l.b16 %v4921
    %v5410 = vunpack.c.h.b16 %v4921
    %v5411 = vunpack.c.l.b16 %v4922
    %v5412 = vunpack.c.h.b16 %v4922
    %v5413 = vunpack.c.l.b16 %v4923
    %v5414 = vunpack.c.h.b16 %v4923
    %v5415 = vunpack.c.l.b16 %v4924
    %v5416 = vunpack.c.h.b16 %v4924
    %v5417 = vunpack.c.l.b16 %v4925
    %v5418 = vunpack.c.h.b16 %v4925
    %v5419 = vunpack.c.l.b16 %v4926
    %v5420 = vunpack.c.h.b16 %v4926
    %v5421 = vunpack.c.l.b16 %v4927
    %v5422 = vunpack.c.h.b16 %v4927
    %v5423 = vunpack.c.l.b16 %v4928
    %v5424 = vunpack.c.h.b16 %v4928
    %v5425 = vunpack.c.l.b16 %v4929
    %v5426 = vunpack.c.h.b16 %v4929
    %v5427 = vunpack.c.l.b16 %v4930
    %v5428 = vunpack.c.h.b16 %v4930
    %v5429 = vunpack.c.l.b16 %v4931
    %v5430 = vunpack.c.h.b16 %v4931
    %v5431 = vunpack.c.l.b16 %v4932
    %v5432 = vunpack.c.h.b16 %v4932
    %v5433 = vunpack.c.l.b16 %v4933
    %v5434 = vunpack.c.h.b16 %v4933
    %v5435 = vunpack.c.l.b16 %v4934
    %v5436 = vunpack.c.h.b16 %v4934
    %v5437 = vunpack.c.l.b16 %v4935
    %v5438 = vunpack.c.h.b16 %v4935
    %v5439 = vunpack.c.l.b16 %v4936
    %v5440 = vunpack.c.h.b16 %v4936
    %v5441 = vunpack.c.l.b16 %v4937
    %v5442 = vunpack.c.h.b16 %v4937
    %v5443 = vunpack.c.l.b16 %v4938
    %v5444 = vunpack.c.h.b16 %v4938
    %v5445 = vunpack.c.l.b16 %v4939
    %v5446 = vunpack.c.h.b16 %v4939
    %v5447 = vunpack.c.l.b16 %v4940
    %v5448 = vunpack.c.h.b16 %v4940
    %v5449 = vunpack.c.l.b16 %v4941
    %v5450 = vunpack.c.h.b16 %v4941
    %v5451 = vunpack.c.l.b16 %v4942
    %v5452 = vunpack.c.h.b16 %v4942
    %v5453 = vunpack.c.l.b16 %v4943
    %v5454 = vunpack.c.h.b16 %v4943
    %v5455 = vunpack.c.l.b16 %v4944
    %v5456 = vunpack.c.h.b16 %v4944
    %v5457 = vunpack.c.l.b16 %v4945
    %v5458 = vunpack.c.h.b16 %v4945
    %v5459 = vunpack.c.l.b16 %v4946
    %v5460 = vunpack.c.h.b16 %v4946
    %v5461 = vunpack.c.l.b16 %v4947
    %v5462 = vunpack.c.h.b16 %v4947
    %v5463 = vunpack.c.l.b16 %v4948
    %v5464 = vunpack.c.h.b16 %v4948
    %v5465 = vunpack.c.l.b16 %v4949
    %v5466 = vunpack.c.h.b16 %v4949
    %v5467 = vunpack.c.l.b16 %v4950
    %v5468 = vunpack.c.h.b16 %v4950
    %v5469 = vunpack.c.l.b16 %v4951
    %v5470 = vunpack.c.h.b16 %v4951
    %v5471 = vunpack.c.l.b16 %v4952
    %v5472 = vunpack.c.h.b16 %v4952
    %v5473 = vunpack.c.l.b16 %v4953
    %v5474 = vunpack.c.h.b16 %v4953
    %v5475 = vunpack.c.l.b16 %v4954
    %v5476 = vunpack.c.h.b16 %v4954
    %v5477 = vunpack.c.l.b16 %v4955
    %v5478 = vunpack.c.h.b16 %v4955
    %v5479 = vunpack.c.l.b16 %v4956
    %v5480 = vunpack.c.h.b16 %v4956
    %v5481 = vunpack.c.l.b16 %v4957
    %v5482 = vunpack.c.h.b16 %v4957
    %v5483 = vunpack.c.l.b16 %v4958
    %v5484 = vunpack.c.h.b16 %v4958
    %v5485 = vunpack.c.l.b16 %v4959
    %v5486 = vunpack.c.h.b16 %v4959
    %v5487 = vunpack.c.l.b16 %v4960
    %v5488 = vunpack.c.h.b16 %v4960
    %v5489 = vunpack.c.l.b16 %v4961
    %v5490 = vunpack.c.h.b16 %v4961
    %v5491 = vunpack.c.l.b16 %v4962
    %v5492 = vunpack.c.h.b16 %v4962
    %v5493 = vunpack.c.l.b16 %v4963
    %v5494 = vunpack.c.h.b16 %v4963
    %v5495 = vunpack.c.l.b16 %v4964
    %v5496 = vunpack.c.h.b16 %v4964
    %v5497 = vunpack.c.l.b16 %v4965
    %v5498 = vunpack.c.h.b16 %v4965
    %v5499 = vunpack.c.l.b16 %v4966
    %v5500 = vunpack.c.h.b16 %v4966
    %v5501 = vunpack.c.l.b16 %v4967
    %v5502 = vunpack.c.h.b16 %v4967
    %v5503 = vunpack.c.l.b16 %v4968
    %v5504 = vunpack.c.h.b16 %v4968
    %v5505 = vunpack.c.l.b16 %v4969
    %v5506 = vunpack.c.h.b16 %v4969
    %v5507 = vunpack.c.l.b16 %v4970
    %v5508 = vunpack.c.h.b16 %v4970
    %v5509 = vunpack.c.l.b16 %v4971
    %v5510 = vunpack.c.h.b16 %v4971
    %v5511 = vunpack.c.l.b16 %v4972
    %v5512 = vunpack.c.h.b16 %v4972
    %v5513 = vunpack.c.l.b16 %v4973
    %v5514 = vunpack.c.h.b16 %v4973
    %v5515 = vunpack.c.l.b16 %v4974
    %v5516 = vunpack.c.h.b16 %v4974
    %v5517 = vunpack.c.l.b16 %v4975
    %v5518 = vunpack.c.h.b16 %v4975
    %v5519 = vpack.c.b16 %v5267, %v5263
    %v5520 = vpack.c.b16 %v5268, %v5264
    %v5521 = vpack.c.b16 %v5269, %v5265
    %v5522 = vpack.c.b16 %v5270, %v5266
    %v5523 = vpack.c.b16 %v5275, %v5271
    %v5524 = vpack.c.b16 %v5276, %v5272
    %v5525 = vpack.c.b16 %v5277, %v5273
    %v5526 = vpack.c.b16 %v5278, %v5274
    %v5527 = vpack.c.b16 %v5283, %v5279
    %v5528 = vpack.c.b16 %v5284, %v5280
    %v5529 = vpack.c.b16 %v5285, %v5281
    %v5530 = vpack.c.b16 %v5286, %v5282
    %v5531 = vpack.c.b16 %v5291, %v5287
    %v5532 = vpack.c.b16 %v5292, %v5288
    %v5533 = vpack.c.b16 %v5293, %v5289
    %v5534 = vpack.c.b16 %v5294, %v5290
    %v5535 = vpack.c.b16 %v5299, %v5295
    %v5536 = vpack.c.b16 %v5300, %v5296
    %v5537 = vpack.c.b16 %v5301, %v5297
    %v5538 = vpack.c.b16 %v5302, %v5298
    %v5539 = vpack.c.b16 %v5307, %v5303
    %v5540 = vpack.c.b16 %v5308, %v5304
    %v5541 = vpack.c.b16 %v5309, %v5305
    %v5542 = vpack.c.b16 %v5310, %v5306
    %v5543 = vpack.c.b16 %v5315, %v5311
    %v5544 = vpack.c.b16 %v5316, %v5312
    %v5545 = vpack.c.b16 %v5317, %v5313
    %v5546 = vpack.c.b16 %v5318, %v5314
    %v5547 = vpack.c.b16 %v5323, %v5319
    %v5548 = vpack.c.b16 %v5324, %v5320
    %v5549 = vpack.c.b16 %v5325, %v5321
    %v5550 = vpack.c.b16 %v5326, %v5322
    %v5551 = vpack.c.b16 %v5331, %v5327
    %v5552 = vpack.c.b16 %v5332, %v5328
    %v5553 = vpack.c.b16 %v5333, %v5329
    %v5554 = vpack.c.b16 %v5334, %v5330
    %v5555 = vpack.c.b16 %v5339, %v5335
    %v5556 = vpack.c.b16 %v5340, %v5336
    %v5557 = vpack.c.b16 %v5341, %v5337
    %v5558 = vpack.c.b16 %v5342, %v5338
    %v5559 = vpack.c.b16 %v5347, %v5343
    %v5560 = vpack.c.b16 %v5348, %v5344
    %v5561 = vpack.c.b16 %v5349, %v5345
    %v5562 = vpack.c.b16 %v5350, %v5346
    %v5563 = vpack.c.b16 %v5355, %v5351
    %v5564 = vpack.c.b16 %v5356, %v5352
    %v5565 = vpack.c.b16 %v5357, %v5353
    %v5566 = vpack.c.b16 %v5358, %v5354
    %v5567 = vpack.c.b16 %v5363, %v5359
    %v5568 = vpack.c.b16 %v5364, %v5360
    %v5569 = vpack.c.b16 %v5365, %v5361
    %v5570 = vpack.c.b16 %v5366, %v5362
    %v5571 = vpack.c.b16 %v5371, %v5367
    %v5572 = vpack.c.b16 %v5372, %v5368
    %v5573 = vpack.c.b16 %v5373, %v5369
    %v5574 = vpack.c.b16 %v5374, %v5370
    %v5575 = vpack.c.b16 %v5379, %v5375
    %v5576 = vpack.c.b16 %v5380, %v5376
    %v5577 = vpack.c.b16 %v5381, %v5377
    %v5578 = vpack.c.b16 %v5382, %v5378
    %v5579 = vpack.c.b16 %v5387, %v5383
    %v5580 = vpack.c.b16 %v5388, %v5384
    %v5581 = vpack.c.b16 %v5389, %v5385
    %v5582 = vpack.c.b16 %v5390, %v5386
    %v5583 = vpack.c.b16 %v5395, %v5391
    %v5584 = vpack.c.b16 %v5396, %v5392
    %v5585 = vpack.c.b16 %v5397, %v5393
    %v5586 = vpack.c.b16 %v5398, %v5394
    %v5587 = vpack.c.b16 %v5403, %v5399
    %v5588 = vpack.c.b16 %v5404, %v5400
    %v5589 = vpack.c.b16 %v5405, %v5401
    %v5590 = vpack.c.b16 %v5406, %v5402
    %v5591 = vpack.c.b16 %v5411, %v5407
    %v5592 = vpack.c.b16 %v5412, %v5408
    %v5593 = vpack.c.b16 %v5413, %v5409
    %v5594 = vpack.c.b16 %v5414, %v5410
    %v5595 = vpack.c.b16 %v5419, %v5415
    %v5596 = vpack.c.b16 %v5420, %v5416
    %v5597 = vpack.c.b16 %v5421, %v5417
    %v5598 = vpack.c.b16 %v5422, %v5418
    %v5599 = vpack.c.b16 %v5427, %v5423
    %v5600 = vpack.c.b16 %v5428, %v5424
    %v5601 = vpack.c.b16 %v5429, %v5425
    %v5602 = vpack.c.b16 %v5430, %v5426
    %v5603 = vpack.c.b16 %v5435, %v5431
    %v5604 = vpack.c.b16 %v5436, %v5432
    %v5605 = vpack.c.b16 %v5437, %v5433
    %v5606 = vpack.c.b16 %v5438, %v5434
    %v5607 = vpack.c.b16 %v5443, %v5439
    %v5608 = vpack.c.b16 %v5444, %v5440
    %v5609 = vpack.c.b16 %v5445, %v5441
    %v5610 = vpack.c.b16 %v5446, %v5442
    %v5611 = vpack.c.b16 %v5451, %v5447
    %v5612 = vpack.c.b16 %v5452, %v5448
    %v5613 = vpack.c.b16 %v5453, %v5449
    %v5614 = vpack.c.b16 %v5454, %v5450
    %v5615 = vpack.c.b16 %v5459, %v5455
    %v5616 = vpack.c.b16 %v5460, %v5456
    %v5617 = vpack.c.b16 %v5461, %v5457
    %v5618 = vpack.c.b16 %v5462, %v5458
    %v5619 = vpack.c.b16 %v5467, %v5463
    %v5620 = vpack.c.b16 %v5468, %v5464
    %v5621 = vpack.c.b16 %v5469, %v5465
    %v5622 = vpack.c.b16 %v5470, %v5466
    %v5623 = vpack.c.b16 %v5475, %v5471
    %v5624 = vpack.c.b16 %v5476, %v5472
    %v5625 = vpack.c.b16 %v5477, %v5473
    %v5626 = vpack.c.b16 %v5478, %v5474
    %v5627 = vpack.c.b16 %v5483, %v5479
    %v5628 = vpack.c.b16 %v5484, %v5480
    %v5629 = vpack.c.b16 %v5485, %v5481
    %v5630 = vpack.c.b16 %v5486, %v5482
    %v5631 = vpack.c.b16 %v5491, %v5487
    %v5632 = vpack.c.b16 %v5492, %v5488
    %v5633 = vpack.c.b16 %v5493, %v5489
    %v5634 = vpack.c.b16 %v5494, %v5490
    %v5635 = vpack.c.b16 %v5499, %v5495
    %v5636 = vpack.c.b16 %v5500, %v5496
    %v5637 = vpack.c.b16 %v5501, %v5497
    %v5638 = vpack.c.b16 %v5502, %v5498
    %v5639 = vpack.c.b16 %v5507, %v5503
    %v5640 = vpack.c.b16 %v5508, %v5504
    %v5641 = vpack.c.b16 %v5509, %v5505
    %v5642 = vpack.c.b16 %v5510, %v5506
    %v5643 = vpack.c.b16 %v5515, %v5511
    %v5644 = vpack.c.b16 %v5516, %v5512
    %v5645 = vpack.c.b16 %v5517, %v5513
    %v5646 = vpack.c.b16 %v5518, %v5514
    %5775 = vmatprep.subr.bf16.mxu0 %v5520
    %5776 = vmatpush1.bf16.msra.mxu0 %v5519
    %5777 = vmatprep.subr.bf16.mxu0 %v5524
    %5778 = vmatpush1.bf16.msra.mxu0 %v5523
    %5779 = vmatprep.subr.bf16.mxu0 %v5528
    %5780 = vmatpush1.bf16.msra.mxu0 %v5527
    %5781 = vmatprep.subr.bf16.mxu0 %v5532
    %5782 = vmatpush1.bf16.msra.mxu0 %v5531
    %5783 = vmatprep.subr.bf16.mxu0 %v5536
    %5784 = vmatpush1.bf16.msra.mxu0 %v5535
    %5785 = vmatprep.subr.bf16.mxu0 %v5540
    %5786 = vmatpush1.bf16.msra.mxu0 %v5539
    %5787 = vmatprep.subr.bf16.mxu0 %v5544
    %5788 = vmatpush1.bf16.msra.mxu0 %v5543
    %5789 = vmatprep.subr.bf16.mxu0 %v5548
    %5790 = vmatpush1.bf16.msra.mxu0 %v5547
    %5791 = vmatprep.subr.bf16.mxu0 %v5552
    %5792 = vmatpush1.bf16.msra.mxu0 %v5551
    %5793 = vmatprep.subr.bf16.mxu0 %v5556
    %5794 = vmatpush1.bf16.msra.mxu0 %v5555
    %5795 = vmatprep.subr.bf16.mxu0 %v5560
    %5796 = vmatpush1.bf16.msra.mxu0 %v5559
    %5797 = vmatprep.subr.bf16.mxu0 %v5564
    %5798 = vmatpush1.bf16.msra.mxu0 %v5563
    %5799 = vmatprep.subr.bf16.mxu0 %v5568
    %5800 = vmatpush1.bf16.msra.mxu0 %v5567
    %5801 = vmatprep.subr.bf16.mxu0 %v5572
    %5802 = vmatpush1.bf16.msra.mxu0 %v5571
    %5803 = vmatprep.subr.bf16.mxu0 %v5576
    %5804 = vmatpush1.bf16.msra.mxu0 %v5575
    %5805 = vmatprep.subr.bf16.mxu0 %v5580
    %5806 = vmatpush1.bf16.msra.mxu0 %v5579
    %5807 = vmatprep.mubr.bf16.mxu0 %v4842
    %5808 = vmatmul.mubr.bf16.gmra.mrb[0].mxu0 %v4840
    %v5809 = vpop.f32.mrb[0].mxu0
    %v5810 = vadd.f32 %v5060, %v5809
    %v5811 = vpop.f32.mrb[0].mxu0
    %v5812 = vadd.f32 %v5062, %v5811
    %v5813 = vpop.f32.mrb[0].mxu0
    %v5814 = vpop.f32.mrb[0].mxu0
    %5815 = vdwg.mxu0
    %5816 = vmatprep.subr.bf16.mxu0 %v5584
    %5817 = vmatpush1.bf16.msra.mxu0 %v5583
    %5818 = vmatprep.subr.bf16.mxu0 %v5588
    %5819 = vmatpush1.bf16.msra.mxu0 %v5587
    %5820 = vmatprep.subr.bf16.mxu0 %v5592
    %5821 = vmatpush1.bf16.msra.mxu0 %v5591
    %5822 = vmatprep.subr.bf16.mxu0 %v5596
    %5823 = vmatpush1.bf16.msra.mxu0 %v5595
    %5824 = vmatprep.subr.bf16.mxu0 %v5600
    %5825 = vmatpush1.bf16.msra.mxu0 %v5599
    %5826 = vmatprep.subr.bf16.mxu0 %v5604
    %5827 = vmatpush1.bf16.msra.mxu0 %v5603
    %5828 = vmatprep.subr.bf16.mxu0 %v5608
    %5829 = vmatpush1.bf16.msra.mxu0 %v5607
    %5830 = vmatprep.subr.bf16.mxu0 %v5612
    %5831 = vmatpush1.bf16.msra.mxu0 %v5611
    %5832 = vmatprep.subr.bf16.mxu0 %v5616
    %5833 = vmatpush1.bf16.msra.mxu0 %v5615
    %5834 = vmatprep.subr.bf16.mxu0 %v5620
    %5835 = vmatpush1.bf16.msra.mxu0 %v5619
    %5836 = vmatprep.subr.bf16.mxu0 %v5624
    %5837 = vmatpush1.bf16.msra.mxu0 %v5623
    %5838 = vmatprep.subr.bf16.mxu0 %v5628
    %5839 = vmatpush1.bf16.msra.mxu0 %v5627
    %5840 = vmatprep.subr.bf16.mxu0 %v5632
    %5841 = vmatpush1.bf16.msra.mxu0 %v5631
    %5842 = vmatprep.subr.bf16.mxu0 %v5636
    %5843 = vmatpush1.bf16.msra.mxu0 %v5635
    %5844 = vmatprep.subr.bf16.mxu0 %v5640
    %5845 = vmatpush1.bf16.msra.mxu0 %v5639
    %5846 = vmatprep.subr.bf16.mxu0 %v5644
    %5847 = vmatpush1.bf16.msra.mxu0 %v5643
    %5848 = vmatprep.mubr.bf16.mxu0 %v4846
    %5849 = vmatmul.mubr.bf16.gmra.mrb[0].mxu0 %v4844
    %v5850 = vpop.f32.mrb[0].mxu0
    %v5851 = vadd.f32 %v5810, %v5850
    %v5852 = vpop.f32.mrb[0].mxu0
    %v5853 = vadd.f32 %v5812, %v5852
    %v5854 = vpop.f32.mrb[0].mxu0
    %v5855 = vpop.f32.mrb[0].mxu0
    %5856 = vdwg.mxu0
    %5857 = vmatprep.subr.bf16.mxu0 %v5522
    %5858 = vmatpush1.bf16.msra.mxu0 %v5521
    %5859 = vmatprep.subr.bf16.mxu0 %v5526
    %5860 = vmatpush1.bf16.msra.mxu0 %v5525
    %5861 = vmatprep.subr.bf16.mxu0 %v5530
    %5862 = vmatpush1.bf16.msra.mxu0 %v5529
    %5863 = vmatprep.subr.bf16.mxu0 %v5534
    %5864 = vmatpush1.bf16.msra.mxu0 %v5533
    %5865 = vmatprep.subr.bf16.mxu0 %v5538
    %5866 = vmatpush1.bf16.msra.mxu0 %v5537
    %5867 = vmatprep.subr.bf16.mxu0 %v5542
    %5868 = vmatpush1.bf16.msra.mxu0 %v5541
    %5869 = vmatprep.subr.bf16.mxu0 %v5546
    %5870 = vmatpush1.bf16.msra.mxu0 %v5545
    %5871 = vmatprep.subr.bf16.mxu0 %v5550
    %5872 = vmatpush1.bf16.msra.mxu0 %v5549
    %5873 = vmatprep.subr.bf16.mxu0 %v5554
    %5874 = vmatpush1.bf16.msra.mxu0 %v5553
    %5875 = vmatprep.subr.bf16.mxu0 %v5558
    %5876 = vmatpush1.bf16.msra.mxu0 %v5557
    %5877 = vmatprep.subr.bf16.mxu0 %v5562
    %5878 = vmatpush1.bf16.msra.mxu0 %v5561
    %5879 = vmatprep.subr.bf16.mxu0 %v5566
    %5880 = vmatpush1.bf16.msra.mxu0 %v5565
    %5881 = vmatprep.subr.bf16.mxu0 %v5570
    %5882 = vmatpush1.bf16.msra.mxu0 %v5569
    %5883 = vmatprep.subr.bf16.mxu0 %v5574
    %5884 = vmatpush1.bf16.msra.mxu0 %v5573
    %5885 = vmatprep.subr.bf16.mxu0 %v5578
    %5886 = vmatpush1.bf16.msra.mxu0 %v5577
    %5887 = vmatprep.subr.bf16.mxu0 %v5582
    %5888 = vmatpush1.bf16.msra.mxu0 %v5581
    %5889 = vmatprep.mubr.bf16.mxu0 %v4842
    %5890 = vmatmul.mubr.bf16.gmra.mrb[0].mxu0 %v4840
    %v5891 = vpop.f32.mrb[0].mxu0
    %v5892 = vadd.f32 %v5131, %v5891
    %v5893 = vpop.f32.mrb[0].mxu0
    %v5894 = vadd.f32 %v5133, %v5893
    %v5895 = vpop.f32.mrb[0].mxu0
    %v5896 = vpop.f32.mrb[0].mxu0
    %5897 = vdwg.mxu0
    %5898 = vmatprep.subr.bf16.mxu0 %v5586
    %5899 = vmatpush1.bf16.msra.mxu0 %v5585
    %5900 = vmatprep.subr.bf16.mxu0 %v5590
    %5901 = vmatpush1.bf16.msra.mxu0 %v5589
    %5902 = vmatprep.subr.bf16.mxu0 %v5594
    %5903 = vmatpush1.bf16.msra.mxu0 %v5593
    %5904 = vmatprep.subr.bf16.mxu0 %v5598
    %5905 = vmatpush1.bf16.msra.mxu0 %v5597
    %5906 = vmatprep.subr.bf16.mxu0 %v5602
    %5907 = vmatpush1.bf16.msra.mxu0 %v5601
    %5908 = vmatprep.subr.bf16.mxu0 %v5606
    %5909 = vmatpush1.bf16.msra.mxu0 %v5605
    %5910 = vmatprep.subr.bf16.mxu0 %v5610
    %5911 = vmatpush1.bf16.msra.mxu0 %v5609
    %5912 = vmatprep.subr.bf16.mxu0 %v5614
    %5913 = vmatpush1.bf16.msra.mxu0 %v5613
    %5914 = vmatprep.subr.bf16.mxu0 %v5618
    %5915 = vmatpush1.bf16.msra.mxu0 %v5617
    %5916 = vmatprep.subr.bf16.mxu0 %v5622
    %5917 = vmatpush1.bf16.msra.mxu0 %v5621
    %5918 = vmatprep.subr.bf16.mxu0 %v5626
    %5919 = vmatpush1.bf16.msra.mxu0 %v5625
    %5920 = vmatprep.subr.bf16.mxu0 %v5630
    %5921 = vmatpush1.bf16.msra.mxu0 %v5629
    %5922 = vmatprep.subr.bf16.mxu0 %v5634
    %5923 = vmatpush1.bf16.msra.mxu0 %v5633
    %5924 = vmatprep.subr.bf16.mxu0 %v5638
    %5925 = vmatpush1.bf16.msra.mxu0 %v5637
    %5926 = vmatprep.subr.bf16.mxu0 %v5642
    %5927 = vmatpush1.bf16.msra.mxu0 %v5641
    %5928 = vmatprep.subr.bf16.mxu0 %v5646
    %5929 = vmatpush1.bf16.msra.mxu0 %v5645
    %5930 = vmatprep.mubr.bf16.mxu0 %v4846
    %5931 = vmatmul.mubr.bf16.gmra.mrb[0].mxu0 %v4844
    %v5932 = vpop.f32.mrb[0].mxu0
    %v5933 = vadd.f32 %v5892, %v5932
    %v5934 = vpop.f32.mrb[0].mxu0
    %v5935 = vadd.f32 %v5894, %v5934
    %v5936 = vpop.f32.mrb[0].mxu0
    %v5937 = vpop.f32.mrb[0].mxu0
    %5938 = vdwg.mxu0
    %v5939 = vld [vmem:[%s12] sm:$0xf]
    %v5941 = vlaneseq
    %v5942 = vshrl.u32 %v5941, 7
    %v5943 = vsub.s32 0, %v5942
    %v5944 = vrot.slane %v5939, %v5943
    %v5945 = vlaneseq
    %v5946 = vshrl.u32 %v5945, 7
    %v5947 = vsub.s32 1, %v5946
    %v5948 = vrot.slane %v5939, %v5947
    %v5949 = vlaneseq
    %v5950 = vshrl.u32 %v5949, 7
    %v5951 = vsub.s32 2, %v5950
    %v5952 = vrot.slane %v5939, %v5951
    %v5953 = vlaneseq
    %v5954 = vshrl.u32 %v5953, 7
    %v5955 = vsub.s32 3, %v5954
    %v5956 = vrot.slane %v5939, %v5955
    %v5961 = vadd.f32 %v5851, %v5944
    %v5962 = vadd.f32 %v5853, %v5948
    %v5963 = vadd.f32 %v5933, %v5952
    %v5964 = vadd.f32 %v5935, %v5956
    %v5965 = vmax.f32 %v5961, 0.0
    %v5966 = vmax.f32 %v5962, 0.0
    %v5967 = vmax.f32 %v5963, 0.0
    %v5968 = vmax.f32 %v5964, 0.0
    %v5969 = vpack.c.bf16 %v5965, %v5965
    %v5970 = vpack.c.bf16 %v5966, %v5966
    %v5971 = vpack.c.bf16 %v5967, %v5967
    %v5972 = vpack.c.bf16 %v5968, %v5968
    %v5973 = vld [vmem:[%s13] sm:$0xf]
    %v5974 = vld [vmem:[%s13 + $0x4] sm:$0xf]
    %v5975 = vld [vmem:[%s13 + $0x8] sm:$0xf]
    %v5976 = vld [vmem:[%s13 + $0xc] sm:$0xf]
    %v5977 = vld [vmem:[%s13 + $0x10] sm:$0xf]
    %v5978 = vld [vmem:[%s13 + $0x14] sm:$0xf]
    %v5979 = vld [vmem:[%s13 + $0x18] sm:$0xf]
    %v5980 = vld [vmem:[%s13 + $0x1c] sm:$0xf]
    %v5981 = vld [vmem:[%s13 + $0x20] sm:$0xf]
    %v5982 = vld [vmem:[%s13 + $0x24] sm:$0xf]
    %v5983 = vld [vmem:[%s13 + $0x28] sm:$0xf]
    %v5984 = vld [vmem:[%s13 + $0x2c] sm:$0xf]
    %v5985 = vld [vmem:[%s13 + $0x30] sm:$0xf]
    %v5986 = vld [vmem:[%s13 + $0x34] sm:$0xf]
    %v5987 = vld [vmem:[%s13 + $0x38] sm:$0xf]
    %v5988 = vld [vmem:[%s13 + $0x3c] sm:$0xf]
    %v5989 = vld [vmem:[%s13 + $0x40] sm:$0xf]
    %v5990 = vld [vmem:[%s13 + $0x44] sm:$0xf]
    %v5991 = vld [vmem:[%s13 + $0x48] sm:$0xf]
    %v5992 = vld [vmem:[%s13 + $0x4c] sm:$0xf]
    %v5993 = vld [vmem:[%s13 + $0x50] sm:$0xf]
    %v5994 = vld [vmem:[%s13 + $0x54] sm:$0xf]
    %v5995 = vld [vmem:[%s13 + $0x58] sm:$0xf]
    %v5996 = vld [vmem:[%s13 + $0x5c] sm:$0xf]
    %v5997 = vld [vmem:[%s13 + $0x60] sm:$0xf]
    %v5998 = vld [vmem:[%s13 + $0x64] sm:$0xf]
    %v5999 = vld [vmem:[%s13 + $0x68] sm:$0xf]
    %v6000 = vld [vmem:[%s13 + $0x6c] sm:$0xf]
    %v6001 = vld [vmem:[%s13 + $0x70] sm:$0xf]
    %v6002 = vld [vmem:[%s13 + $0x74] sm:$0xf]
    %v6003 = vld [vmem:[%s13 + $0x78] sm:$0xf]
    %v6004 = vld [vmem:[%s13 + $0x7c] sm:$0xf]
    %v6005 = vld [vmem:[%s13 + $0x80] sm:$0xf]
    %v6006 = vld [vmem:[%s13 + $0x84] sm:$0xf]
    %v6007 = vld [vmem:[%s13 + $0x88] sm:$0xf]
    %v6008 = vld [vmem:[%s13 + $0x8c] sm:$0xf]
    %v6009 = vld [vmem:[%s13 + $0x90] sm:$0xf]
    %v6010 = vld [vmem:[%s13 + $0x94] sm:$0xf]
    %v6011 = vld [vmem:[%s13 + $0x98] sm:$0xf]
    %v6012 = vld [vmem:[%s13 + $0x9c] sm:$0xf]
    %v6013 = vld [vmem:[%s13 + $0xa0] sm:$0xf]
    %v6014 = vld [vmem:[%s13 + $0xa4] sm:$0xf]
    %v6015 = vld [vmem:[%s13 + $0xa8] sm:$0xf]
    %v6016 = vld [vmem:[%s13 + $0xac] sm:$0xf]
    %v6017 = vld [vmem:[%s13 + $0xb0] sm:$0xf]
    %v6018 = vld [vmem:[%s13 + $0xb4] sm:$0xf]
    %v6019 = vld [vmem:[%s13 + $0xb8] sm:$0xf]
    %v6020 = vld [vmem:[%s13 + $0xbc] sm:$0xf]
    %v6021 = vld [vmem:[%s13 + $0xc0] sm:$0xf]
    %v6022 = vld [vmem:[%s13 + $0xc4] sm:$0xf]
    %v6023 = vld [vmem:[%s13 + $0xc8] sm:$0xf]
    %v6024 = vld [vmem:[%s13 + $0xcc] sm:$0xf]
    %v6025 = vld [vmem:[%s13 + $0xd0] sm:$0xf]
    %v6026 = vld [vmem:[%s13 + $0xd4] sm:$0xf]
    %v6027 = vld [vmem:[%s13 + $0xd8] sm:$0xf]
    %v6028 = vld [vmem:[%s13 + $0xdc] sm:$0xf]
    %v6029 = vld [vmem:[%s13 + $0xe0] sm:$0xf]
    %v6030 = vld [vmem:[%s13 + $0xe4] sm:$0xf]
    %v6031 = vld [vmem:[%s13 + $0xe8] sm:$0xf]
    %v6032 = vld [vmem:[%s13 + $0xec] sm:$0xf]
    %v6033 = vld [vmem:[%s13 + $0xf0] sm:$0xf]
    %v6034 = vld [vmem:[%s13 + $0xf4] sm:$0xf]
    %v6035 = vld [vmem:[%s13 + $0xf8] sm:$0xf]
    %v6036 = vld [vmem:[%s13 + $0xfc] sm:$0xf]
    %v6037 = vld [vmem:[%s14] sm:$0x1]
    %v6039 = vlaneseq
    %v6040 = vshrl.u32 %v6039, 7
    %v6041 = vsub.s32 0, %v6040
    %v6042 = vrot.slane %v6037, %v6041
    %v6108 = vunpack.c.l.b16 %v5973
    %v6109 = vunpack.c.l.b16 %v5974
    %v6110 = vunpack.c.l.b16 %v5975
    %v6111 = vunpack.c.l.b16 %v5976
    %v6112 = vunpack.c.l.b16 %v5977
    %v6113 = vunpack.c.l.b16 %v5978
    %v6114 = vunpack.c.l.b16 %v5979
    %v6115 = vunpack.c.l.b16 %v5980
    %v6116 = vunpack.c.l.b16 %v5981
    %v6117 = vunpack.c.l.b16 %v5982
    %v6118 = vunpack.c.l.b16 %v5983
    %v6119 = vunpack.c.l.b16 %v5984
    %v6120 = vunpack.c.l.b16 %v5985
    %v6121 = vunpack.c.l.b16 %v5986
    %v6122 = vunpack.c.l.b16 %v5987
    %v6123 = vunpack.c.l.b16 %v5988
    %v6124 = vunpack.c.l.b16 %v5989
    %v6125 = vunpack.c.l.b16 %v5990
    %v6126 = vunpack.c.l.b16 %v5991
    %v6127 = vunpack.c.l.b16 %v5992
    %v6128 = vunpack.c.l.b16 %v5993
    %v6129 = vunpack.c.l.b16 %v5994
    %v6130 = vunpack.c.l.b16 %v5995
    %v6131 = vunpack.c.l.b16 %v5996
    %v6132 = vunpack.c.l.b16 %v5997
    %v6133 = vunpack.c.l.b16 %v5998
    %v6134 = vunpack.c.l.b16 %v5999
    %v6135 = vunpack.c.l.b16 %v6000
    %v6136 = vunpack.c.l.b16 %v6001
    %v6137 = vunpack.c.l.b16 %v6002
    %v6138 = vunpack.c.l.b16 %v6003
    %v6139 = vunpack.c.l.b16 %v6004
    %v6140 = vunpack.c.l.b16 %v6005
    %v6141 = vunpack.c.l.b16 %v6006
    %v6142 = vunpack.c.l.b16 %v6007
    %v6143 = vunpack.c.l.b16 %v6008
    %v6144 = vunpack.c.l.b16 %v6009
    %v6145 = vunpack.c.l.b16 %v6010
    %v6146 = vunpack.c.l.b16 %v6011
    %v6147 = vunpack.c.l.b16 %v6012
    %v6148 = vunpack.c.l.b16 %v6013
    %v6149 = vunpack.c.l.b16 %v6014
    %v6150 = vunpack.c.l.b16 %v6015
    %v6151 = vunpack.c.l.b16 %v6016
    %v6152 = vunpack.c.l.b16 %v6017
    %v6153 = vunpack.c.l.b16 %v6018
    %v6154 = vunpack.c.l.b16 %v6019
    %v6155 = vunpack.c.l.b16 %v6020
    %v6156 = vunpack.c.l.b16 %v6021
    %v6157 = vunpack.c.l.b16 %v6022
    %v6158 = vunpack.c.l.b16 %v6023
    %v6159 = vunpack.c.l.b16 %v6024
    %v6160 = vunpack.c.l.b16 %v6025
    %v6161 = vunpack.c.l.b16 %v6026
    %v6162 = vunpack.c.l.b16 %v6027
    %v6163 = vunpack.c.l.b16 %v6028
    %v6164 = vunpack.c.l.b16 %v6029
    %v6165 = vunpack.c.l.b16 %v6030
    %v6166 = vunpack.c.l.b16 %v6031
    %v6167 = vunpack.c.l.b16 %v6032
    %v6168 = vunpack.c.l.b16 %v6033
    %v6169 = vunpack.c.l.b16 %v6034
    %v6170 = vunpack.c.l.b16 %v6035
    %v6171 = vunpack.c.l.b16 %v6036
    %v6172 = vpack.c.b16 %v6109, %v6108
    %v6173 = vpack.c.b16 %v6111, %v6110
    %v6174 = vpack.c.b16 %v6113, %v6112
    %v6175 = vpack.c.b16 %v6115, %v6114
    %v6176 = vpack.c.b16 %v6117, %v6116
    %v6177 = vpack.c.b16 %v6119, %v6118
    %v6178 = vpack.c.b16 %v6121, %v6120
    %v6179 = vpack.c.b16 %v6123, %v6122
    %v6180 = vpack.c.b16 %v6125, %v6124
    %v6181 = vpack.c.b16 %v6127, %v6126
    %v6182 = vpack.c.b16 %v6129, %v6128
    %v6183 = vpack.c.b16 %v6131, %v6130
    %v6184 = vpack.c.b16 %v6133, %v6132
    %v6185 = vpack.c.b16 %v6135, %v6134
    %v6186 = vpack.c.b16 %v6137, %v6136
    %v6187 = vpack.c.b16 %v6139, %v6138
    %v6188 = vpack.c.b16 %v6141, %v6140
    %v6189 = vpack.c.b16 %v6143, %v6142
    %v6190 = vpack.c.b16 %v6145, %v6144
    %v6191 = vpack.c.b16 %v6147, %v6146
    %v6192 = vpack.c.b16 %v6149, %v6148
    %v6193 = vpack.c.b16 %v6151, %v6150
    %v6194 = vpack.c.b16 %v6153, %v6152
    %v6195 = vpack.c.b16 %v6155, %v6154
    %v6196 = vpack.c.b16 %v6157, %v6156
    %v6197 = vpack.c.b16 %v6159, %v6158
    %v6198 = vpack.c.b16 %v6161, %v6160
    %v6199 = vpack.c.b16 %v6163, %v6162
    %v6200 = vpack.c.b16 %v6165, %v6164
    %v6201 = vpack.c.b16 %v6167, %v6166
    %v6202 = vpack.c.b16 %v6169, %v6168
    %v6203 = vpack.c.b16 %v6171, %v6170
    %6236 = vmatprep.subr.bf16.mxu0 0
    %6237 = vmatpush1.bf16.msra.mxu0 %v6172
    %6238 = vmatprep.subr.bf16.mxu0 0
    %6239 = vmatpush1.bf16.msra.mxu0 %v6173
    %6240 = vmatprep.subr.bf16.mxu0 0
    %6241 = vmatpush1.bf16.msra.mxu0 %v6174
    %6242 = vmatprep.subr.bf16.mxu0 0
    %6243 = vmatpush1.bf16.msra.mxu0 %v6175
    %6244 = vmatprep.subr.bf16.mxu0 0
    %6245 = vmatpush1.bf16.msra.mxu0 %v6176
    %6246 = vmatprep.subr.bf16.mxu0 0
    %6247 = vmatpush1.bf16.msra.mxu0 %v6177
    %6248 = vmatprep.subr.bf16.mxu0 0
    %6249 = vmatpush1.bf16.msra.mxu0 %v6178
    %6250 = vmatprep.subr.bf16.mxu0 0
    %6251 = vmatpush1.bf16.msra.mxu0 %v6179
    %6252 = vmatprep.subr.bf16.mxu0 0
    %6253 = vmatpush1.bf16.msra.mxu0 %v6180
    %6254 = vmatprep.subr.bf16.mxu0 0
    %6255 = vmatpush1.bf16.msra.mxu0 %v6181
    %6256 = vmatprep.subr.bf16.mxu0 0
    %6257 = vmatpush1.bf16.msra.mxu0 %v6182
    %6258 = vmatprep.subr.bf16.mxu0 0
    %6259 = vmatpush1.bf16.msra.mxu0 %v6183
    %6260 = vmatprep.subr.bf16.mxu0 0
    %6261 = vmatpush1.bf16.msra.mxu0 %v6184
    %6262 = vmatprep.subr.bf16.mxu0 0
    %6263 = vmatpush1.bf16.msra.mxu0 %v6185
    %6264 = vmatprep.subr.bf16.mxu0 0
    %6265 = vmatpush1.bf16.msra.mxu0 %v6186
    %6266 = vmatprep.subr.bf16.mxu0 0
    %6267 = vmatpush1.bf16.msra.mxu0 %v6187
    %6268 = vmatprep.mubr.bf16.mxu0 %v5970
    %6269 = vmatmul.mubr.bf16.gmra.mrb[0].mxu0 %v5969
    %v6270 = vpop.f32.mrb[0].mxu0
    %v6271 = vadd.f32 %v6042, %v6270
    %v6272 = vpop.f32.mrb[0].mxu0
    %v6273 = vpop.f32.mrb[0].mxu0
    %v6274 = vpop.f32.mrb[0].mxu0
    %6275 = vdwg.mxu0
    %6276 = vmatprep.subr.bf16.mxu0 0
    %6277 = vmatpush1.bf16.msra.mxu0 %v6188
    %6278 = vmatprep.subr.bf16.mxu0 0
    %6279 = vmatpush1.bf16.msra.mxu0 %v6189
    %6280 = vmatprep.subr.bf16.mxu0 0
    %6281 = vmatpush1.bf16.msra.mxu0 %v6190
    %6282 = vmatprep.subr.bf16.mxu0 0
    %6283 = vmatpush1.bf16.msra.mxu0 %v6191
    %6284 = vmatprep.subr.bf16.mxu0 0
    %6285 = vmatpush1.bf16.msra.mxu0 %v6192
    %6286 = vmatprep.subr.bf16.mxu0 0
    %6287 = vmatpush1.bf16.msra.mxu0 %v6193
    %6288 = vmatprep.subr.bf16.mxu0 0
    %6289 = vmatpush1.bf16.msra.mxu0 %v6194
    %6290 = vmatprep.subr.bf16.mxu0 0
    %6291 = vmatpush1.bf16.msra.mxu0 %v6195
    %6292 = vmatprep.subr.bf16.mxu0 0
    %6293 = vmatpush1.bf16.msra.mxu0 %v6196
    %6294 = vmatprep.subr.bf16.mxu0 0
    %6295 = vmatpush1.bf16.msra.mxu0 %v6197
    %6296 = vmatprep.subr.bf16.mxu0 0
    %6297 = vmatpush1.bf16.msra.mxu0 %v6198
    %6298 = vmatprep.subr.bf16.mxu0 0
    %6299 = vmatpush1.bf16.msra.mxu0 %v6199
    %6300 = vmatprep.subr.bf16.mxu0 0
    %6301 = vmatpush1.bf16.msra.mxu0 %v6200
    %6302 = vmatprep.subr.bf16.mxu0 0
    %6303 = vmatpush1.bf16.msra.mxu0 %v6201
    %6304 = vmatprep.subr.bf16.mxu0 0
    %6305 = vmatpush1.bf16.msra.mxu0 %v6202
    %6306 = vmatprep.subr.bf16.mxu0 0
    %6307 = vmatpush1.bf16.msra.mxu0 %v6203
    %6308 = vmatprep.mubr.bf16.mxu0 %v5972
    %6309 = vmatmul.mubr.bf16.gmra.mrb[0].mxu0 %v5971
    %v6310 = vpop.f32.mrb[0].mxu0
    %v6311 = vadd.f32 %v6271, %v6310
    %v6312 = vpop.f32.mrb[0].mxu0
    %v6313 = vpop.f32.mrb[0].mxu0
    %v6314 = vpop.f32.mrb[0].mxu0
    %6315 = vdwg.mxu0
    %v6316 = vmax.f32 %v6311, 0.0
    %v6317 = vpack.c.bf16 %v6316, %v6316
    %v6318 = vld [vmem:[%s15] sm:$0xf]
    %v6319 = vld [vmem:[%s15 + $0x4] sm:$0xf]
    %v6320 = vld [vmem:[%s15 + $0x8] sm:$0xf]
    %v6321 = vld [vmem:[%s15 + $0xc] sm:$0xf]
    %v6322 = vld [vmem:[%s15 + $0x10] sm:$0xf]
    %v6323 = vld [vmem:[%s15 + $0x14] sm:$0xf]
    %v6324 = vld [vmem:[%s15 + $0x18] sm:$0xf]
    %v6325 = vld [vmem:[%s15 + $0x1c] sm:$0xf]
    %v6326 = vld [vmem:[%s15 + $0x20] sm:$0xf]
    %v6327 = vld [vmem:[%s15 + $0x24] sm:$0xf]
    %v6328 = vld [vmem:[%s15 + $0x28] sm:$0xf]
    %v6329 = vld [vmem:[%s15 + $0x2c] sm:$0xf]
    %v6330 = vld [vmem:[%s15 + $0x30] sm:$0xf]
    %v6331 = vld [vmem:[%s15 + $0x34] sm:$0xf]
    %v6332 = vld [vmem:[%s15 + $0x38] sm:$0xf]
    %v6333 = vld [vmem:[%s15 + $0x3c] sm:$0xf]
    %v6334 = vld [vmem:[%s16] sm:$0x1]
    %v6336 = vlaneseq
    %v6337 = vshrl.u32 %v6336, 7
    %v6338 = vsub.s32 0, %v6337
    %v6339 = vrot.slane %v6334, %v6338
    %v6357 = vunpack.c.l.b16 %v6318
    %v6358 = vunpack.c.l.b16 %v6319
    %v6359 = vunpack.c.l.b16 %v6320
    %v6360 = vunpack.c.l.b16 %v6321
    %v6361 = vunpack.c.l.b16 %v6322
    %v6362 = vunpack.c.l.b16 %v6323
    %v6363 = vunpack.c.l.b16 %v6324
    %v6364 = vunpack.c.l.b16 %v6325
    %v6365 = vunpack.c.l.b16 %v6326
    %v6366 = vunpack.c.l.b16 %v6327
    %v6367 = vunpack.c.l.b16 %v6328
    %v6368 = vunpack.c.l.b16 %v6329
    %v6369 = vunpack.c.l.b16 %v6330
    %v6370 = vunpack.c.l.b16 %v6331
    %v6371 = vunpack.c.l.b16 %v6332
    %v6372 = vunpack.c.l.b16 %v6333
    %v6373 = vpack.c.b16 %v6358, %v6357
    %v6374 = vpack.c.b16 %v6360, %v6359
    %v6375 = vpack.c.b16 %v6362, %v6361
    %v6376 = vpack.c.b16 %v6364, %v6363
    %v6377 = vpack.c.b16 %v6366, %v6365
    %v6378 = vpack.c.b16 %v6368, %v6367
    %v6379 = vpack.c.b16 %v6370, %v6369
    %v6380 = vpack.c.b16 %v6372, %v6371
    %6389 = vmatprep.subr.bf16.mxu0 0
    %6390 = vmatpush1.bf16.msra.mxu0 %v6373
    %6391 = vmatprep.subr.bf16.mxu0 0
    %6392 = vmatpush1.bf16.msra.mxu0 %v6374
    %6393 = vmatprep.subr.bf16.mxu0 0
    %6394 = vmatpush1.bf16.msra.mxu0 %v6375
    %6395 = vmatprep.subr.bf16.mxu0 0
    %6396 = vmatpush1.bf16.msra.mxu0 %v6376
    %6397 = vmatprep.subr.bf16.mxu0 0
    %6398 = vmatpush1.bf16.msra.mxu0 %v6377
    %6399 = vmatprep.subr.bf16.mxu0 0
    %6400 = vmatpush1.bf16.msra.mxu0 %v6378
    %6401 = vmatprep.subr.bf16.mxu0 0
    %6402 = vmatpush1.bf16.msra.mxu0 %v6379
    %6403 = vmatprep.subr.bf16.mxu0 0
    %6404 = vmatpush1.bf16.msra.mxu0 %v6380
    %6405 = vmatprep.subr.bf16.mxu0 0
    %6406 = vmatpush1.bf16.msra.mxu0 0
    %6407 = vmatprep.subr.bf16.mxu0 0
    %6408 = vmatpush1.bf16.msra.mxu0 0
    %6409 = vmatprep.subr.bf16.mxu0 0
    %6410 = vmatpush1.bf16.msra.mxu0 0
    %6411 = vmatprep.subr.bf16.mxu0 0
    %6412 = vmatpush1.bf16.msra.mxu0 0
    %6413 = vmatprep.subr.bf16.mxu0 0
    %6414 = vmatpush1.bf16.msra.mxu0 0
    %6415 = vmatprep.subr.bf16.mxu0 0
    %6416 = vmatpush1.bf16.msra.mxu0 0
    %6417 = vmatprep.subr.bf16.mxu0 0
    %6418 = vmatpush1.bf16.msra.mxu0 0
    %6419 = vmatprep.subr.bf16.mxu0 0
    %6420 = vmatpush1.bf16.msra.mxu0 0
    %6421 = vmatprep.mubr.bf16.mxu0 0
    %6422 = vmatmul.mubr.bf16.gmra.mrb[0].mxu0 %v6317
    %v6423 = vpop.f32.mrb[0].mxu0
    %v6424 = vadd.f32 %v6339, %v6423
    %v6425 = vpop.f32.mrb[0].mxu0
    %v6426 = vpop.f32.mrb[0].mxu0
    %v6427 = vpop.f32.mrb[0].mxu0
    %6428 = vdwg.mxu0
    %v6429 = vmax.f32 %v6424, 0.0
    %v6430 = vld [vmem:[%s17] sm:$0xff]
    %v6431 = vld [vmem:[%s17 + $0x8] sm:$0xff]
    %v6432 = vld [vmem:[%s17 + $0x10] sm:$0xff]
    %v6433 = vld [vmem:[%s17 + $0x18] sm:$0xff]
    %v6434 = vld [vmem:[%s17 + $0x20] sm:$0xff]
    %v6435 = vld [vmem:[%s17 + $0x28] sm:$0xff]
    %v6436 = vld [vmem:[%s17 + $0x30] sm:$0xff]
    %v6437 = vld [vmem:[%s17 + $0x38] sm:$0xff]
    %v6438 = vld [vmem:[%s18] sm:$0x1]
    %v6440 = vlaneseq
    %v6441 = vshrl.u32 %v6440, 7
    %v6442 = vsub.s32 0, %v6441
    %v6443 = vrot.slane %v6438, %v6442
    %v6446 = vsel %vm424, %v6429, 0
    %6448 = vmatprep.subr.mxu0 0.0
    %6449 = vmatpush1.msra.mxu0 %v6430
    %6450 = vmatprep.subr.mxu0 0.0
    %6451 = vmatpush1.msra.mxu0 %v6431
    %6452 = vmatprep.subr.mxu0 0.0
    %6453 = vmatpush1.msra.mxu0 %v6432
    %6454 = vmatprep.subr.mxu0 0.0
    %6455 = vmatpush1.msra.mxu0 %v6433
    %6456 = vmatprep.subr.mxu0 0.0
    %6457 = vmatpush1.msra.mxu0 %v6434
    %6458 = vmatprep.subr.mxu0 0.0
    %6459 = vmatpush1.msra.mxu0 %v6435
    %6460 = vmatprep.subr.mxu0 0.0
    %6461 = vmatpush1.msra.mxu0 %v6436
    %6462 = vmatprep.subr.mxu0 0.0
    %6463 = vmatpush1.msra.mxu0 %v6437
    %6464 = vmatprep.subr.mxu0 0.0
    %6465 = vmatpush1.msra.mxu0 0.0
    %6466 = vmatprep.subr.mxu0 0.0
    %6467 = vmatpush1.msra.mxu0 0.0
    %6468 = vmatprep.subr.mxu0 0.0
    %6469 = vmatpush1.msra.mxu0 0.0
    %6470 = vmatprep.subr.mxu0 0.0
    %6471 = vmatpush1.msra.mxu0 0.0
    %6472 = vmatprep.subr.mxu0 0.0
    %6473 = vmatpush1.msra.mxu0 0.0
    %6474 = vmatprep.subr.mxu0 0.0
    %6475 = vmatpush1.msra.mxu0 0.0
    %6476 = vmatprep.subr.mxu0 0.0
    %6477 = vmatpush1.msra.mxu0 0.0
    %6478 = vmatprep.subr.mxu0 0.0
    %6479 = vmatpush1.msra.mxu0 0.0
    %6480 = vmatprep.subr.mxu0 0.0
    %6481 = vmatpush1.msra.mxu0 0.0
    %6482 = vmatprep.subr.mxu0 0.0
    %6483 = vmatpush1.msra.mxu0 0.0
    %6484 = vmatprep.subr.mxu0 0.0
    %6485 = vmatpush1.msra.mxu0 0.0
    %6486 = vmatprep.subr.mxu0 0.0
    %6487 = vmatpush1.msra.mxu0 0.0
    %6488 = vmatprep.subr.mxu0 0.0
    %6489 = vmatpush1.msra.mxu0 0.0
    %6490 = vmatprep.subr.mxu0 0.0
    %6491 = vmatpush1.msra.mxu0 0.0
    %6492 = vmatprep.subr.mxu0 0.0
    %6493 = vmatpush1.msra.mxu0 0.0
    %6494 = vmatprep.subr.mxu0 0.0
    %6495 = vmatpush1.msra.mxu0 0.0
    %6496 = vmatprep.subr.mxu0 0.0
    %6497 = vmatpush1.msra.mxu0 0.0
    %6498 = vmatprep.subr.mxu0 0.0
    %6499 = vmatpush1.msra.mxu0 0.0
    %6500 = vmatprep.subr.mxu0 0.0
    %6501 = vmatpush1.msra.mxu0 0.0
    %6502 = vmatprep.subr.mxu0 0.0
    %6503 = vmatpush1.msra.mxu0 0.0
    %6504 = vmatprep.subr.mxu0 0.0
    %6505 = vmatpush1.msra.mxu0 0.0
    %6506 = vmatprep.subr.mxu0 0.0
    %6507 = vmatpush1.msra.mxu0 0.0
    %6508 = vmatprep.subr.mxu0 0.0
    %6509 = vmatpush1.msra.mxu0 0.0
    %6510 = vmatprep.subr.mxu0 0.0
    %6511 = vmatpush1.msra.mxu0 0.0
    %6512 = vmatprep.mubr.f32.mxu0 0.0
    %6513 = vmatmul.mubr.f32.gmra.mrb[0].mxu0 %v6446
    %v6514 = vpop.f32.mrb[0].mxu0
    %v6515 = vadd.f32 %v6443, %v6514
    %v6516 = vpop.f32.mrb[0].mxu0
    %6517 = vdwg.mxu0
    %vm6518 = vcmask 25600
    %6519 = vst.msk [vmem:[#allocation2] sm:$0x3] %vm6518, %v6515
    // Predicated region
    $region78: #{forward.1} parent=1 // pred_check
      _
    $region79: #{forward.1} parent=1 // pred_check_branch
      %6521 = sbr.rel (0) target = $region81
    $region80: #{forward.1} parent=1 // pred_region
      %s6523 = ssub.s32 32, 32
      %6524 = vsyncadd [#allocation3], %s6523
      %s6526 = sshll.u32 [#allocation2], 4
      %s6527 = int_to_ptr.vmem [resolvable:$true] %s6526
      %6529 = dma.vmem_to_hbm [thread:$0]  %s6527, 32, %s19, [#allocation3]
    $region81: #{forward.1} parent=1 // pred_fallthru
      _
    // Predicated region
    $region82: #{forward.1} parent=1 // pred_check
      _
    $region83: #{forward.1} parent=1 // pred_check_branch
      %6531 = sbr.rel (0) target = $region85
    $region84: #{forward.1} parent=1 // pred_region
      %6532 = dma.done [#allocation3], 32
    $region85: #{forward.1} parent=1 // pred_fallthru
      _
    %6533 = vsyncpa [#allocation3], 1

</llo_original>
